<compile_context>
chip_gen: v5e
topology: v5e:2x2
jax: 0.10.0
libtpu: 0.0.40
codegen_flags: <defaults>
</compile_context>

<pallas_src>
import functools

import jax
import jax.numpy as jnp
from jax.experimental import pallas as pl
from jax.experimental.pallas import tpu as pltpu

NUM_GROUPS = 32        # nn.GroupNorm(32, ...) in the PyTorch module
GN_EPS = 1e-5          # PyTorch GroupNorm default eps
ATTN_EPS = 1e-6        # linear_attention eps
MXU_DTYPE = jnp.bfloat16   # matmul operand dtype; accumulation is always f32


# ----------------------------- in-kernel helpers -----------------------------

def _mdot(a, b):
    return jnp.dot(a.astype(MXU_DTYPE), b.astype(MXU_DTYPE),
                   preferred_element_type=jnp.float32)


def _hardswish(x):
    # nn.Hardswish: x * relu6(x + 3) / 6
    return x * jnp.clip(x + 3.0, 0.0, 6.0) * (1.0 / 6.0)


def _phi(x):
    # elu(x) + 1; exp(min(x, 0)) keeps the unselected branch finite.
    return jnp.where(x > 0, x + 1.0, jnp.exp(jnp.minimum(x, 0.0)))


def _group_norm(x, gamma, beta, A, At, eps=GN_EPS):
    """GroupNorm over x of shape (Bb, N, C): per-sample stats over (N, C//G).

    A (C, G) / At (G, C) are constant 0/1 group-membership matrices (kernel
    inputs, not rebuilt every step).  Two-pass (subtract-mean-first) f32
    statistics avoid E[x^2]-E[x]^2 cancellation.  Stats matmuls stay f32
    (tiny M, precision sensitive).
    """
    _, N, C = x.shape
    G = A.shape[1]
    inv_cnt = 1.0 / float(N * (C // G))
    s = jnp.sum(x, axis=1)                                           # (Bb, C)
    mean = jnp.dot(jnp.dot(s, A, preferred_element_type=jnp.float32) * inv_cnt,
                   At, preferred_element_type=jnp.float32)           # (Bb, C)
    xc = x - mean[:, None, :]
    ss = jnp.sum(xc * xc, axis=1)                                    # (Bb, C)
    rstd = jnp.dot(
        jax.lax.rsqrt(jnp.dot(ss, A, preferred_element_type=jnp.float32)
                      * inv_cnt + eps),
        At, preferred_element_type=jnp.float32)                      # (Bb, C)
    return (xc * rstd[:, None, :]) * gamma + beta


# --------------------------------- kernel ---------------------------------

def _stack_kernel(x_ref,
                  Ac_ref, Atc_ref, Ar_ref, Atr_ref, hm_ref, valid_ref,
                  gn1_g_ref, gn1_b_ref, w3_ref, gn2_g_ref, gn2_b_ref, w1_ref,
                  gna_g_ref, gna_b_ref, wqkv_ref, bqkv_ref, wp_ref, bp_ref,
                  o_ref, *, W):
    """One (batch block, layer) step; activation carried in the output block."""
    l = pl.program_id(1)
    Bb, N, C = x_ref.shape
    rows = Bb * N
    Cres = w1_ref.shape[0]

    # Carry init: copy the input batch block into the (VMEM-resident) output.
    @pl.when(l == 0)
    def _():
        o_ref[...] = x_ref[...]

    x3 = o_ref[...]                                   # (Bb, N, C) f32
    x2 = x3.reshape(rows, C)

    Ac, Atc = Ac_ref[...], Atc_ref[...]
    Ar, Atr = Ar_ref[...], Atr_ref[...]
    hmask = hm_ref[...]                               # (C, C) block-diag heads

    # ----------------------------- ResidualLayer -----------------------------
    h2 = _hardswish(_group_norm(x3, gn1_g_ref[...], gn1_b_ref[...],
                                Ac, Atc)).reshape(rows, C)
    # 3x3 conv (pad=1, bias=False) as 9 accumulated matmuls; halo / cross-image
    # bleed is zeroed by the precomputed validity masks.
    acc = jnp.zeros((rows, Cres), jnp.float32)
    t = 0
    for dy in (-1, 0, 1):
        for dx in (-1, 0, 1):
            s = dy * W + dx
            shifted = h2 if s == 0 else pltpu.roll(h2, shift=(-s) % rows, axis=0)
            acc = acc + _mdot(shifted * valid_ref[t], w3_ref[t])
            t += 1
    # TODO(synk): Dropout2d(0.1) is stochastic; eval-mode identity here.
    g2 = _hardswish(_group_norm(acc.reshape(Bb, N, Cres), gn2_g_ref[...],
                                gn2_b_ref[...], Ar, Atr)).reshape(rows, Cres)
    x2 = x2 + _mdot(g2, w1_ref[...])                  # 1x1 conv + residual

    # ----------------------------- MultiHeadAttn -----------------------------
    xn2 = _group_norm(x2.reshape(Bb, N, C), gna_g_ref[...], gna_b_ref[...],
                      Ac, Atc).reshape(rows, C)
    qkv = _mdot(xn2, wqkv_ref[...]) + bqkv_ref[...]   # one fused (C,3C) matmul
    q3 = _phi(qkv[:, :C]).reshape(Bb, N, C)
    k3 = _phi(qkv[:, C:2 * C]).reshape(Bb, N, C)
    v3 = qkv[:, 2 * C:].reshape(Bb, N, C)
    # per-head linear attention: full-C batched matmuls + block-diag head mask
    kv = jnp.einsum('bnc,bnd->bcd', k3.astype(MXU_DTYPE), v3.astype(MXU_DTYPE),
                    preferred_element_type=jnp.float32) * hmask       # (Bb,C,C)
    num = jnp.einsum('bnc,bcd->bnd', q3.astype(MXU_DTYPE), kv.astype(MXU_DTYPE),
                     preferred_element_type=jnp.float32).reshape(rows, C)
    ksum = jnp.sum(k3, axis=1)                                        # (Bb, C)
    den = _mdot((q3 * ksum[:, None, :]).reshape(rows, C), hmask)      # (rows,C)
    attn = num * pl.reciprocal(den + ATTN_EPS, approx=True)
    # TODO(synk): Dropout(0.09) is stochastic; eval-mode identity here.
    x2 = x2 + _mdot(attn, wp_ref[...]) + bp_ref[...]

    o_ref[...] = x2.reshape(Bb, N, C)

    # trailing Hardswish of the stack, fused into the last layer's epilogue
    @pl.when(l == pl.num_programs(1) - 1)
    def _():
        o_ref[...] = _hardswish(o_ref[...])


# --------------------------------- wrapper ---------------------------------

def _group_matrices(C, G):
    cg = C // G
    c = jnp.arange(C, dtype=jnp.int32)
    g = jnp.arange(G, dtype=jnp.int32)
    A = (c[:, None] // cg == g[None, :]).astype(jnp.float32)          # (C, G)
    return A, A.T


def _head_mask(C, n_heads):
    d = C // n_heads
    c = jnp.arange(C, dtype=jnp.int32)
    return (c[:, None] // d == c[None, :] // d).astype(jnp.float32)   # (C, C)


def _im2col_valid(H, W, b_block):
    """(9, b_block*H*W, 1) 0/1 masks: tap t=(dy+1)*3+(dx+1) valid at each pixel."""
    n = jnp.arange(H * W, dtype=jnp.int32)
    yy, xx = n // W, n % W
    masks = []
    for dy in (-1, 0, 1):
        for dx in (-1, 0, 1):
            m = ((yy + dy >= 0) & (yy + dy < H) &
                 (xx + dx >= 0) & (xx + dx < W))
            masks.append(m.astype(jnp.float32))
    v = jnp.stack(masks, axis=0)                      # (9, H*W)
    return jnp.tile(v, (1, b_block))[:, :, None]      # (9, b_block*H*W, 1)


def residual_stack_forward(x_nchw, params, n_heads, *, b_block=None):
    """x_nchw: (B, C, H, W) as in PyTorch.  One fused pallas_call."""
    B, C, H, W = x_nchw.shape
    N = H * W
    L, Cres, _ = params["w1"].shape
    assert C % NUM_GROUPS == 0 and Cres % NUM_GROUPS == 0 and C % n_heads == 0
    assert N % 8 == 0, "H*W must be a multiple of 8 (sublane tiling)"

    if b_block is None:
        # keep >=2 parallel grid steps when possible (v7x megacore), else 1 block
        b_block = B // 2 if (B >= 2 and B % 2 == 0) else B
    assert B % b_block == 0

    Ac, Atc = _group_matrices(C, NUM_GROUPS)
    Ar, Atr = _group_matrices(Cres, NUM_GROUPS)
    hmask = _head_mask(C, n_heads)
    valid = _im2col_valid(H, W, b_block)
    consts = [Ac, Atc, Ar, Atr, hmask, valid]

    # Matmul weights stored in bf16 (bf16-native MXU, half the DMA / VMEM);
    # GroupNorm affine params and biases stay f32.
    weights = [
        params["gn1_g"], params["gn1_b"], params["w3"].astype(MXU_DTYPE),
        params["gn2_g"], params["gn2_b"], params["w1"].astype(MXU_DTYPE),
        params["gna_g"], params["gna_b"],
        params["wqkv"].astype(MXU_DTYPE), params["bqkv"],
        params["wp"].astype(MXU_DTYPE), params["bp"],
    ]

    # NCHW -> NHWC -> (B, N=H*W, C): the hot path is (rows, C) x (C, *) matmuls.
    x = jnp.transpose(x_nchw, (0, 2, 3, 1)).reshape(B, N, C).astype(jnp.float32)

    def const_spec(a):
        nd = a.ndim
        return pl.BlockSpec(a.shape, lambda b, l: (0,) * nd)

    def layer_spec(a):
        nd = a.ndim
        return pl.BlockSpec((None,) + tuple(a.shape[1:]),
                            lambda b, l: (l,) + (0,) * (nd - 1))

    kernel = functools.partial(_stack_kernel, W=W)
    out = pl.pallas_call(
        kernel,
        out_shape=jax.ShapeDtypeStruct((B, N, C), jnp.float32),
        grid_spec=pltpu.PrefetchScalarGridSpec(
            num_scalar_prefetch=0,
            grid=(B // b_block, L),
            in_specs=[pl.BlockSpec((b_block, N, C), lambda b, l: (b, 0, 0))]
                     + [const_spec(a) for a in consts]
                     + [layer_spec(a) for a in weights],
            out_specs=pl.BlockSpec((b_block, N, C), lambda b, l: (b, 0, 0)),
        ),
        compiler_params=pltpu.CompilerParams(
            # batch blocks across TensorCores; layer axis is a sequential carry
            # on the revisited output block.
            dimension_semantics=("parallel", "arbitrary"),
            # 56 MiB: above v5e/v6e default scoped limits, below v7x's 64 MiB.
            vmem_limit_bytes=56 * 1024 * 1024,
        ),
    )(x, *consts, *weights)

    return jnp.transpose(out.reshape(B, H, W, C), (0, 3, 1, 2))


# ----------------------------- params & init -----------------------------

def init_params(key, dim, res_h_dim, n_res_layers):
    """Weights for n_res_layers x (ResidualLayer + MultiHeadAttn), stacked on a
    leading layer axis so the layer grid axis streams one layer per step."""
    L = n_res_layers
    ks = jax.random.split(key, 6)

    def w(k, shape, scale=0.05):
        return scale * jax.random.normal(k, shape, jnp.float32)

    return dict(
        gn1_g=jnp.ones((L, 1, dim), jnp.float32),
        gn1_b=jnp.zeros((L, 1, dim), jnp.float32),
        # 3x3 conv (bias=False): w3[l, t, cin, cout] == torch_w[cout, cin, dy+1, dx+1]
        # for tap t = (dy+1)*3 + (dx+1)
        w3=w(ks[0], (L, 9, dim, res_h_dim)),
        gn2_g=jnp.ones((L, 1, res_h_dim), jnp.float32),
        gn2_b=jnp.zeros((L, 1, res_h_dim), jnp.float32),
        w1=w(ks[1], (L, res_h_dim, dim)),                 # 1x1 conv (bias=False)
        gna_g=jnp.ones((L, 1, dim), jnp.float32),
        gna_b=jnp.zeros((L, 1, dim), jnp.float32),
        # fused qkv 1x1 conv (+bias); columns [0:C)=q, [C:2C)=k, [2C:3C)=v,
        # matching torch.chunk(qkv, 3, dim=1)
        wqkv=w(ks[2], (L, dim, 3 * dim)),
        bqkv=w(ks[3], (L, 1, 3 * dim), 0.01),
        wp=w(ks[4], (L, dim, dim)),                       # proj 1x1 conv (+bias)
        bp=w(ks[5], (L, 1, dim), 0.01),
    )


# --------------------------------- main ---------------------------------

if __name__ == "__main__":
    # GroupNorm(32, C) requires channel counts divisible by 32.
    B, C, H, W = 2, 64, 8, 8          # in_dim == h_dim == 64
    RES_H_DIM = 32
    N_RES_LAYERS = 2
    N_HEADS = 4

    key = jax.random.PRNGKey(0)
    kx, kp = jax.random.split(key)
    x = jax.random.normal(kx, (B, C, H, W), jnp.float32)   # NCHW, as in PyTorch
    params = init_params(kp, C, RES_H_DIM, N_RES_LAYERS)

    fwd = jax.jit(functools.partial(residual_stack_forward, n_heads=N_HEADS))
    out = jax.block_until_ready(fwd(x, params))

    assert out.shape == (B, C, H, W), out.shape
    assert bool(jnp.all(jnp.isfinite(out)))
    print("KERNEL_OK")
</pallas_src>

<mosaic_0001>
module attributes {stable_mosaic.version = 11 : i64} {
  func.func @_stack_kernel(%arg0: i32, %arg1: i32, %arg2: memref<1x64x64xf32, #tpu.memory_space<vmem>>, %arg3: memref<64x32xf32, #tpu.memory_space<vmem>>, %arg4: memref<32x64xf32, #tpu.memory_space<vmem>>, %arg5: memref<32x32xf32, #tpu.memory_space<vmem>>, %arg6: memref<32x32xf32, #tpu.memory_space<vmem>>, %arg7: memref<64x64xf32, #tpu.memory_space<vmem>>, %arg8: memref<9x64x1xf32, #tpu.memory_space<vmem>>, %arg9: memref<1x1x64xf32, #tpu.memory_space<vmem>>, %arg10: memref<1x1x64xf32, #tpu.memory_space<vmem>>, %arg11: memref<1x9x64x32xbf16, #tpu.memory_space<vmem>>, %arg12: memref<1x1x32xf32, #tpu.memory_space<vmem>>, %arg13: memref<1x1x32xf32, #tpu.memory_space<vmem>>, %arg14: memref<1x32x64xbf16, #tpu.memory_space<vmem>>, %arg15: memref<1x1x64xf32, #tpu.memory_space<vmem>>, %arg16: memref<1x1x64xf32, #tpu.memory_space<vmem>>, %arg17: memref<1x64x192xbf16, #tpu.memory_space<vmem>>, %arg18: memref<1x1x192xf32, #tpu.memory_space<vmem>>, %arg19: memref<1x64x64xbf16, #tpu.memory_space<vmem>>, %arg20: memref<1x1x64xf32, #tpu.memory_space<vmem>>, %arg21: memref<1x64x64xf32, #tpu.memory_space<vmem>>) attributes {dimension_semantics = [#tpu.dimension_semantics<parallel>, #tpu.dimension_semantics<arbitrary>], iteration_bounds = array<i64: 2, 2>, scalar_prefetch = 0 : i64, scratch_operands = 0 : i64, tpu.core_type = #tpu.core_type<tc>, window_params = [{transform_indices = @transform_0, window_bounds = array<i64: 1, 64, 64>}, {pipeline_mode = #tpu.pipeline_mode<synchronous>, transform_indices = @transform_1, window_bounds = array<i64: 64, 32>}, {pipeline_mode = #tpu.pipeline_mode<synchronous>, transform_indices = @transform_2, window_bounds = array<i64: 32, 64>}, {pipeline_mode = #tpu.pipeline_mode<synchronous>, transform_indices = @transform_3, window_bounds = array<i64: 32, 32>}, {pipeline_mode = #tpu.pipeline_mode<synchronous>, transform_indices = @transform_4, window_bounds = array<i64: 32, 32>}, {pipeline_mode = #tpu.pipeline_mode<synchronous>, transform_indices = @transform_5, window_bounds = array<i64: 64, 64>}, {pipeline_mode = #tpu.pipeline_mode<synchronous>, transform_indices = @transform_6, window_bounds = array<i64: 9, 64, 1>}, {transform_indices = @transform_7, window_bounds = array<i64: 1, 1, 64>}, {transform_indices = @transform_8, window_bounds = array<i64: 1, 1, 64>}, {transform_indices = @transform_9, window_bounds = array<i64: 1, 9, 64, 32>}, {transform_indices = @transform_10, window_bounds = array<i64: 1, 1, 32>}, {transform_indices = @transform_11, window_bounds = array<i64: 1, 1, 32>}, {transform_indices = @transform_12, window_bounds = array<i64: 1, 32, 64>}, {transform_indices = @transform_13, window_bounds = array<i64: 1, 1, 64>}, {transform_indices = @transform_14, window_bounds = array<i64: 1, 1, 64>}, {transform_indices = @transform_15, window_bounds = array<i64: 1, 64, 192>}, {transform_indices = @transform_16, window_bounds = array<i64: 1, 1, 192>}, {transform_indices = @transform_17, window_bounds = array<i64: 1, 64, 64>}, {transform_indices = @transform_18, window_bounds = array<i64: 1, 1, 64>}, {transform_indices = @transform_19, window_bounds = array<i64: 1, 64, 64>}]} {
    %c0_i32 = arith.constant 0 : i32
    %0 = arith.cmpi eq, %arg1, %c0_i32 : i32
    %1 = arith.extui %0 : i1 to i32
    %c0_i32_0 = arith.constant 0 : i32
    %2 = arith.cmpi ne, %1, %c0_i32_0 : i32
    scf.if %2 {
      %c0_164 = arith.constant 0 : index
      %c0_165 = arith.constant 0 : index
      %c0_166 = arith.constant 0 : index
      %283 = vector.load %arg2[%c0_164, %c0_165, %c0_166] : memref<1x64x64xf32, #tpu.memory_space<vmem>>, vector<1x64x64xf32>
      %c0_167 = arith.constant 0 : index
      %c0_168 = arith.constant 0 : index
      %c0_169 = arith.constant 0 : index
      %284 = vector.load %arg21[%c0_167, %c0_168, %c0_169] : memref<1x64x64xf32, #tpu.memory_space<vmem>>, vector<1x64x64xf32>
      tpu.vector_store %arg21[%c0_167, %c0_168, %c0_169], %283 {strides = array<i32>} : memref<1x64x64xf32, #tpu.memory_space<vmem>>, vector<1x64x64xf32>,
    } else {
    }
    %c0 = arith.constant 0 : index
    %c0_1 = arith.constant 0 : index
    %c0_2 = arith.constant 0 : index
    %3 = vector.load %arg21[%c0, %c0_1, %c0_2] : memref<1x64x64xf32, #tpu.memory_space<vmem>>, vector<1x64x64xf32>
    %4 = vector.shape_cast %3 : vector<1x64x64xf32> to vector<64x64xf32>
    %c0_3 = arith.constant 0 : index
    %c0_4 = arith.constant 0 : index
    %5 = vector.load %arg3[%c0_3, %c0_4] : memref<64x32xf32, #tpu.memory_space<vmem>>, vector<64x32xf32>
    %c0_5 = arith.constant 0 : index
    %c0_6 = arith.constant 0 : index
    %6 = vector.load %arg4[%c0_5, %c0_6] : memref<32x64xf32, #tpu.memory_space<vmem>>, vector<32x64xf32>
    %c0_7 = arith.constant 0 : index
    %c0_8 = arith.constant 0 : index
    %7 = vector.load %arg5[%c0_7, %c0_8] : memref<32x32xf32, #tpu.memory_space<vmem>>, vector<32x32xf32>
    %c0_9 = arith.constant 0 : index
    %c0_10 = arith.constant 0 : index
    %8 = vector.load %arg6[%c0_9, %c0_10] : memref<32x32xf32, #tpu.memory_space<vmem>>, vector<32x32xf32>
    %c0_11 = arith.constant 0 : index
    %c0_12 = arith.constant 0 : index
    %9 = vector.load %arg7[%c0_11, %c0_12] : memref<64x64xf32, #tpu.memory_space<vmem>>, vector<64x64xf32>
    %c0_13 = arith.constant 0 : index
    %c0_14 = arith.constant 0 : index
    %c0_15 = arith.constant 0 : index
    %10 = vector.load %arg9[%c0_13, %c0_14, %c0_15] : memref<1x1x64xf32, #tpu.memory_space<vmem>>, vector<1x1x64xf32>
    %11 = vector.shape_cast %10 : vector<1x1x64xf32> to vector<1x64xf32>
    %c0_16 = arith.constant 0 : index
    %c0_17 = arith.constant 0 : index
    %c0_18 = arith.constant 0 : index
    %12 = vector.load %arg10[%c0_16, %c0_17, %c0_18] : memref<1x1x64xf32, #tpu.memory_space<vmem>>, vector<1x1x64xf32>
    %13 = vector.shape_cast %12 : vector<1x1x64xf32> to vector<1x64xf32>
    %cst = arith.constant dense<0.000000e+00> : vector<1x64xf32>
    %14 = vector.multi_reduction <add>, %3, %cst [1] : vector<1x64x64xf32> to vector<1x64xf32>
    %cst_19 = arith.constant dense<0.000000e+00> : vector<1x32xf32>
    %15 = tpu.matmul %14, %5, %cst_19 {dimension_numbers = #tpu.dot_dimension_numbers<[1], [0], [0], [1], [0, 0, 1, 1], [], []>} : vector<1x64xf32>, vector<64x32xf32>, vector<1x32xf32> -> vector<1x32xf32>
    %cst_20 = arith.constant 7.812500e-03 : f32
    %16 = vector.broadcast %cst_20 : f32 to vector<1x32xf32>
    %17 = arith.mulf %15, %16 : vector<1x32xf32>
    %cst_21 = arith.constant dense<0.000000e+00> : vector<1x64xf32>
    %18 = tpu.matmul %17, %6, %cst_21 {dimension_numbers = #tpu.dot_dimension_numbers<[1], [0], [0], [1], [0, 0, 1, 1], [], []>} : vector<1x32xf32>, vector<32x64xf32>, vector<1x64xf32> -> vector<1x64xf32>
    %19 = vector.shape_cast %18 : vector<1x64xf32> to vector<1x1x64xf32>
    %20 = vector.broadcast %19 : vector<1x1x64xf32> to vector<1x64x64xf32>
    %21 = arith.subf %3, %20 : vector<1x64x64xf32>
    %22 = arith.mulf %21, %21 : vector<1x64x64xf32>
    %cst_22 = arith.constant dense<0.000000e+00> : vector<1x64xf32>
    %23 = vector.multi_reduction <add>, %22, %cst_22 [1] : vector<1x64x64xf32> to vector<1x64xf32>
    %cst_23 = arith.constant dense<0.000000e+00> : vector<1x32xf32>
    %24 = tpu.matmul %23, %5, %cst_23 {dimension_numbers = #tpu.dot_dimension_numbers<[1], [0], [0], [1], [0, 0, 1, 1], [], []>} : vector<1x64xf32>, vector<64x32xf32>, vector<1x32xf32> -> vector<1x32xf32>
    %cst_24 = arith.constant 7.812500e-03 : f32
    %25 = vector.broadcast %cst_24 : f32 to vector<1x32xf32>
    %26 = arith.mulf %24, %25 : vector<1x32xf32>
    %cst_25 = arith.constant 9.99999974E-6 : f32
    %27 = vector.broadcast %cst_25 : f32 to vector<1x32xf32>
    %28 = arith.addf %26, %27 : vector<1x32xf32>
    %29 = math.rsqrt %28 : vector<1x32xf32>
    %cst_26 = arith.constant dense<0.000000e+00> : vector<1x64xf32>
    %30 = tpu.matmul %29, %6, %cst_26 {dimension_numbers = #tpu.dot_dimension_numbers<[1], [0], [0], [1], [0, 0, 1, 1], [], []>} : vector<1x32xf32>, vector<32x64xf32>, vector<1x64xf32> -> vector<1x64xf32>
    %31 = vector.shape_cast %30 : vector<1x64xf32> to vector<1x1x64xf32>
    %32 = vector.broadcast %31 : vector<1x1x64xf32> to vector<1x64x64xf32>
    %33 = arith.mulf %21, %32 : vector<1x64x64xf32>
    %34 = vector.shape_cast %11 : vector<1x64xf32> to vector<1x1x64xf32>
    %35 = vector.broadcast %34 : vector<1x1x64xf32> to vector<1x64x64xf32>
    %36 = arith.mulf %33, %35 : vector<1x64x64xf32>
    %37 = vector.shape_cast %13 : vector<1x64xf32> to vector<1x1x64xf32>
    %38 = vector.broadcast %37 : vector<1x1x64xf32> to vector<1x64x64xf32>
    %39 = arith.addf %36, %38 : vector<1x64x64xf32>
    %cst_27 = arith.constant 3.000000e+00 : f32
    %40 = vector.broadcast %cst_27 : f32 to vector<1x64x64xf32>
    %41 = arith.addf %39, %40 : vector<1x64x64xf32>
    %cst_28 = arith.constant 0.000000e+00 : f32
    %cst_29 = arith.constant 6.000000e+00 : f32
    %42 = vector.broadcast %cst_28 : f32 to vector<1x64x64xf32>
    %43 = arith.maximumf %42, %41 : vector<1x64x64xf32>
    %44 = vector.broadcast %cst_29 : f32 to vector<1x64x64xf32>
    %45 = arith.minimumf %44, %43 : vector<1x64x64xf32>
    %46 = arith.mulf %39, %45 : vector<1x64x64xf32>
    %cst_30 = arith.constant 0.166666672 : f32
    %47 = vector.broadcast %cst_30 : f32 to vector<1x64x64xf32>
    %48 = arith.mulf %46, %47 : vector<1x64x64xf32>
    %49 = vector.shape_cast %48 : vector<1x64x64xf32> to vector<64x64xf32>
    %cst_31 = arith.constant 0.000000e+00 : f32
    %50 = vector.broadcast %cst_31 : f32 to vector<64x32xf32>
    %c9_i32 = arith.constant 9 : i32
    %51 = tpu.dynamic_rotate %49 by %c9_i32 dim 0 : vector<64x64xf32>, i32 -> vector<64x64xf32>
    %c0_32 = arith.constant 0 : index
    %c0_33 = arith.constant 0 : index
    %c0_34 = arith.constant 0 : index
    %52 = vector.load %arg8[%c0_32, %c0_33, %c0_34] : memref<9x64x1xf32, #tpu.memory_space<vmem>>, vector<1x64x1xf32>
    %53 = vector.shape_cast %52 : vector<1x64x1xf32> to vector<64x1xf32>
    %54 = vector.broadcast %53 : vector<64x1xf32> to vector<64x64xf32>
    %55 = arith.mulf %51, %54 : vector<64x64xf32>
    %c0_35 = arith.constant 0 : index
    %c0_36 = arith.constant 0 : index
    %c0_37 = arith.constant 0 : index
    %c0_38 = arith.constant 0 : index
    %56 = vector.load %arg11[%c0_35, %c0_36, %c0_37, %c0_38] : memref<1x9x64x32xbf16, #tpu.memory_space<vmem>>, vector<1x1x64x32xbf16>
    %57 = vector.shape_cast %56 : vector<1x1x64x32xbf16> to vector<64x32xbf16>
    %58 = arith.truncf %55 : vector<64x64xf32> to vector<64x64xbf16>
    %cst_39 = arith.constant dense<0.000000e+00> : vector<64x32xf32>
    %59 = tpu.matmul %58, %57, %cst_39 {dimension_numbers = #tpu.dot_dimension_numbers<[1], [0], [0], [1], [0, 0, 1, 1], [], []>} : vector<64x64xbf16>, vector<64x32xbf16>, vector<64x32xf32> -> vector<64x32xf32>
    %60 = arith.addf %50, %59 : vector<64x32xf32>
    %c8_i32 = arith.constant 8 : i32
    %61 = tpu.dynamic_rotate %49 by %c8_i32 dim 0 : vector<64x64xf32>, i32 -> vector<64x64xf32>
    %c1 = arith.constant 1 : index
    %c0_40 = arith.constant 0 : index
    %c0_41 = arith.constant 0 : index
    %62 = vector.load %arg8[%c1, %c0_40, %c0_41] : memref<9x64x1xf32, #tpu.memory_space<vmem>>, vector<1x64x1xf32>
    %63 = vector.shape_cast %62 : vector<1x64x1xf32> to vector<64x1xf32>
    %64 = vector.broadcast %63 : vector<64x1xf32> to vector<64x64xf32>
    %65 = arith.mulf %61, %64 : vector<64x64xf32>
    %c0_42 = arith.constant 0 : index
    %c1_43 = arith.constant 1 : index
    %c0_44 = arith.constant 0 : index
    %c0_45 = arith.constant 0 : index
    %66 = vector.load %arg11[%c0_42, %c1_43, %c0_44, %c0_45] : memref<1x9x64x32xbf16, #tpu.memory_space<vmem>>, vector<1x1x64x32xbf16>
    %67 = vector.shape_cast %66 : vector<1x1x64x32xbf16> to vector<64x32xbf16>
    %68 = arith.truncf %65 : vector<64x64xf32> to vector<64x64xbf16>
    %cst_46 = arith.constant dense<0.000000e+00> : vector<64x32xf32>
    %69 = tpu.matmul %68, %67, %cst_46 {dimension_numbers = #tpu.dot_dimension_numbers<[1], [0], [0], [1], [0, 0, 1, 1], [], []>} : vector<64x64xbf16>, vector<64x32xbf16>, vector<64x32xf32> -> vector<64x32xf32>
    %70 = arith.addf %60, %69 : vector<64x32xf32>
    %c7_i32 = arith.constant 7 : i32
    %71 = tpu.dynamic_rotate %49 by %c7_i32 dim 0 : vector<64x64xf32>, i32 -> vector<64x64xf32>
    %c2 = arith.constant 2 : index
    %c0_47 = arith.constant 0 : index
    %c0_48 = arith.constant 0 : index
    %72 = vector.load %arg8[%c2, %c0_47, %c0_48] : memref<9x64x1xf32, #tpu.memory_space<vmem>>, vector<1x64x1xf32>
    %73 = vector.shape_cast %72 : vector<1x64x1xf32> to vector<64x1xf32>
    %74 = vector.broadcast %73 : vector<64x1xf32> to vector<64x64xf32>
    %75 = arith.mulf %71, %74 : vector<64x64xf32>
    %c0_49 = arith.constant 0 : index
    %c2_50 = arith.constant 2 : index
    %c0_51 = arith.constant 0 : index
    %c0_52 = arith.constant 0 : index
    %76 = vector.load %arg11[%c0_49, %c2_50, %c0_51, %c0_52] : memref<1x9x64x32xbf16, #tpu.memory_space<vmem>>, vector<1x1x64x32xbf16>
    %77 = vector.shape_cast %76 : vector<1x1x64x32xbf16> to vector<64x32xbf16>
    %78 = arith.truncf %75 : vector<64x64xf32> to vector<64x64xbf16>
    %cst_53 = arith.constant dense<0.000000e+00> : vector<64x32xf32>
    %79 = tpu.matmul %78, %77, %cst_53 {dimension_numbers = #tpu.dot_dimension_numbers<[1], [0], [0], [1], [0, 0, 1, 1], [], []>} : vector<64x64xbf16>, vector<64x32xbf16>, vector<64x32xf32> -> vector<64x32xf32>
    %80 = arith.addf %70, %79 : vector<64x32xf32>
    %c1_i32 = arith.constant 1 : i32
    %81 = tpu.dynamic_rotate %49 by %c1_i32 dim 0 : vector<64x64xf32>, i32 -> vector<64x64xf32>
    %c3 = arith.constant 3 : index
    %c0_54 = arith.constant 0 : index
    %c0_55 = arith.constant 0 : index
    %82 = vector.load %arg8[%c3, %c0_54, %c0_55] : memref<9x64x1xf32, #tpu.memory_space<vmem>>, vector<1x64x1xf32>
    %83 = vector.shape_cast %82 : vector<1x64x1xf32> to vector<64x1xf32>
    %84 = vector.broadcast %83 : vector<64x1xf32> to vector<64x64xf32>
    %85 = arith.mulf %81, %84 : vector<64x64xf32>
    %c0_56 = arith.constant 0 : index
    %c3_57 = arith.constant 3 : index
    %c0_58 = arith.constant 0 : index
    %c0_59 = arith.constant 0 : index
    %86 = vector.load %arg11[%c0_56, %c3_57, %c0_58, %c0_59] : memref<1x9x64x32xbf16, #tpu.memory_space<vmem>>, vector<1x1x64x32xbf16>
    %87 = vector.shape_cast %86 : vector<1x1x64x32xbf16> to vector<64x32xbf16>
    %88 = arith.truncf %85 : vector<64x64xf32> to vector<64x64xbf16>
    %cst_60 = arith.constant dense<0.000000e+00> : vector<64x32xf32>
    %89 = tpu.matmul %88, %87, %cst_60 {dimension_numbers = #tpu.dot_dimension_numbers<[1], [0], [0], [1], [0, 0, 1, 1], [], []>} : vector<64x64xbf16>, vector<64x32xbf16>, vector<64x32xf32> -> vector<64x32xf32>
    %90 = arith.addf %80, %89 : vector<64x32xf32>
    %c4 = arith.constant 4 : index
    %c0_61 = arith.constant 0 : index
    %c0_62 = arith.constant 0 : index
    %91 = vector.load %arg8[%c4, %c0_61, %c0_62] : memref<9x64x1xf32, #tpu.memory_space<vmem>>, vector<1x64x1xf32>
    %92 = vector.shape_cast %91 : vector<1x64x1xf32> to vector<64x1xf32>
    %93 = vector.broadcast %92 : vector<64x1xf32> to vector<64x64xf32>
    %94 = arith.mulf %49, %93 : vector<64x64xf32>
    %c0_63 = arith.constant 0 : index
    %c4_64 = arith.constant 4 : index
    %c0_65 = arith.constant 0 : index
    %c0_66 = arith.constant 0 : index
    %95 = vector.load %arg11[%c0_63, %c4_64, %c0_65, %c0_66] : memref<1x9x64x32xbf16, #tpu.memory_space<vmem>>, vector<1x1x64x32xbf16>
    %96 = vector.shape_cast %95 : vector<1x1x64x32xbf16> to vector<64x32xbf16>
    %97 = arith.truncf %94 : vector<64x64xf32> to vector<64x64xbf16>
    %cst_67 = arith.constant dense<0.000000e+00> : vector<64x32xf32>
    %98 = tpu.matmul %97, %96, %cst_67 {dimension_numbers = #tpu.dot_dimension_numbers<[1], [0], [0], [1], [0, 0, 1, 1], [], []>} : vector<64x64xbf16>, vector<64x32xbf16>, vector<64x32xf32> -> vector<64x32xf32>
    %99 = arith.addf %90, %98 : vector<64x32xf32>
    %c63_i32 = arith.constant 63 : i32
    %100 = tpu.dynamic_rotate %49 by %c63_i32 dim 0 : vector<64x64xf32>, i32 -> vector<64x64xf32>
    %c5 = arith.constant 5 : index
    %c0_68 = arith.constant 0 : index
    %c0_69 = arith.constant 0 : index
    %101 = vector.load %arg8[%c5, %c0_68, %c0_69] : memref<9x64x1xf32, #tpu.memory_space<vmem>>, vector<1x64x1xf32>
    %102 = vector.shape_cast %101 : vector<1x64x1xf32> to vector<64x1xf32>
    %103 = vector.broadcast %102 : vector<64x1xf32> to vector<64x64xf32>
    %104 = arith.mulf %100, %103 : vector<64x64xf32>
    %c0_70 = arith.constant 0 : index
    %c5_71 = arith.constant 5 : index
    %c0_72 = arith.constant 0 : index
    %c0_73 = arith.constant 0 : index
    %105 = vector.load %arg11[%c0_70, %c5_71, %c0_72, %c0_73] : memref<1x9x64x32xbf16, #tpu.memory_space<vmem>>, vector<1x1x64x32xbf16>
    %106 = vector.shape_cast %105 : vector<1x1x64x32xbf16> to vector<64x32xbf16>
    %107 = arith.truncf %104 : vector<64x64xf32> to vector<64x64xbf16>
    %cst_74 = arith.constant dense<0.000000e+00> : vector<64x32xf32>
    %108 = tpu.matmul %107, %106, %cst_74 {dimension_numbers = #tpu.dot_dimension_numbers<[1], [0], [0], [1], [0, 0, 1, 1], [], []>} : vector<64x64xbf16>, vector<64x32xbf16>, vector<64x32xf32> -> vector<64x32xf32>
    %109 = arith.addf %99, %108 : vector<64x32xf32>
    %c57_i32 = arith.constant 57 : i32
    %110 = tpu.dynamic_rotate %49 by %c57_i32 dim 0 : vector<64x64xf32>, i32 -> vector<64x64xf32>
    %c6 = arith.constant 6 : index
    %c0_75 = arith.constant 0 : index
    %c0_76 = arith.constant 0 : index
    %111 = vector.load %arg8[%c6, %c0_75, %c0_76] : memref<9x64x1xf32, #tpu.memory_space<vmem>>, vector<1x64x1xf32>
    %112 = vector.shape_cast %111 : vector<1x64x1xf32> to vector<64x1xf32>
    %113 = vector.broadcast %112 : vector<64x1xf32> to vector<64x64xf32>
    %114 = arith.mulf %110, %113 : vector<64x64xf32>
    %c0_77 = arith.constant 0 : index
    %c6_78 = arith.constant 6 : index
    %c0_79 = arith.constant 0 : index
    %c0_80 = arith.constant 0 : index
    %115 = vector.load %arg11[%c0_77, %c6_78, %c0_79, %c0_80] : memref<1x9x64x32xbf16, #tpu.memory_space<vmem>>, vector<1x1x64x32xbf16>
    %116 = vector.shape_cast %115 : vector<1x1x64x32xbf16> to vector<64x32xbf16>
    %117 = arith.truncf %114 : vector<64x64xf32> to vector<64x64xbf16>
    %cst_81 = arith.constant dense<0.000000e+00> : vector<64x32xf32>
    %118 = tpu.matmul %117, %116, %cst_81 {dimension_numbers = #tpu.dot_dimension_numbers<[1], [0], [0], [1], [0, 0, 1, 1], [], []>} : vector<64x64xbf16>, vector<64x32xbf16>, vector<64x32xf32> -> vector<64x32xf32>
    %119 = arith.addf %109, %118 : vector<64x32xf32>
    %c56_i32 = arith.constant 56 : i32
    %120 = tpu.dynamic_rotate %49 by %c56_i32 dim 0 : vector<64x64xf32>, i32 -> vector<64x64xf32>
    %c7 = arith.constant 7 : index
    %c0_82 = arith.constant 0 : index
    %c0_83 = arith.constant 0 : index
    %121 = vector.load %arg8[%c7, %c0_82, %c0_83] : memref<9x64x1xf32, #tpu.memory_space<vmem>>, vector<1x64x1xf32>
    %122 = vector.shape_cast %121 : vector<1x64x1xf32> to vector<64x1xf32>
    %123 = vector.broadcast %122 : vector<64x1xf32> to vector<64x64xf32>
    %124 = arith.mulf %120, %123 : vector<64x64xf32>
    %c0_84 = arith.constant 0 : index
    %c7_85 = arith.constant 7 : index
    %c0_86 = arith.constant 0 : index
    %c0_87 = arith.constant 0 : index
    %125 = vector.load %arg11[%c0_84, %c7_85, %c0_86, %c0_87] : memref<1x9x64x32xbf16, #tpu.memory_space<vmem>>, vector<1x1x64x32xbf16>
    %126 = vector.shape_cast %125 : vector<1x1x64x32xbf16> to vector<64x32xbf16>
    %127 = arith.truncf %124 : vector<64x64xf32> to vector<64x64xbf16>
    %cst_88 = arith.constant dense<0.000000e+00> : vector<64x32xf32>
    %128 = tpu.matmul %127, %126, %cst_88 {dimension_numbers = #tpu.dot_dimension_numbers<[1], [0], [0], [1], [0, 0, 1, 1], [], []>} : vector<64x64xbf16>, vector<64x32xbf16>, vector<64x32xf32> -> vector<64x32xf32>
    %129 = arith.addf %119, %128 : vector<64x32xf32>
    %c55_i32 = arith.constant 55 : i32
    %130 = tpu.dynamic_rotate %49 by %c55_i32 dim 0 : vector<64x64xf32>, i32 -> vector<64x64xf32>
    %c8 = arith.constant 8 : index
    %c0_89 = arith.constant 0 : index
    %c0_90 = arith.constant 0 : index
    %131 = vector.load %arg8[%c8, %c0_89, %c0_90] : memref<9x64x1xf32, #tpu.memory_space<vmem>>, vector<1x64x1xf32>
    %132 = vector.shape_cast %131 : vector<1x64x1xf32> to vector<64x1xf32>
    %133 = vector.broadcast %132 : vector<64x1xf32> to vector<64x64xf32>
    %134 = arith.mulf %130, %133 : vector<64x64xf32>
    %c0_91 = arith.constant 0 : index
    %c8_92 = arith.constant 8 : index
    %c0_93 = arith.constant 0 : index
    %c0_94 = arith.constant 0 : index
    %135 = vector.load %arg11[%c0_91, %c8_92, %c0_93, %c0_94] : memref<1x9x64x32xbf16, #tpu.memory_space<vmem>>, vector<1x1x64x32xbf16>
    %136 = vector.shape_cast %135 : vector<1x1x64x32xbf16> to vector<64x32xbf16>
    %137 = arith.truncf %134 : vector<64x64xf32> to vector<64x64xbf16>
    %cst_95 = arith.constant dense<0.000000e+00> : vector<64x32xf32>
    %138 = tpu.matmul %137, %136, %cst_95 {dimension_numbers = #tpu.dot_dimension_numbers<[1], [0], [0], [1], [0, 0, 1, 1], [], []>} : vector<64x64xbf16>, vector<64x32xbf16>, vector<64x32xf32> -> vector<64x32xf32>
    %139 = arith.addf %129, %138 : vector<64x32xf32>
    %140 = vector.shape_cast %139 : vector<64x32xf32> to vector<1x64x32xf32>
    %c0_96 = arith.constant 0 : index
    %c0_97 = arith.constant 0 : index
    %c0_98 = arith.constant 0 : index
    %141 = vector.load %arg12[%c0_96, %c0_97, %c0_98] : memref<1x1x32xf32, #tpu.memory_space<vmem>>, vector<1x1x32xf32>
    %142 = vector.shape_cast %141 : vector<1x1x32xf32> to vector<1x32xf32>
    %c0_99 = arith.constant 0 : index
    %c0_100 = arith.constant 0 : index
    %c0_101 = arith.constant 0 : index
    %143 = vector.load %arg13[%c0_99, %c0_100, %c0_101] : memref<1x1x32xf32, #tpu.memory_space<vmem>>, vector<1x1x32xf32>
    %144 = vector.shape_cast %143 : vector<1x1x32xf32> to vector<1x32xf32>
    %cst_102 = arith.constant dense<0.000000e+00> : vector<1x32xf32>
    %145 = vector.multi_reduction <add>, %140, %cst_102 [1] : vector<1x64x32xf32> to vector<1x32xf32>
    %cst_103 = arith.constant dense<0.000000e+00> : vector<1x32xf32>
    %146 = tpu.matmul %145, %7, %cst_103 {dimension_numbers = #tpu.dot_dimension_numbers<[1], [0], [0], [1], [0, 0, 1, 1], [], []>} : vector<1x32xf32>, vector<32x32xf32>, vector<1x32xf32> -> vector<1x32xf32>
    %cst_104 = arith.constant 1.562500e-02 : f32
    %147 = vector.broadcast %cst_104 : f32 to vector<1x32xf32>
    %148 = arith.mulf %146, %147 : vector<1x32xf32>
    %cst_105 = arith.constant dense<0.000000e+00> : vector<1x32xf32>
    %149 = tpu.matmul %148, %8, %cst_105 {dimension_numbers = #tpu.dot_dimension_numbers<[1], [0], [0], [1], [0, 0, 1, 1], [], []>} : vector<1x32xf32>, vector<32x32xf32>, vector<1x32xf32> -> vector<1x32xf32>
    %150 = vector.shape_cast %149 : vector<1x32xf32> to vector<1x1x32xf32>
    %151 = vector.broadcast %150 : vector<1x1x32xf32> to vector<1x64x32xf32>
    %152 = arith.subf %140, %151 : vector<1x64x32xf32>
    %153 = arith.mulf %152, %152 : vector<1x64x32xf32>
    %cst_106 = arith.constant dense<0.000000e+00> : vector<1x32xf32>
    %154 = vector.multi_reduction <add>, %153, %cst_106 [1] : vector<1x64x32xf32> to vector<1x32xf32>
    %cst_107 = arith.constant dense<0.000000e+00> : vector<1x32xf32>
    %155 = tpu.matmul %154, %7, %cst_107 {dimension_numbers = #tpu.dot_dimension_numbers<[1], [0], [0], [1], [0, 0, 1, 1], [], []>} : vector<1x32xf32>, vector<32x32xf32>, vector<1x32xf32> -> vector<1x32xf32>
    %cst_108 = arith.constant 1.562500e-02 : f32
    %156 = vector.broadcast %cst_108 : f32 to vector<1x32xf32>
    %157 = arith.mulf %155, %156 : vector<1x32xf32>
    %cst_109 = arith.constant 9.99999974E-6 : f32
    %158 = vector.broadcast %cst_109 : f32 to vector<1x32xf32>
    %159 = arith.addf %157, %158 : vector<1x32xf32>
    %160 = math.rsqrt %159 : vector<1x32xf32>
    %cst_110 = arith.constant dense<0.000000e+00> : vector<1x32xf32>
    %161 = tpu.matmul %160, %8, %cst_110 {dimension_numbers = #tpu.dot_dimension_numbers<[1], [0], [0], [1], [0, 0, 1, 1], [], []>} : vector<1x32xf32>, vector<32x32xf32>, vector<1x32xf32> -> vector<1x32xf32>
    %162 = vector.shape_cast %161 : vector<1x32xf32> to vector<1x1x32xf32>
    %163 = vector.broadcast %162 : vector<1x1x32xf32> to vector<1x64x32xf32>
    %164 = arith.mulf %152, %163 : vector<1x64x32xf32>
    %165 = vector.shape_cast %142 : vector<1x32xf32> to vector<1x1x32xf32>
    %166 = vector.broadcast %165 : vector<1x1x32xf32> to vector<1x64x32xf32>
    %167 = arith.mulf %164, %166 : vector<1x64x32xf32>
    %168 = vector.shape_cast %144 : vector<1x32xf32> to vector<1x1x32xf32>
    %169 = vector.broadcast %168 : vector<1x1x32xf32> to vector<1x64x32xf32>
    %170 = arith.addf %167, %169 : vector<1x64x32xf32>
    %cst_111 = arith.constant 3.000000e+00 : f32
    %171 = vector.broadcast %cst_111 : f32 to vector<1x64x32xf32>
    %172 = arith.addf %170, %171 : vector<1x64x32xf32>
    %cst_112 = arith.constant 0.000000e+00 : f32
    %cst_113 = arith.constant 6.000000e+00 : f32
    %173 = vector.broadcast %cst_112 : f32 to vector<1x64x32xf32>
    %174 = arith.maximumf %173, %172 : vector<1x64x32xf32>
    %175 = vector.broadcast %cst_113 : f32 to vector<1x64x32xf32>
    %176 = arith.minimumf %175, %174 : vector<1x64x32xf32>
    %177 = arith.mulf %170, %176 : vector<1x64x32xf32>
    %cst_114 = arith.constant 0.166666672 : f32
    %178 = vector.broadcast %cst_114 : f32 to vector<1x64x32xf32>
    %179 = arith.mulf %177, %178 : vector<1x64x32xf32>
    %180 = vector.shape_cast %179 : vector<1x64x32xf32> to vector<64x32xf32>
    %c0_115 = arith.constant 0 : index
    %c0_116 = arith.constant 0 : index
    %c0_117 = arith.constant 0 : index
    %181 = vector.load %arg14[%c0_115, %c0_116, %c0_117] : memref<1x32x64xbf16, #tpu.memory_space<vmem>>, vector<1x32x64xbf16>
    %182 = vector.shape_cast %181 : vector<1x32x64xbf16> to vector<32x64xbf16>
    %183 = arith.truncf %180 : vector<64x32xf32> to vector<64x32xbf16>
    %cst_118 = arith.constant dense<0.000000e+00> : vector<64x64xf32>
    %184 = tpu.matmul %183, %182, %cst_118 {dimension_numbers = #tpu.dot_dimension_numbers<[1], [0], [0], [1], [0, 0, 1, 1], [], []>} : vector<64x32xbf16>, vector<32x64xbf16>, vector<64x64xf32> -> vector<64x64xf32>
    %185 = arith.addf %4, %184 : vector<64x64xf32>
    %186 = vector.shape_cast %185 : vector<64x64xf32> to vector<1x64x64xf32>
    %c0_119 = arith.constant 0 : index
    %c0_120 = arith.constant 0 : index
    %c0_121 = arith.constant 0 : index
    %187 = vector.load %arg15[%c0_119, %c0_120, %c0_121] : memref<1x1x64xf32, #tpu.memory_space<vmem>>, vector<1x1x64xf32>
    %188 = vector.shape_cast %187 : vector<1x1x64xf32> to vector<1x64xf32>
    %c0_122 = arith.constant 0 : index
    %c0_123 = arith.constant 0 : index
    %c0_124 = arith.constant 0 : index
    %189 = vector.load %arg16[%c0_122, %c0_123, %c0_124] : memref<1x1x64xf32, #tpu.memory_space<vmem>>, vector<1x1x64xf32>
    %190 = vector.shape_cast %189 : vector<1x1x64xf32> to vector<1x64xf32>
    %cst_125 = arith.constant dense<0.000000e+00> : vector<1x64xf32>
    %191 = vector.multi_reduction <add>, %186, %cst_125 [1] : vector<1x64x64xf32> to vector<1x64xf32>
    %cst_126 = arith.constant dense<0.000000e+00> : vector<1x32xf32>
    %192 = tpu.matmul %191, %5, %cst_126 {dimension_numbers = #tpu.dot_dimension_numbers<[1], [0], [0], [1], [0, 0, 1, 1], [], []>} : vector<1x64xf32>, vector<64x32xf32>, vector<1x32xf32> -> vector<1x32xf32>
    %cst_127 = arith.constant 7.812500e-03 : f32
    %193 = vector.broadcast %cst_127 : f32 to vector<1x32xf32>
    %194 = arith.mulf %192, %193 : vector<1x32xf32>
    %cst_128 = arith.constant dense<0.000000e+00> : vector<1x64xf32>
    %195 = tpu.matmul %194, %6, %cst_128 {dimension_numbers = #tpu.dot_dimension_numbers<[1], [0], [0], [1], [0, 0, 1, 1], [], []>} : vector<1x32xf32>, vector<32x64xf32>, vector<1x64xf32> -> vector<1x64xf32>
    %196 = vector.shape_cast %195 : vector<1x64xf32> to vector<1x1x64xf32>
    %197 = vector.broadcast %196 : vector<1x1x64xf32> to vector<1x64x64xf32>
    %198 = arith.subf %186, %197 : vector<1x64x64xf32>
    %199 = arith.mulf %198, %198 : vector<1x64x64xf32>
    %cst_129 = arith.constant dense<0.000000e+00> : vector<1x64xf32>
    %200 = vector.multi_reduction <add>, %199, %cst_129 [1] : vector<1x64x64xf32> to vector<1x64xf32>
    %cst_130 = arith.constant dense<0.000000e+00> : vector<1x32xf32>
    %201 = tpu.matmul %200, %5, %cst_130 {dimension_numbers = #tpu.dot_dimension_numbers<[1], [0], [0], [1], [0, 0, 1, 1], [], []>} : vector<1x64xf32>, vector<64x32xf32>, vector<1x32xf32> -> vector<1x32xf32>
    %cst_131 = arith.constant 7.812500e-03 : f32
    %202 = vector.broadcast %cst_131 : f32 to vector<1x32xf32>
    %203 = arith.mulf %201, %202 : vector<1x32xf32>
    %cst_132 = arith.constant 9.99999974E-6 : f32
    %204 = vector.broadcast %cst_132 : f32 to vector<1x32xf32>
    %205 = arith.addf %203, %204 : vector<1x32xf32>
    %206 = math.rsqrt %205 : vector<1x32xf32>
    %cst_133 = arith.constant dense<0.000000e+00> : vector<1x64xf32>
    %207 = tpu.matmul %206, %6, %cst_133 {dimension_numbers = #tpu.dot_dimension_numbers<[1], [0], [0], [1], [0, 0, 1, 1], [], []>} : vector<1x32xf32>, vector<32x64xf32>, vector<1x64xf32> -> vector<1x64xf32>
    %208 = vector.shape_cast %207 : vector<1x64xf32> to vector<1x1x64xf32>
    %209 = vector.broadcast %208 : vector<1x1x64xf32> to vector<1x64x64xf32>
    %210 = arith.mulf %198, %209 : vector<1x64x64xf32>
    %211 = vector.shape_cast %188 : vector<1x64xf32> to vector<1x1x64xf32>
    %212 = vector.broadcast %211 : vector<1x1x64xf32> to vector<1x64x64xf32>
    %213 = arith.mulf %210, %212 : vector<1x64x64xf32>
    %214 = vector.shape_cast %190 : vector<1x64xf32> to vector<1x1x64xf32>
    %215 = vector.broadcast %214 : vector<1x1x64xf32> to vector<1x64x64xf32>
    %216 = arith.addf %213, %215 : vector<1x64x64xf32>
    %217 = vector.shape_cast %216 : vector<1x64x64xf32> to vector<64x64xf32>
    %c0_134 = arith.constant 0 : index
    %c0_135 = arith.constant 0 : index
    %c0_136 = arith.constant 0 : index
    %218 = vector.load %arg17[%c0_134, %c0_135, %c0_136] : memref<1x64x192xbf16, #tpu.memory_space<vmem>>, vector<1x64x192xbf16>
    %219 = vector.shape_cast %218 : vector<1x64x192xbf16> to vector<64x192xbf16>
    %220 = arith.truncf %217 : vector<64x64xf32> to vector<64x64xbf16>
    %cst_137 = arith.constant dense<0.000000e+00> : vector<64x192xf32>
    %221 = tpu.matmul %220, %219, %cst_137 {dimension_numbers = #tpu.dot_dimension_numbers<[1], [0], [0], [1], [0, 0, 1, 1], [], []>} : vector<64x64xbf16>, vector<64x192xbf16>, vector<64x192xf32> -> vector<64x192xf32>
    %c0_138 = arith.constant 0 : index
    %c0_139 = arith.constant 0 : index
    %c0_140 = arith.constant 0 : index
    %222 = vector.load %arg18[%c0_138, %c0_139, %c0_140] : memref<1x1x192xf32, #tpu.memory_space<vmem>>, vector<1x1x192xf32>
    %223 = vector.shape_cast %222 : vector<1x1x192xf32> to vector<1x192xf32>
    %224 = vector.broadcast %223 : vector<1x192xf32> to vector<64x192xf32>
    %225 = arith.addf %221, %224 : vector<64x192xf32>
    %226 = vector.extract_strided_slice %225 {offsets = [0, 0], sizes = [64, 64], strides = [1, 1]} : vector<64x192xf32> to vector<64x64xf32>
    %cst_141 = arith.constant 0.000000e+00 : f32
    %227 = vector.broadcast %cst_141 : f32 to vector<64x64xf32>
    %228 = arith.cmpf ogt, %226, %227 : vector<64x64xf32>
    %cst_142 = arith.constant 1.000000e+00 : f32
    %229 = vector.broadcast %cst_142 : f32 to vector<64x64xf32>
    %230 = arith.addf %226, %229 : vector<64x64xf32>
    %cst_143 = arith.constant 0.000000e+00 : f32
    %231 = vector.broadcast %cst_143 : f32 to vector<64x64xf32>
    %232 = arith.minimumf %226, %231 : vector<64x64xf32>
    %233 = math.exp %232 : vector<64x64xf32>
    %234 = arith.select %228, %230, %233 : vector<64x64xi1>, vector<64x64xf32>
    %235 = vector.shape_cast %234 : vector<64x64xf32> to vector<1x64x64xf32>
    %236 = vector.extract_strided_slice %225 {offsets = [0, 64], sizes = [64, 64], strides = [1, 1]} : vector<64x192xf32> to vector<64x64xf32>
    %cst_144 = arith.constant 0.000000e+00 : f32
    %237 = vector.broadcast %cst_144 : f32 to vector<64x64xf32>
    %238 = arith.cmpf ogt, %236, %237 : vector<64x64xf32>
    %cst_145 = arith.constant 1.000000e+00 : f32
    %239 = vector.broadcast %cst_145 : f32 to vector<64x64xf32>
    %240 = arith.addf %236, %239 : vector<64x64xf32>
    %cst_146 = arith.constant 0.000000e+00 : f32
    %241 = vector.broadcast %cst_146 : f32 to vector<64x64xf32>
    %242 = arith.minimumf %236, %241 : vector<64x64xf32>
    %243 = math.exp %242 : vector<64x64xf32>
    %244 = arith.select %238, %240, %243 : vector<64x64xi1>, vector<64x64xf32>
    %245 = vector.shape_cast %244 : vector<64x64xf32> to vector<1x64x64xf32>
    %246 = vector.extract_strided_slice %225 {offsets = [0, 128], sizes = [64, 64], strides = [1, 1]} : vector<64x192xf32> to vector<64x64xf32>
    %247 = vector.shape_cast %246 : vector<64x64xf32> to vector<1x64x64xf32>
    %248 = arith.truncf %245 : vector<1x64x64xf32> to vector<1x64x64xbf16>
    %249 = arith.truncf %247 : vector<1x64x64xf32> to vector<1x64x64xbf16>
    "tpu.trace_start"() <{level = 10 : i32, message = "bnc,bnd->bcd"}> : () -> ()
    %cst_147 = arith.constant dense<0.000000e+00> : vector<1x64x64xf32>
    %250 = tpu.matmul %248, %249, %cst_147 {dimension_numbers = #tpu.dot_dimension_numbers<[1], [1], [2], [2], [0, 0, 0, 2, 1, 2], [0], [0]>} : vector<1x64x64xbf16>, vector<1x64x64xbf16>, vector<1x64x64xf32> -> vector<1x64x64xf32>
    "tpu.trace_stop"() : () -> ()
    %251 = vector.shape_cast %9 : vector<64x64xf32> to vector<1x64x64xf32>
    %252 = arith.mulf %250, %251 : vector<1x64x64xf32>
    %253 = arith.truncf %235 : vector<1x64x64xf32> to vector<1x64x64xbf16>
    %254 = arith.truncf %252 : vector<1x64x64xf32> to vector<1x64x64xbf16>
    "tpu.trace_start"() <{level = 10 : i32, message = "bnc,bcd->bnd"}> : () -> ()
    %cst_148 = arith.constant dense<0.000000e+00> : vector<1x64x64xf32>
    %255 = tpu.matmul %253, %254, %cst_148 {dimension_numbers = #tpu.dot_dimension_numbers<[2], [1], [1], [2], [0, 0, 0, 1, 1, 2], [0], [0]>} : vector<1x64x64xbf16>, vector<1x64x64xbf16>, vector<1x64x64xf32> -> vector<1x64x64xf32>
    "tpu.trace_stop"() : () -> ()
    %256 = vector.shape_cast %255 : vector<1x64x64xf32> to vector<64x64xf32>
    %cst_149 = arith.constant dense<0.000000e+00> : vector<1x64xf32>
    %257 = vector.multi_reduction <add>, %245, %cst_149 [1] : vector<1x64x64xf32> to vector<1x64xf32>
    %258 = vector.shape_cast %257 : vector<1x64xf32> to vector<1x1x64xf32>
    %259 = vector.broadcast %258 : vector<1x1x64xf32> to vector<1x64x64xf32>
    %260 = arith.mulf %235, %259 : vector<1x64x64xf32>
    %261 = vector.shape_cast %260 : vector<1x64x64xf32> to vector<64x64xf32>
    %262 = arith.truncf %261 : vector<64x64xf32> to vector<64x64xbf16>
    %263 = arith.truncf %9 : vector<64x64xf32> to vector<64x64xbf16>
    %cst_150 = arith.constant dense<0.000000e+00> : vector<64x64xf32>
    %264 = tpu.matmul %262, %263, %cst_150 {dimension_numbers = #tpu.dot_dimension_numbers<[1], [0], [0], [1], [0, 0, 1, 1], [], []>} : vector<64x64xbf16>, vector<64x64xbf16>, vector<64x64xf32> -> vector<64x64xf32>
    %cst_151 = arith.constant 9.99999997E-7 : f32
    %265 = vector.broadcast %cst_151 : f32 to vector<64x64xf32>
    %266 = arith.addf %264, %265 : vector<64x64xf32>
    %267 = tpu.reciprocal %266 {approx = true} : vector<64x64xf32> -> vector<64x64xf32>
    %268 = arith.mulf %256, %267 : vector<64x64xf32>
    %c0_152 = arith.constant 0 : index
    %c0_153 = arith.constant 0 : index
    %c0_154 = arith.constant 0 : index
    %269 = vector.load %arg19[%c0_152, %c0_153, %c0_154] : memref<1x64x64xbf16, #tpu.memory_space<vmem>>, vector<1x64x64xbf16>
    %270 = vector.shape_cast %269 : vector<1x64x64xbf16> to vector<64x64xbf16>
    %271 = arith.truncf %268 : vector<64x64xf32> to vector<64x64xbf16>
    %cst_155 = arith.constant dense<0.000000e+00> : vector<64x64xf32>
    %272 = tpu.matmul %271, %270, %cst_155 {dimension_numbers = #tpu.dot_dimension_numbers<[1], [0], [0], [1], [0, 0, 1, 1], [], []>} : vector<64x64xbf16>, vector<64x64xbf16>, vector<64x64xf32> -> vector<64x64xf32>
    %273 = arith.addf %185, %272 : vector<64x64xf32>
    %c0_156 = arith.constant 0 : index
    %c0_157 = arith.constant 0 : index
    %c0_158 = arith.constant 0 : index
    %274 = vector.load %arg20[%c0_156, %c0_157, %c0_158] : memref<1x1x64xf32, #tpu.memory_space<vmem>>, vector<1x1x64xf32>
    %275 = vector.shape_cast %274 : vector<1x1x64xf32> to vector<1x64xf32>
    %276 = vector.broadcast %275 : vector<1x64xf32> to vector<64x64xf32>
    %277 = arith.addf %273, %276 : vector<64x64xf32>
    %278 = vector.shape_cast %277 : vector<64x64xf32> to vector<1x64x64xf32>
    %c0_159 = arith.constant 0 : index
    %c0_160 = arith.constant 0 : index
    %c0_161 = arith.constant 0 : index
    %279 = vector.load %arg21[%c0_159, %c0_160, %c0_161] : memref<1x64x64xf32, #tpu.memory_space<vmem>>, vector<1x64x64xf32>
    tpu.vector_store %arg21[%c0_159, %c0_160, %c0_161], %278 {strides = array<i32>} : memref<1x64x64xf32, #tpu.memory_space<vmem>>, vector<1x64x64xf32>,
    %c1_i32_162 = arith.constant 1 : i32
    %280 = arith.cmpi eq, %arg1, %c1_i32_162 : i32
    %281 = arith.extui %280 : i1 to i32
    %c0_i32_163 = arith.constant 0 : i32
    %282 = arith.cmpi ne, %281, %c0_i32_163 : i32
    scf.if %282 {
      %c0_164 = arith.constant 0 : index
      %c0_165 = arith.constant 0 : index
      %c0_166 = arith.constant 0 : index
      %283 = vector.load %arg21[%c0_164, %c0_165, %c0_166] : memref<1x64x64xf32, #tpu.memory_space<vmem>>, vector<1x64x64xf32>
      %cst_167 = arith.constant 3.000000e+00 : f32
      %284 = vector.broadcast %cst_167 : f32 to vector<1x64x64xf32>
      %285 = arith.addf %283, %284 : vector<1x64x64xf32>
      %cst_168 = arith.constant 0.000000e+00 : f32
      %cst_169 = arith.constant 6.000000e+00 : f32
      %286 = vector.broadcast %cst_168 : f32 to vector<1x64x64xf32>
      %287 = arith.maximumf %286, %285 : vector<1x64x64xf32>
      %288 = vector.broadcast %cst_169 : f32 to vector<1x64x64xf32>
      %289 = arith.minimumf %288, %287 : vector<1x64x64xf32>
      %290 = arith.mulf %283, %289 : vector<1x64x64xf32>
      %cst_170 = arith.constant 0.166666672 : f32
      %291 = vector.broadcast %cst_170 : f32 to vector<1x64x64xf32>
      %292 = arith.mulf %290, %291 : vector<1x64x64xf32>
      %c0_171 = arith.constant 0 : index
      %c0_172 = arith.constant 0 : index
      %c0_173 = arith.constant 0 : index
      %293 = vector.load %arg21[%c0_171, %c0_172, %c0_173] : memref<1x64x64xf32, #tpu.memory_space<vmem>>, vector<1x64x64xf32>
      tpu.vector_store %arg21[%c0_171, %c0_172, %c0_173], %292 {strides = array<i32>} : memref<1x64x64xf32, #tpu.memory_space<vmem>>, vector<1x64x64xf32>,
    } else {
    }
    return
  }
  func.func @transform_0(%arg0: i32, %arg1: i32) -> (i32, i32, i32) {
    %c0_i32 = arith.constant 0 : i32
    %c0_i32_0 = arith.constant 0 : i32
    %c0_i32_1 = arith.constant 0 : i32
    return %arg0, %c0_i32, %c0_i32_0 : i32, i32, i32
  }
  func.func @transform_1(%arg0: i32, %arg1: i32) -> (i32, i32) {
    %c0_i32 = arith.constant 0 : i32
    %c0_i32_0 = arith.constant 0 : i32
    %c0_i32_1 = arith.constant 0 : i32
    return %c0_i32, %c0_i32_0 : i32, i32
  }
  func.func @transform_2(%arg0: i32, %arg1: i32) -> (i32, i32) {
    %c0_i32 = arith.constant 0 : i32
    %c0_i32_0 = arith.constant 0 : i32
    %c0_i32_1 = arith.constant 0 : i32
    return %c0_i32, %c0_i32_0 : i32, i32
  }
  func.func @transform_3(%arg0: i32, %arg1: i32) -> (i32, i32) {
    %c0_i32 = arith.constant 0 : i32
    %c0_i32_0 = arith.constant 0 : i32
    %c0_i32_1 = arith.constant 0 : i32
    return %c0_i32, %c0_i32_0 : i32, i32
  }
  func.func @transform_4(%arg0: i32, %arg1: i32) -> (i32, i32) {
    %c0_i32 = arith.constant 0 : i32
    %c0_i32_0 = arith.constant 0 : i32
    %c0_i32_1 = arith.constant 0 : i32
    return %c0_i32, %c0_i32_0 : i32, i32
  }
  func.func @transform_5(%arg0: i32, %arg1: i32) -> (i32, i32) {
    %c0_i32 = arith.constant 0 : i32
    %c0_i32_0 = arith.constant 0 : i32
    %c0_i32_1 = arith.constant 0 : i32
    return %c0_i32, %c0_i32_0 : i32, i32
  }
  func.func @transform_6(%arg0: i32, %arg1: i32) -> (i32, i32, i32) {
    %c0_i32 = arith.constant 0 : i32
    %c0_i32_0 = arith.constant 0 : i32
    %c0_i32_1 = arith.constant 0 : i32
    %c0_i32_2 = arith.constant 0 : i32
    return %c0_i32, %c0_i32_0, %c0_i32_1 : i32, i32, i32
  }
  func.func @transform_7(%arg0: i32, %arg1: i32) -> (i32, i32, i32) {
    %c0_i32 = arith.constant 0 : i32
    %c0_i32_0 = arith.constant 0 : i32
    %c0_i32_1 = arith.constant 0 : i32
    return %arg1, %c0_i32, %c0_i32_0 : i32, i32, i32
  }
  func.func @transform_8(%arg0: i32, %arg1: i32) -> (i32, i32, i32) {
    %c0_i32 = arith.constant 0 : i32
    %c0_i32_0 = arith.constant 0 : i32
    %c0_i32_1 = arith.constant 0 : i32
    return %arg1, %c0_i32, %c0_i32_0 : i32, i32, i32
  }
  func.func @transform_9(%arg0: i32, %arg1: i32) -> (i32, i32, i32, i32) {
    %c0_i32 = arith.constant 0 : i32
    %c0_i32_0 = arith.constant 0 : i32
    %c0_i32_1 = arith.constant 0 : i32
    %c0_i32_2 = arith.constant 0 : i32
    return %arg1, %c0_i32, %c0_i32_0, %c0_i32_1 : i32, i32, i32, i32
  }
  func.func @transform_10(%arg0: i32, %arg1: i32) -> (i32, i32, i32) {
    %c0_i32 = arith.constant 0 : i32
    %c0_i32_0 = arith.constant 0 : i32
    %c0_i32_1 = arith.constant 0 : i32
    return %arg1, %c0_i32, %c0_i32_0 : i32, i32, i32
  }
  func.func @transform_11(%arg0: i32, %arg1: i32) -> (i32, i32, i32) {
    %c0_i32 = arith.constant 0 : i32
    %c0_i32_0 = arith.constant 0 : i32
    %c0_i32_1 = arith.constant 0 : i32
    return %arg1, %c0_i32, %c0_i32_0 : i32, i32, i32
  }
  func.func @transform_12(%arg0: i32, %arg1: i32) -> (i32, i32, i32) {
    %c0_i32 = arith.constant 0 : i32
    %c0_i32_0 = arith.constant 0 : i32
    %c0_i32_1 = arith.constant 0 : i32
    return %arg1, %c0_i32, %c0_i32_0 : i32, i32, i32
  }
  func.func @transform_13(%arg0: i32, %arg1: i32) -> (i32, i32, i32) {
    %c0_i32 = arith.constant 0 : i32
    %c0_i32_0 = arith.constant 0 : i32
    %c0_i32_1 = arith.constant 0 : i32
    return %arg1, %c0_i32, %c0_i32_0 : i32, i32, i32
  }
  func.func @transform_14(%arg0: i32, %arg1: i32) -> (i32, i32, i32) {
    %c0_i32 = arith.constant 0 : i32
    %c0_i32_0 = arith.constant 0 : i32
    %c0_i32_1 = arith.constant 0 : i32
    return %arg1, %c0_i32, %c0_i32_0 : i32, i32, i32
  }
  func.func @transform_15(%arg0: i32, %arg1: i32) -> (i32, i32, i32) {
    %c0_i32 = arith.constant 0 : i32
    %c0_i32_0 = arith.constant 0 : i32
    %c0_i32_1 = arith.constant 0 : i32
    return %arg1, %c0_i32, %c0_i32_0 : i32, i32, i32
  }
  func.func @transform_16(%arg0: i32, %arg1: i32) -> (i32, i32, i32) {
    %c0_i32 = arith.constant 0 : i32
    %c0_i32_0 = arith.constant 0 : i32
    %c0_i32_1 = arith.constant 0 : i32
    return %arg1, %c0_i32, %c0_i32_0 : i32, i32, i32
  }
  func.func @transform_17(%arg0: i32, %arg1: i32) -> (i32, i32, i32) {
    %c0_i32 = arith.constant 0 : i32
    %c0_i32_0 = arith.constant 0 : i32
    %c0_i32_1 = arith.constant 0 : i32
    return %arg1, %c0_i32, %c0_i32_0 : i32, i32, i32
  }
  func.func @transform_18(%arg0: i32, %arg1: i32) -> (i32, i32, i32) {
    %c0_i32 = arith.constant 0 : i32
    %c0_i32_0 = arith.constant 0 : i32
    %c0_i32_1 = arith.constant 0 : i32
    return %arg1, %c0_i32, %c0_i32_0 : i32, i32, i32
  }
  func.func @transform_19(%arg0: i32, %arg1: i32) -> (i32, i32, i32) {
    %c0_i32 = arith.constant 0 : i32
    %c0_i32_0 = arith.constant 0 : i32
    %c0_i32_1 = arith.constant 0 : i32
    return %arg0, %c0_i32, %c0_i32_0 : i32, i32, i32
  }
}

</mosaic_0001>

<llo_original>
// kernel: residual_stack_forward.1
$region0: #{residual_stack_forward.1}
  #allocation0 [shape = 'u32[]', space=smem, size = 0x4, offset = 0x4, fixed_abs, tag = 'smem constant byte address 0x4 - core index']
  #allocation1 [shape = 'u32[72,128]{1,0:T(1,128)}', space=vmem, size = 0x9000, scoped, tag = 'internal scratch']
  %s0 = inlined_call_operand.vmem [shape: f32[2,64,64], index: 0, kind: input, shape index: {}]
  %s1 = inlined_call_operand.vmem [shape: f32[64,32], index: 1, kind: input, shape index: {}]
  %s2 = inlined_call_operand.vmem [shape: f32[32,64], index: 2, kind: input, shape index: {}]
  %s3 = inlined_call_operand.vmem [shape: f32[32,32], index: 3, kind: input, shape index: {}]
  %s4 = inlined_call_operand.vmem [shape: f32[32,32], index: 4, kind: input, shape index: {}]
  %s5 = inlined_call_operand.vmem [shape: f32[64,64], index: 5, kind: input, shape index: {}]
  %s6 = inlined_call_operand.vmem [shape: f32[9,64,1], index: 6, kind: input, shape index: {}]
  %s7 = inlined_call_operand.vmem [shape: f32[2,1,64], index: 7, kind: input, shape index: {}]
  %s8 = inlined_call_operand.vmem [shape: f32[2,1,64], index: 8, kind: input, shape index: {}]
  %s9 = inlined_call_operand.vmem [shape: bf16[2,9,64,32], index: 9, kind: input, shape index: {}]
  %s10 = inlined_call_operand.vmem [shape: f32[2,1,32], index: 10, kind: input, shape index: {}]
  %s11 = inlined_call_operand.vmem [shape: f32[2,1,32], index: 11, kind: input, shape index: {}]
  %s12 = inlined_call_operand.vmem [shape: bf16[2,32,64], index: 12, kind: input, shape index: {}]
  %s13 = inlined_call_operand.vmem [shape: f32[2,1,64], index: 13, kind: input, shape index: {}]
  %s14 = inlined_call_operand.vmem [shape: f32[2,1,64], index: 14, kind: input, shape index: {}]
  %s15 = inlined_call_operand.vmem [shape: bf16[2,64,192], index: 15, kind: input, shape index: {}]
  %s16 = inlined_call_operand.vmem [shape: f32[2,1,192], index: 16, kind: input, shape index: {}]
  %s17 = inlined_call_operand.vmem [shape: bf16[2,64,64], index: 17, kind: input, shape index: {}]
  %s18 = inlined_call_operand.vmem [shape: f32[2,1,64], index: 18, kind: input, shape index: {}]
  %s19 = inlined_call_operand.hbm [shape: f32[2,64,64], index: 19, kind: output, shape index: {}]
  %s20 = sld [smem:[#allocation0]]
  $region117: #{residual_stack_forward.1} parent=0
    _
  %s22 = ssub.s32 1, %s20
  %s23 = scalar_select 0, %s22, %s20
  $region1: #{residual_stack_forward.1} parent=0
    #allocation2 [shape = 'u8[65536]{0}', space=vmem, size = 0x10000, scoped, tag = 'output window, operand 0']
    #allocation3 [shape = 's32[2]{0}', space=sflag, size = 0x8, scoped, tag = 'scoped memory for residual_stack_forward.1']
    %24 = vsyncpa [#allocation3], 0
    %s25 = scalar_lea.sflag [#allocation3], 1
    %26 = vsyncpa %s25, 0
    loop: start=0, step=1, limit=6
    $region2: #{residual_stack_forward.1} parent=1 // loop_pre_header
      _
    $region3: #{residual_stack_forward.1} parent=1 // loop_header
      %s28 = sphi 0, %s32
      %p29 = scmp.ge.s32.totalorder %s28, 6
      %s35 = sphi 0, %s47
      %s36 = sphi 0, %s43
      %s37 = sphi 0, %s35
      %s38 = sphi 0, %s36
      %s39 = sphi 0, %s37
      %s40 = sphi 0, %s38
      %s50 = sphi 0, %s52
      %s53 = sphi 0, %s50
      %s54 = sphi 0, %s53
      %s70 = sphi 0, %s54
      %s74 = sphi 0, %s74
      %s76 = sphi 0, %s74
      %s77 = sphi 0, %s76
      %s91 = sphi 0, %s77
      %s95 = sphi 0, %s95
      %s97 = sphi 0, %s95
      %s98 = sphi 0, %s97
      %s112 = sphi 0, %s98
      %s116 = sphi 0, %s116
      %s118 = sphi 0, %s116
      %s119 = sphi 0, %s118
      %s133 = sphi 0, %s119
      %s137 = sphi 0, %s137
      %s139 = sphi 0, %s137
      %s140 = sphi 0, %s139
      %s154 = sphi 0, %s140
      %s158 = sphi 0, %s158
      %s160 = sphi 0, %s158
      %s161 = sphi 0, %s160
      %s175 = sphi 0, %s161
      %s179 = sphi 0, %s179
      %s181 = sphi 0, %s179
      %s182 = sphi 0, %s181
      %s196 = sphi 0, %s182
      %s202 = sphi 0, %s204
      %s205 = sphi 0, %s202
      %s206 = sphi 0, %s205
      %s222 = sphi 0, %s206
      %s228 = sphi 0, %s230
      %s231 = sphi 0, %s228
      %s232 = sphi 0, %s231
      %s248 = sphi 0, %s232
      %s254 = sphi 0, %s256
      %s257 = sphi 0, %s254
      %s258 = sphi 0, %s257
      %s274 = sphi 0, %s258
      %s280 = sphi 0, %s282
      %s283 = sphi 0, %s280
      %s284 = sphi 0, %s283
      %s300 = sphi 0, %s284
      %s306 = sphi 0, %s308
      %s309 = sphi 0, %s306
      %s310 = sphi 0, %s309
      %s326 = sphi 0, %s310
      %s332 = sphi 0, %s334
      %s335 = sphi 0, %s332
      %s336 = sphi 0, %s335
      %s352 = sphi 0, %s336
      %s358 = sphi 0, %s360
      %s361 = sphi 0, %s358
      %s362 = sphi 0, %s361
      %s378 = sphi 0, %s362
      %s384 = sphi 0, %s386
      %s387 = sphi 0, %s384
      %s388 = sphi 0, %s387
      %s404 = sphi 0, %s388
      %s410 = sphi 0, %s412
      %s413 = sphi 0, %s410
      %s414 = sphi 0, %s413
      %s430 = sphi 0, %s414
      %s436 = sphi 0, %s438
      %s439 = sphi 0, %s436
      %s440 = sphi 0, %s439
      %s456 = sphi 0, %s440
      %s462 = sphi 0, %s464
      %s465 = sphi 0, %s462
      %s466 = sphi 0, %s465
      %s482 = sphi 0, %s466
      %s488 = sphi 0, %s490
      %s491 = sphi 0, %s488
      %s492 = sphi 0, %s491
      %s508 = sphi 0, %s492
      %s514 = sphi 0, %s516
      %s517 = sphi 0, %s514
      %s518 = sphi 0, %s517
      %s534 = sphi 0, %s518
    $region4: #{residual_stack_forward.1} parent=1 // loop_header_branch
      %31 = sbr.rel (%p29) target = $region8
    $region5: #{residual_stack_forward.1} parent=1 // loop_body
      %s33 = ssub.s32 %s28, 1
      %s34 = ssub.s32 %s28, 2
      %s41 = sadd.s32 1, %s36
      %p42 = scmp.ge.s32.totalorder %s41, 2
      %s43 = scalar_select %p42, 0, %s41
      %s44 = sadd.s32 1, %s35
      %s45 = scalar_select %p42, %s44, %s35
      %p46 = scmp.ge.s32.totalorder %s45, 2
      %s47 = scalar_select %p46, 0, %s45
      %s48 = ssub.s32 %s35, %s47
      %p49 = scmp.eq.s32.totalorder %s48, 0
      %s51 = sadd.s32 %s50, 1
      %s52 = scalar_select %p49, %s50, %s51
      %p55 = pneg %p49
      %p56 = scmp.eq.s32.totalorder %s28, 3
      %p57 = por %p55, %p56
      %p58 = scmp.ne.s32.totalorder %s50, %s53
      %p59 = scmp.eq.s32.totalorder %s28, 0
      %p60 = por %p58, %p59
      %p61 = scmp.ne.s32.totalorder %s50, %s53
      %p62 = scmp.eq.s32.totalorder %s33, 3
      %p63 = por %p61, %p62
      %p64 = scmp.ne.s32.totalorder %s53, %s54
      %p65 = scmp.eq.s32.totalorder %s33, 0
      %p66 = por %p64, %p65
      %p67 = scmp.ne.s32.totalorder %s53, %s54
      %p68 = scmp.eq.s32.totalorder %s34, 3
      %p69 = por %p67, %p68
      %p71 = scmp.ne.s32.totalorder %s54, %s70
      %p72 = scmp.eq.s32.totalorder %s34, 0
      %p73 = por %p71, %p72
      %s75 = sadd.s32 %s74, 1
      %p78 = scmp.eq.s32.totalorder %s28, 3
      %p79 = scmp.ne.s32.totalorder %s74, %s76
      %p80 = scmp.eq.s32.totalorder %s28, 0
      %p81 = por %p79, %p80
      %p82 = scmp.ne.s32.totalorder %s74, %s76
      %p83 = scmp.eq.s32.totalorder %s33, 3
      %p84 = por %p82, %p83
      %p85 = scmp.ne.s32.totalorder %s76, %s77
      %p86 = scmp.eq.s32.totalorder %s33, 0
      %p87 = por %p85, %p86
      %p88 = scmp.ne.s32.totalorder %s76, %s77
      %p89 = scmp.eq.s32.totalorder %s34, 3
      %p90 = por %p88, %p89
      %p92 = scmp.ne.s32.totalorder %s77, %s91
      %p93 = scmp.eq.s32.totalorder %s34, 0
      %p94 = por %p92, %p93
      %s96 = sadd.s32 %s95, 1
      %p99 = scmp.eq.s32.totalorder %s28, 3
      %p100 = scmp.ne.s32.totalorder %s95, %s97
      %p101 = scmp.eq.s32.totalorder %s28, 0
      %p102 = por %p100, %p101
      %p103 = scmp.ne.s32.totalorder %s95, %s97
      %p104 = scmp.eq.s32.totalorder %s33, 3
      %p105 = por %p103, %p104
      %p106 = scmp.ne.s32.totalorder %s97, %s98
      %p107 = scmp.eq.s32.totalorder %s33, 0
      %p108 = por %p106, %p107
      %p109 = scmp.ne.s32.totalorder %s97, %s98
      %p110 = scmp.eq.s32.totalorder %s34, 3
      %p111 = por %p109, %p110
      %p113 = scmp.ne.s32.totalorder %s98, %s112
      %p114 = scmp.eq.s32.totalorder %s34, 0
      %p115 = por %p113, %p114
      %s117 = sadd.s32 %s116, 1
      %p120 = scmp.eq.s32.totalorder %s28, 3
      %p121 = scmp.ne.s32.totalorder %s116, %s118
      %p122 = scmp.eq.s32.totalorder %s28, 0
      %p123 = por %p121, %p122
      %p124 = scmp.ne.s32.totalorder %s116, %s118
      %p125 = scmp.eq.s32.totalorder %s33, 3
      %p126 = por %p124, %p125
      %p127 = scmp.ne.s32.totalorder %s118, %s119
      %p128 = scmp.eq.s32.totalorder %s33, 0
      %p129 = por %p127, %p128
      %p130 = scmp.ne.s32.totalorder %s118, %s119
      %p131 = scmp.eq.s32.totalorder %s34, 3
      %p132 = por %p130, %p131
      %p134 = scmp.ne.s32.totalorder %s119, %s133
      %p135 = scmp.eq.s32.totalorder %s34, 0
      %p136 = por %p134, %p135
      %s138 = sadd.s32 %s137, 1
      %p141 = scmp.eq.s32.totalorder %s28, 3
      %p142 = scmp.ne.s32.totalorder %s137, %s139
      %p143 = scmp.eq.s32.totalorder %s28, 0
      %p144 = por %p142, %p143
      %p145 = scmp.ne.s32.totalorder %s137, %s139
      %p146 = scmp.eq.s32.totalorder %s33, 3
      %p147 = por %p145, %p146
      %p148 = scmp.ne.s32.totalorder %s139, %s140
      %p149 = scmp.eq.s32.totalorder %s33, 0
      %p150 = por %p148, %p149
      %p151 = scmp.ne.s32.totalorder %s139, %s140
      %p152 = scmp.eq.s32.totalorder %s34, 3
      %p153 = por %p151, %p152
      %p155 = scmp.ne.s32.totalorder %s140, %s154
      %p156 = scmp.eq.s32.totalorder %s34, 0
      %p157 = por %p155, %p156
      %s159 = sadd.s32 %s158, 1
      %p162 = scmp.eq.s32.totalorder %s28, 3
      %p163 = scmp.ne.s32.totalorder %s158, %s160
      %p164 = scmp.eq.s32.totalorder %s28, 0
      %p165 = por %p163, %p164
      %p166 = scmp.ne.s32.totalorder %s158, %s160
      %p167 = scmp.eq.s32.totalorder %s33, 3
      %p168 = por %p166, %p167
      %p169 = scmp.ne.s32.totalorder %s160, %s161
      %p170 = scmp.eq.s32.totalorder %s33, 0
      %p171 = por %p169, %p170
      %p172 = scmp.ne.s32.totalorder %s160, %s161
      %p173 = scmp.eq.s32.totalorder %s34, 3
      %p174 = por %p172, %p173
      %p176 = scmp.ne.s32.totalorder %s161, %s175
      %p177 = scmp.eq.s32.totalorder %s34, 0
      %p178 = por %p176, %p177
      %s180 = sadd.s32 %s179, 1
      %p183 = scmp.eq.s32.totalorder %s28, 3
      %p184 = scmp.ne.s32.totalorder %s179, %s181
      %p185 = scmp.eq.s32.totalorder %s28, 0
      %p186 = por %p184, %p185
      %p187 = scmp.ne.s32.totalorder %s179, %s181
      %p188 = scmp.eq.s32.totalorder %s33, 3
      %p189 = por %p187, %p188
      %p190 = scmp.ne.s32.totalorder %s181, %s182
      %p191 = scmp.eq.s32.totalorder %s33, 0
      %p192 = por %p190, %p191
      %p193 = scmp.ne.s32.totalorder %s181, %s182
      %p194 = scmp.eq.s32.totalorder %s34, 3
      %p195 = por %p193, %p194
      %p197 = scmp.ne.s32.totalorder %s182, %s196
      %p198 = scmp.eq.s32.totalorder %s34, 0
      %p199 = por %p197, %p198
      %s200 = ssub.s32 %s36, %s43
      %p201 = scmp.eq.s32.totalorder %s200, 0
      %s203 = sadd.s32 %s202, 1
      %s204 = scalar_select %p201, %s202, %s203
      %p207 = pneg %p201
      %p208 = scmp.eq.s32.totalorder %s28, 3
      %p209 = por %p207, %p208
      %p210 = scmp.ne.s32.totalorder %s202, %s205
      %p211 = scmp.eq.s32.totalorder %s28, 0
      %p212 = por %p210, %p211
      %p213 = scmp.ne.s32.totalorder %s202, %s205
      %p214 = scmp.eq.s32.totalorder %s33, 3
      %p215 = por %p213, %p214
      %p216 = scmp.ne.s32.totalorder %s205, %s206
      %p217 = scmp.eq.s32.totalorder %s33, 0
      %p218 = por %p216, %p217
      %p219 = scmp.ne.s32.totalorder %s205, %s206
      %p220 = scmp.eq.s32.totalorder %s34, 3
      %p221 = por %p219, %p220
      %p223 = scmp.ne.s32.totalorder %s206, %s222
      %p224 = scmp.eq.s32.totalorder %s34, 0
      %p225 = por %p223, %p224
      %s226 = ssub.s32 %s36, %s43
      %p227 = scmp.eq.s32.totalorder %s226, 0
      %s229 = sadd.s32 %s228, 1
      %s230 = scalar_select %p227, %s228, %s229
      %p233 = pneg %p227
      %p234 = scmp.eq.s32.totalorder %s28, 3
      %p235 = por %p233, %p234
      %p236 = scmp.ne.s32.totalorder %s228, %s231
      %p237 = scmp.eq.s32.totalorder %s28, 0
      %p238 = por %p236, %p237
      %p239 = scmp.ne.s32.totalorder %s228, %s231
      %p240 = scmp.eq.s32.totalorder %s33, 3
      %p241 = por %p239, %p240
      %p242 = scmp.ne.s32.totalorder %s231, %s232
      %p243 = scmp.eq.s32.totalorder %s33, 0
      %p244 = por %p242, %p243
      %p245 = scmp.ne.s32.totalorder %s231, %s232
      %p246 = scmp.eq.s32.totalorder %s34, 3
      %p247 = por %p245, %p246
      %p249 = scmp.ne.s32.totalorder %s232, %s248
      %p250 = scmp.eq.s32.totalorder %s34, 0
      %p251 = por %p249, %p250
      %s252 = ssub.s32 %s36, %s43
      %p253 = scmp.eq.s32.totalorder %s252, 0
      %s255 = sadd.s32 %s254, 1
      %s256 = scalar_select %p253, %s254, %s255
      %p259 = pneg %p253
      %p260 = scmp.eq.s32.totalorder %s28, 3
      %p261 = por %p259, %p260
      %p262 = scmp.ne.s32.totalorder %s254, %s257
      %p263 = scmp.eq.s32.totalorder %s28, 0
      %p264 = por %p262, %p263
      %p265 = scmp.ne.s32.totalorder %s254, %s257
      %p266 = scmp.eq.s32.totalorder %s33, 3
      %p267 = por %p265, %p266
      %p268 = scmp.ne.s32.totalorder %s257, %s258
      %p269 = scmp.eq.s32.totalorder %s33, 0
      %p270 = por %p268, %p269
      %p271 = scmp.ne.s32.totalorder %s257, %s258
      %p272 = scmp.eq.s32.totalorder %s34, 3
      %p273 = por %p271, %p272
      %p275 = scmp.ne.s32.totalorder %s258, %s274
      %p276 = scmp.eq.s32.totalorder %s34, 0
      %p277 = por %p275, %p276
      %s278 = ssub.s32 %s36, %s43
      %p279 = scmp.eq.s32.totalorder %s278, 0
      %s281 = sadd.s32 %s280, 1
      %s282 = scalar_select %p279, %s280, %s281
      %p285 = pneg %p279
      %p286 = scmp.eq.s32.totalorder %s28, 3
      %p287 = por %p285, %p286
      %p288 = scmp.ne.s32.totalorder %s280, %s283
      %p289 = scmp.eq.s32.totalorder %s28, 0
      %p290 = por %p288, %p289
      %p291 = scmp.ne.s32.totalorder %s280, %s283
      %p292 = scmp.eq.s32.totalorder %s33, 3
      %p293 = por %p291, %p292
      %p294 = scmp.ne.s32.totalorder %s283, %s284
      %p295 = scmp.eq.s32.totalorder %s33, 0
      %p296 = por %p294, %p295
      %p297 = scmp.ne.s32.totalorder %s283, %s284
      %p298 = scmp.eq.s32.totalorder %s34, 3
      %p299 = por %p297, %p298
      %p301 = scmp.ne.s32.totalorder %s284, %s300
      %p302 = scmp.eq.s32.totalorder %s34, 0
      %p303 = por %p301, %p302
      %s304 = ssub.s32 %s36, %s43
      %p305 = scmp.eq.s32.totalorder %s304, 0
      %s307 = sadd.s32 %s306, 1
      %s308 = scalar_select %p305, %s306, %s307
      %p311 = pneg %p305
      %p312 = scmp.eq.s32.totalorder %s28, 3
      %p313 = por %p311, %p312
      %p314 = scmp.ne.s32.totalorder %s306, %s309
      %p315 = scmp.eq.s32.totalorder %s28, 0
      %p316 = por %p314, %p315
      %p317 = scmp.ne.s32.totalorder %s306, %s309
      %p318 = scmp.eq.s32.totalorder %s33, 3
      %p319 = por %p317, %p318
      %p320 = scmp.ne.s32.totalorder %s309, %s310
      %p321 = scmp.eq.s32.totalorder %s33, 0
      %p322 = por %p320, %p321
      %p323 = scmp.ne.s32.totalorder %s309, %s310
      %p324 = scmp.eq.s32.totalorder %s34, 3
      %p325 = por %p323, %p324
      %p327 = scmp.ne.s32.totalorder %s310, %s326
      %p328 = scmp.eq.s32.totalorder %s34, 0
      %p329 = por %p327, %p328
      %s330 = ssub.s32 %s36, %s43
      %p331 = scmp.eq.s32.totalorder %s330, 0
      %s333 = sadd.s32 %s332, 1
      %s334 = scalar_select %p331, %s332, %s333
      %p337 = pneg %p331
      %p338 = scmp.eq.s32.totalorder %s28, 3
      %p339 = por %p337, %p338
      %p340 = scmp.ne.s32.totalorder %s332, %s335
      %p341 = scmp.eq.s32.totalorder %s28, 0
      %p342 = por %p340, %p341
      %p343 = scmp.ne.s32.totalorder %s332, %s335
      %p344 = scmp.eq.s32.totalorder %s33, 3
      %p345 = por %p343, %p344
      %p346 = scmp.ne.s32.totalorder %s335, %s336
      %p347 = scmp.eq.s32.totalorder %s33, 0
      %p348 = por %p346, %p347
      %p349 = scmp.ne.s32.totalorder %s335, %s336
      %p350 = scmp.eq.s32.totalorder %s34, 3
      %p351 = por %p349, %p350
      %p353 = scmp.ne.s32.totalorder %s336, %s352
      %p354 = scmp.eq.s32.totalorder %s34, 0
      %p355 = por %p353, %p354
      %s356 = ssub.s32 %s36, %s43
      %p357 = scmp.eq.s32.totalorder %s356, 0
      %s359 = sadd.s32 %s358, 1
      %s360 = scalar_select %p357, %s358, %s359
      %p363 = pneg %p357
      %p364 = scmp.eq.s32.totalorder %s28, 3
      %p365 = por %p363, %p364
      %p366 = scmp.ne.s32.totalorder %s358, %s361
      %p367 = scmp.eq.s32.totalorder %s28, 0
      %p368 = por %p366, %p367
      %p369 = scmp.ne.s32.totalorder %s358, %s361
      %p370 = scmp.eq.s32.totalorder %s33, 3
      %p371 = por %p369, %p370
      %p372 = scmp.ne.s32.totalorder %s361, %s362
      %p373 = scmp.eq.s32.totalorder %s33, 0
      %p374 = por %p372, %p373
      %p375 = scmp.ne.s32.totalorder %s361, %s362
      %p376 = scmp.eq.s32.totalorder %s34, 3
      %p377 = por %p375, %p376
      %p379 = scmp.ne.s32.totalorder %s362, %s378
      %p380 = scmp.eq.s32.totalorder %s34, 0
      %p381 = por %p379, %p380
      %s382 = ssub.s32 %s36, %s43
      %p383 = scmp.eq.s32.totalorder %s382, 0
      %s385 = sadd.s32 %s384, 1
      %s386 = scalar_select %p383, %s384, %s385
      %p389 = pneg %p383
      %p390 = scmp.eq.s32.totalorder %s28, 3
      %p391 = por %p389, %p390
      %p392 = scmp.ne.s32.totalorder %s384, %s387
      %p393 = scmp.eq.s32.totalorder %s28, 0
      %p394 = por %p392, %p393
      %p395 = scmp.ne.s32.totalorder %s384, %s387
      %p396 = scmp.eq.s32.totalorder %s33, 3
      %p397 = por %p395, %p396
      %p398 = scmp.ne.s32.totalorder %s387, %s388
      %p399 = scmp.eq.s32.totalorder %s33, 0
      %p400 = por %p398, %p399
      %p401 = scmp.ne.s32.totalorder %s387, %s388
      %p402 = scmp.eq.s32.totalorder %s34, 3
      %p403 = por %p401, %p402
      %p405 = scmp.ne.s32.totalorder %s388, %s404
      %p406 = scmp.eq.s32.totalorder %s34, 0
      %p407 = por %p405, %p406
      %s408 = ssub.s32 %s36, %s43
      %p409 = scmp.eq.s32.totalorder %s408, 0
      %s411 = sadd.s32 %s410, 1
      %s412 = scalar_select %p409, %s410, %s411
      %p415 = pneg %p409
      %p416 = scmp.eq.s32.totalorder %s28, 3
      %p417 = por %p415, %p416
      %p418 = scmp.ne.s32.totalorder %s410, %s413
      %p419 = scmp.eq.s32.totalorder %s28, 0
      %p420 = por %p418, %p419
      %p421 = scmp.ne.s32.totalorder %s410, %s413
      %p422 = scmp.eq.s32.totalorder %s33, 3
      %p423 = por %p421, %p422
      %p424 = scmp.ne.s32.totalorder %s413, %s414
      %p425 = scmp.eq.s32.totalorder %s33, 0
      %p426 = por %p424, %p425
      %p427 = scmp.ne.s32.totalorder %s413, %s414
      %p428 = scmp.eq.s32.totalorder %s34, 3
      %p429 = por %p427, %p428
      %p431 = scmp.ne.s32.totalorder %s414, %s430
      %p432 = scmp.eq.s32.totalorder %s34, 0
      %p433 = por %p431, %p432
      %s434 = ssub.s32 %s36, %s43
      %p435 = scmp.eq.s32.totalorder %s434, 0
      %s437 = sadd.s32 %s436, 1
      %s438 = scalar_select %p435, %s436, %s437
      %p441 = pneg %p435
      %p442 = scmp.eq.s32.totalorder %s28, 3
      %p443 = por %p441, %p442
      %p444 = scmp.ne.s32.totalorder %s436, %s439
      %p445 = scmp.eq.s32.totalorder %s28, 0
      %p446 = por %p444, %p445
      %p447 = scmp.ne.s32.totalorder %s436, %s439
      %p448 = scmp.eq.s32.totalorder %s33, 3
      %p449 = por %p447, %p448
      %p450 = scmp.ne.s32.totalorder %s439, %s440
      %p451 = scmp.eq.s32.totalorder %s33, 0
      %p452 = por %p450, %p451
      %p453 = scmp.ne.s32.totalorder %s439, %s440
      %p454 = scmp.eq.s32.totalorder %s34, 3
      %p455 = por %p453, %p454
      %p457 = scmp.ne.s32.totalorder %s440, %s456
      %p458 = scmp.eq.s32.totalorder %s34, 0
      %p459 = por %p457, %p458
      %s460 = ssub.s32 %s36, %s43
      %p461 = scmp.eq.s32.totalorder %s460, 0
      %s463 = sadd.s32 %s462, 1
      %s464 = scalar_select %p461, %s462, %s463
      %p467 = pneg %p461
      %p468 = scmp.eq.s32.totalorder %s28, 3
      %p469 = por %p467, %p468
      %p470 = scmp.ne.s32.totalorder %s462, %s465
      %p471 = scmp.eq.s32.totalorder %s28, 0
      %p472 = por %p470, %p471
      %p473 = scmp.ne.s32.totalorder %s462, %s465
      %p474 = scmp.eq.s32.totalorder %s33, 3
      %p475 = por %p473, %p474
      %p476 = scmp.ne.s32.totalorder %s465, %s466
      %p477 = scmp.eq.s32.totalorder %s33, 0
      %p478 = por %p476, %p477
      %p479 = scmp.ne.s32.totalorder %s465, %s466
      %p480 = scmp.eq.s32.totalorder %s34, 3
      %p481 = por %p479, %p480
      %p483 = scmp.ne.s32.totalorder %s466, %s482
      %p484 = scmp.eq.s32.totalorder %s34, 0
      %p485 = por %p483, %p484
      %s486 = ssub.s32 %s36, %s43
      %p487 = scmp.eq.s32.totalorder %s486, 0
      %s489 = sadd.s32 %s488, 1
      %s490 = scalar_select %p487, %s488, %s489
      %p493 = pneg %p487
      %p494 = scmp.eq.s32.totalorder %s28, 3
      %p495 = por %p493, %p494
      %p496 = scmp.ne.s32.totalorder %s488, %s491
      %p497 = scmp.eq.s32.totalorder %s28, 0
      %p498 = por %p496, %p497
      %p499 = scmp.ne.s32.totalorder %s488, %s491
      %p500 = scmp.eq.s32.totalorder %s33, 3
      %p501 = por %p499, %p500
      %p502 = scmp.ne.s32.totalorder %s491, %s492
      %p503 = scmp.eq.s32.totalorder %s33, 0
      %p504 = por %p502, %p503
      %p505 = scmp.ne.s32.totalorder %s491, %s492
      %p506 = scmp.eq.s32.totalorder %s34, 3
      %p507 = por %p505, %p506
      %p509 = scmp.ne.s32.totalorder %s492, %s508
      %p510 = scmp.eq.s32.totalorder %s34, 0
      %p511 = por %p509, %p510
      %s512 = ssub.s32 %s35, %s47
      %p513 = scmp.eq.s32.totalorder %s512, 0
      %s515 = sadd.s32 %s514, 1
      %s516 = scalar_select %p513, %s514, %s515
      %p519 = pneg %p513
      %p520 = scmp.eq.s32.totalorder %s28, 3
      %p521 = por %p519, %p520
      %p522 = scmp.ne.s32.totalorder %s514, %s517
      %p523 = scmp.eq.s32.totalorder %s28, 0
      %p524 = por %p522, %p523
      %p525 = scmp.ne.s32.totalorder %s514, %s517
      %p526 = scmp.eq.s32.totalorder %s33, 3
      %p527 = por %p525, %p526
      %p528 = scmp.ne.s32.totalorder %s517, %s518
      %p529 = scmp.eq.s32.totalorder %s33, 0
      %p530 = por %p528, %p529
      %p531 = scmp.ne.s32.totalorder %s517, %s518
      %p532 = scmp.eq.s32.totalorder %s34, 3
      %p533 = por %p531, %p532
      %p535 = scmp.ne.s32.totalorder %s518, %s534
      %p536 = scmp.eq.s32.totalorder %s34, 0
      %p537 = por %p535, %p536
      %p538 = scmp.le.s32.totalorder 1, %s28
      %p539 = scmp.lt.s32.totalorder %s28, 5
      %p540 = pnand %p538, %p539
      %p541 = pneg %p540
      // Predicated region
      $region9: #{residual_stack_forward.1} parent=5 // pred_check
        _
      $region10: #{residual_stack_forward.1} parent=5 // pred_check_branch
        %543 = sbr.rel (%p540) target = $region12
      $region11: #{residual_stack_forward.1} parent=5 // pred_region
        %s544 = ssub.s32 %s28, 1
        // Predicated region
        $region13: #{residual_stack_forward.1} parent=11 // pred_check
          %p545 = pneg %p87
        $region14: #{residual_stack_forward.1} parent=11 // pred_check_branch
          %547 = sbr.rel (%p545) target = $region16
        $region15: #{residual_stack_forward.1} parent=11 // pred_region
          _
        $region16: #{residual_stack_forward.1} parent=11 // pred_fallthru
          _
        // Predicated region
        $region17: #{residual_stack_forward.1} parent=11 // pred_check
          %p548 = pneg %p108
        $region18: #{residual_stack_forward.1} parent=11 // pred_check_branch
          %550 = sbr.rel (%p548) target = $region20
        $region19: #{residual_stack_forward.1} parent=11 // pred_region
          _
        $region20: #{residual_stack_forward.1} parent=11 // pred_fallthru
          _
        // Predicated region
        $region21: #{residual_stack_forward.1} parent=11 // pred_check
          %p551 = pneg %p129
        $region22: #{residual_stack_forward.1} parent=11 // pred_check_branch
          %553 = sbr.rel (%p551) target = $region24
        $region23: #{residual_stack_forward.1} parent=11 // pred_region
          _
        $region24: #{residual_stack_forward.1} parent=11 // pred_fallthru
          _
        // Predicated region
        $region25: #{residual_stack_forward.1} parent=11 // pred_check
          %p554 = pneg %p150
        $region26: #{residual_stack_forward.1} parent=11 // pred_check_branch
          %556 = sbr.rel (%p554) target = $region28
        $region27: #{residual_stack_forward.1} parent=11 // pred_region
          _
        $region28: #{residual_stack_forward.1} parent=11 // pred_fallthru
          _
        // Predicated region
        $region29: #{residual_stack_forward.1} parent=11 // pred_check
          %p557 = pneg %p171
        $region30: #{residual_stack_forward.1} parent=11 // pred_check_branch
          %559 = sbr.rel (%p557) target = $region32
        $region31: #{residual_stack_forward.1} parent=11 // pred_region
          _
        $region32: #{residual_stack_forward.1} parent=11 // pred_fallthru
          _
        // Predicated region
        $region33: #{residual_stack_forward.1} parent=11 // pred_check
          %p560 = pneg %p192
        $region34: #{residual_stack_forward.1} parent=11 // pred_check_branch
          %562 = sbr.rel (%p560) target = $region36
        $region35: #{residual_stack_forward.1} parent=11 // pred_region
          _
        $region36: #{residual_stack_forward.1} parent=11 // pred_fallthru
          _
      $region12: #{residual_stack_forward.1} parent=5 // pred_fallthru
        _
      %p563 = scmp.lt.s32.totalorder %s28, 4
      // Predicated region
      $region37: #{residual_stack_forward.1} parent=5 // pred_check
        %p564 = pneg %p563
      $region38: #{residual_stack_forward.1} parent=5 // pred_check_branch
        %566 = sbr.rel (%p564) target = $region40
      $region39: #{residual_stack_forward.1} parent=5 // pred_region
        // Predicated region
        $region41: #{residual_stack_forward.1} parent=39 // pred_check
          %p567 = pneg %p60
        $region42: #{residual_stack_forward.1} parent=39 // pred_check_branch
          %569 = sbr.rel (%p567) target = $region44
        $region43: #{residual_stack_forward.1} parent=39 // pred_region
          %p570 = scmp.lt.s32.totalorder %s35, 1
          %s571 = scalar_select %p570, %s35, 1
          %s572 = smul.addr %s571, 8
          %s573 = smul.addr %s572, 8
          %s574 = scalar_lea.vmem %s0, %s573
        $region44: #{residual_stack_forward.1} parent=39 // pred_fallthru
          _
        // Predicated region
        $region45: #{residual_stack_forward.1} parent=39 // pred_check
          %p575 = pneg %p212
        $region46: #{residual_stack_forward.1} parent=39 // pred_check_branch
          %577 = sbr.rel (%p575) target = $region48
        $region47: #{residual_stack_forward.1} parent=39 // pred_region
          %p578 = scmp.lt.s32.totalorder %s36, 1
          %s579 = scalar_select %p578, %s36, 1
          %s580 = scalar_lea.vmem %s7, %s579
        $region48: #{residual_stack_forward.1} parent=39 // pred_fallthru
          _
        // Predicated region
        $region49: #{residual_stack_forward.1} parent=39 // pred_check
          %p581 = pneg %p238
        $region50: #{residual_stack_forward.1} parent=39 // pred_check_branch
          %583 = sbr.rel (%p581) target = $region52
        $region51: #{residual_stack_forward.1} parent=39 // pred_region
          %p584 = scmp.lt.s32.totalorder %s36, 1
          %s585 = scalar_select %p584, %s36, 1
          %s586 = scalar_lea.vmem %s8, %s585
        $region52: #{residual_stack_forward.1} parent=39 // pred_fallthru
          _
        // Predicated region
        $region53: #{residual_stack_forward.1} parent=39 // pred_check
          %p587 = pneg %p264
        $region54: #{residual_stack_forward.1} parent=39 // pred_check_branch
          %589 = sbr.rel (%p587) target = $region56
        $region55: #{residual_stack_forward.1} parent=39 // pred_region
          %p590 = scmp.lt.s32.totalorder %s36, 1
          %s591 = scalar_select %p590, %s36, 1
          %s592 = smul.addr %s591, 72
          %s593 = smul.addr %s592, 4
          %s594 = scalar_lea.vmem %s9, %s593
        $region56: #{residual_stack_forward.1} parent=39 // pred_fallthru
          _
        // Predicated region
        $region57: #{residual_stack_forward.1} parent=39 // pred_check
          %p595 = pneg %p290
        $region58: #{residual_stack_forward.1} parent=39 // pred_check_branch
          %597 = sbr.rel (%p595) target = $region60
        $region59: #{residual_stack_forward.1} parent=39 // pred_region
          %p598 = scmp.lt.s32.totalorder %s36, 1
          %s599 = scalar_select %p598, %s36, 1
          %s600 = scalar_lea.vmem %s10, %s599
        $region60: #{residual_stack_forward.1} parent=39 // pred_fallthru
          _
        // Predicated region
        $region61: #{residual_stack_forward.1} parent=39 // pred_check
          %p601 = pneg %p316
        $region62: #{residual_stack_forward.1} parent=39 // pred_check_branch
          %603 = sbr.rel (%p601) target = $region64
        $region63: #{residual_stack_forward.1} parent=39 // pred_region
          %p604 = scmp.lt.s32.totalorder %s36, 1
          %s605 = scalar_select %p604, %s36, 1
          %s606 = scalar_lea.vmem %s11, %s605
        $region64: #{residual_stack_forward.1} parent=39 // pred_fallthru
          _
        // Predicated region
        $region65: #{residual_stack_forward.1} parent=39 // pred_check
          %p607 = pneg %p342
        $region66: #{residual_stack_forward.1} parent=39 // pred_check_branch
          %609 = sbr.rel (%p607) target = $region68
        $region67: #{residual_stack_forward.1} parent=39 // pred_region
          %p610 = scmp.lt.s32.totalorder %s36, 1
          %s611 = scalar_select %p610, %s36, 1
          %s612 = smul.addr %s611, 4
          %s613 = smul.addr %s612, 4
          %s614 = scalar_lea.vmem %s12, %s613
        $region68: #{residual_stack_forward.1} parent=39 // pred_fallthru
          _
        // Predicated region
        $region69: #{residual_stack_forward.1} parent=39 // pred_check
          %p615 = pneg %p368
        $region70: #{residual_stack_forward.1} parent=39 // pred_check_branch
          %617 = sbr.rel (%p615) target = $region72
        $region71: #{residual_stack_forward.1} parent=39 // pred_region
          %p618 = scmp.lt.s32.totalorder %s36, 1
          %s619 = scalar_select %p618, %s36, 1
          %s620 = scalar_lea.vmem %s13, %s619
        $region72: #{residual_stack_forward.1} parent=39 // pred_fallthru
          _
        // Predicated region
        $region73: #{residual_stack_forward.1} parent=39 // pred_check
          %p621 = pneg %p394
        $region74: #{residual_stack_forward.1} parent=39 // pred_check_branch
          %623 = sbr.rel (%p621) target = $region76
        $region75: #{residual_stack_forward.1} parent=39 // pred_region
          %p624 = scmp.lt.s32.totalorder %s36, 1
          %s625 = scalar_select %p624, %s36, 1
          %s626 = scalar_lea.vmem %s14, %s625
        $region76: #{residual_stack_forward.1} parent=39 // pred_fallthru
          _
        // Predicated region
        $region77: #{residual_stack_forward.1} parent=39 // pred_check
          %p627 = pneg %p420
        $region78: #{residual_stack_forward.1} parent=39 // pred_check_branch
          %629 = sbr.rel (%p627) target = $region80
        $region79: #{residual_stack_forward.1} parent=39 // pred_region
          %p630 = scmp.lt.s32.totalorder %s36, 1
          %s631 = scalar_select %p630, %s36, 1
          %s632 = smul.addr %s631, 16
          %s633 = smul.addr %s632, 4
          %s634 = scalar_lea.vmem %s15, %s633
        $region80: #{residual_stack_forward.1} parent=39 // pred_fallthru
          _
        // Predicated region
        $region81: #{residual_stack_forward.1} parent=39 // pred_check
          %p635 = pneg %p446
        $region82: #{residual_stack_forward.1} parent=39 // pred_check_branch
          %637 = sbr.rel (%p635) target = $region84
        $region83: #{residual_stack_forward.1} parent=39 // pred_region
          %p638 = scmp.lt.s32.totalorder %s36, 1
          %s639 = scalar_select %p638, %s36, 1
          %s640 = smul.addr %s639, 2
          %s641 = scalar_lea.vmem %s16, %s640
        $region84: #{residual_stack_forward.1} parent=39 // pred_fallthru
          _
        // Predicated region
        $region85: #{residual_stack_forward.1} parent=39 // pred_check
          %p642 = pneg %p472
        $region86: #{residual_stack_forward.1} parent=39 // pred_check_branch
          %644 = sbr.rel (%p642) target = $region88
        $region87: #{residual_stack_forward.1} parent=39 // pred_region
          %p645 = scmp.lt.s32.totalorder %s36, 1
          %s646 = scalar_select %p645, %s36, 1
          %s647 = smul.addr %s646, 8
          %s648 = smul.addr %s647, 4
          %s649 = scalar_lea.vmem %s17, %s648
        $region88: #{residual_stack_forward.1} parent=39 // pred_fallthru
          _
        // Predicated region
        $region89: #{residual_stack_forward.1} parent=39 // pred_check
          %p650 = pneg %p498
        $region90: #{residual_stack_forward.1} parent=39 // pred_check_branch
          %652 = sbr.rel (%p650) target = $region92
        $region91: #{residual_stack_forward.1} parent=39 // pred_region
          %p653 = scmp.lt.s32.totalorder %s36, 1
          %s654 = scalar_select %p653, %s36, 1
          %s655 = scalar_lea.vmem %s18, %s654
        $region92: #{residual_stack_forward.1} parent=39 // pred_fallthru
          _
      $region40: #{residual_stack_forward.1} parent=5 // pred_fallthru
        _
      %p656 = scmp.le.s32.totalorder 1, %s28
      %p657 = scmp.lt.s32.totalorder %s28, 5
      %p658 = pnand %p656, %p657
      %p659 = pneg %p658
      // Predicated region
      $region93: #{residual_stack_forward.1} parent=5 // pred_check
        _
      $region94: #{residual_stack_forward.1} parent=5 // pred_check_branch
        %661 = sbr.rel (%p658) target = $region96
      $region95: #{residual_stack_forward.1} parent=5 // pred_region
        %s662 = ssub.s32 %s28, 1
        %p663 = scmp.lt.s32.totalorder %s37, 1
        %s664 = scalar_select %p663, %s37, 1
        %s665 = smul.addr %s664, 8
        %s666 = smul.addr %s665, 8
        %s667 = scalar_lea.vmem %s0, %s666
        %p668 = pneg %p66
        %p669 = pneg %p63
        %p670 = pneg %p87
        %p671 = pneg %p84
        %p672 = pneg %p108
        %p673 = pneg %p105
        %p674 = pneg %p129
        %p675 = pneg %p126
        %p676 = pneg %p150
        %p677 = pneg %p147
        %p678 = pneg %p171
        %p679 = pneg %p168
        %p680 = pneg %p192
        %p681 = pneg %p189
        %p682 = scmp.lt.s32.totalorder %s38, 1
        %s683 = scalar_select %p682, %s38, 1
        %s684 = scalar_lea.vmem %s7, %s683
        %p685 = pneg %p218
        %p686 = pneg %p215
        %p687 = scmp.lt.s32.totalorder %s38, 1
        %s688 = scalar_select %p687, %s38, 1
        %s689 = scalar_lea.vmem %s8, %s688
        %p690 = pneg %p244
        %p691 = pneg %p241
        %p692 = scmp.lt.s32.totalorder %s38, 1
        %s693 = scalar_select %p692, %s38, 1
        %s694 = smul.addr %s693, 72
        %s695 = smul.addr %s694, 4
        %s696 = scalar_lea.vmem %s9, %s695
        %p697 = pneg %p270
        %p698 = pneg %p267
        %p699 = scmp.lt.s32.totalorder %s38, 1
        %s700 = scalar_select %p699, %s38, 1
        %s701 = scalar_lea.vmem %s10, %s700
        %p702 = pneg %p296
        %p703 = pneg %p293
        %p704 = scmp.lt.s32.totalorder %s38, 1
        %s705 = scalar_select %p704, %s38, 1
        %s706 = scalar_lea.vmem %s11, %s705
        %p707 = pneg %p322
        %p708 = pneg %p319
        %p709 = scmp.lt.s32.totalorder %s38, 1
        %s710 = scalar_select %p709, %s38, 1
        %s711 = smul.addr %s710, 4
        %s712 = smul.addr %s711, 4
        %s713 = scalar_lea.vmem %s12, %s712
        %p714 = pneg %p348
        %p715 = pneg %p345
        %p716 = scmp.lt.s32.totalorder %s38, 1
        %s717 = scalar_select %p716, %s38, 1
        %s718 = scalar_lea.vmem %s13, %s717
        %p719 = pneg %p374
        %p720 = pneg %p371
        %p721 = scmp.lt.s32.totalorder %s38, 1
        %s722 = scalar_select %p721, %s38, 1
        %s723 = scalar_lea.vmem %s14, %s722
        %p724 = pneg %p400
        %p725 = pneg %p397
        %p726 = scmp.lt.s32.totalorder %s38, 1
        %s727 = scalar_select %p726, %s38, 1
        %s728 = smul.addr %s727, 16
        %s729 = smul.addr %s728, 4
        %s730 = scalar_lea.vmem %s15, %s729
        %p731 = pneg %p426
        %p732 = pneg %p423
        %p733 = scmp.lt.s32.totalorder %s38, 1
        %s734 = scalar_select %p733, %s38, 1
        %s735 = smul.addr %s734, 2
        %s736 = scalar_lea.vmem %s16, %s735
        %p737 = pneg %p452
        %p738 = pneg %p449
        %p739 = scmp.lt.s32.totalorder %s38, 1
        %s740 = scalar_select %p739, %s38, 1
        %s741 = smul.addr %s740, 8
        %s742 = smul.addr %s741, 4
        %s743 = scalar_lea.vmem %s17, %s742
        %p744 = pneg %p478
        %p745 = pneg %p475
        %p746 = scmp.lt.s32.totalorder %s38, 1
        %s747 = scalar_select %p746, %s38, 1
        %s748 = scalar_lea.vmem %s18, %s747
        %p749 = pneg %p504
        %p750 = pneg %p501
        %p751 = pneg %p530
        %p752 = pneg %p527
        %s753 = sand.u32 %s517, 1
        %s754 = scalar_lea.sflag [#allocation3], %s753
        %s755 = sand.u32 %s517, 1
        %s756 = smul.addr %s755, 64
        %s757 = scalar_lea.vmem [#allocation2], %s756
        %p758 = scmp.lt.s32.totalorder %s37, 1
        %s759 = scalar_select %p758, %s37, 1
        %s760 = smul.addr %s759, 8
        %s761 = smul.addr %s760, 8
        %s762 = scalar_lea.vmem %s0, %s761
        %p763 = scmp.lt.s32.totalorder %s38, 1
        %s764 = scalar_select %p763, %s38, 1
        %s765 = scalar_lea.vmem %s7, %s764
        %p766 = scmp.lt.s32.totalorder %s38, 1
        %s767 = scalar_select %p766, %s38, 1
        %s768 = scalar_lea.vmem %s8, %s767
        %p769 = scmp.lt.s32.totalorder %s38, 1
        %s770 = scalar_select %p769, %s38, 1
        %s771 = smul.addr %s770, 72
        %s772 = smul.addr %s771, 4
        %s773 = scalar_lea.vmem %s9, %s772
        %p774 = scmp.lt.s32.totalorder %s38, 1
        %s775 = scalar_select %p774, %s38, 1
        %s776 = scalar_lea.vmem %s10, %s775
        %p777 = scmp.lt.s32.totalorder %s38, 1
        %s778 = scalar_select %p777, %s38, 1
        %s779 = scalar_lea.vmem %s11, %s778
        %p780 = scmp.lt.s32.totalorder %s38, 1
        %s781 = scalar_select %p780, %s38, 1
        %s782 = smul.addr %s781, 4
        %s783 = smul.addr %s782, 4
        %s784 = scalar_lea.vmem %s12, %s783
        %p785 = scmp.lt.s32.totalorder %s38, 1
        %s786 = scalar_select %p785, %s38, 1
        %s787 = scalar_lea.vmem %s13, %s786
        %p788 = scmp.lt.s32.totalorder %s38, 1
        %s789 = scalar_select %p788, %s38, 1
        %s790 = scalar_lea.vmem %s14, %s789
        %p791 = scmp.lt.s32.totalorder %s38, 1
        %s792 = scalar_select %p791, %s38, 1
        %s793 = smul.addr %s792, 16
        %s794 = smul.addr %s793, 4
        %s795 = scalar_lea.vmem %s15, %s794
        %p796 = scmp.lt.s32.totalorder %s38, 1
        %s797 = scalar_select %p796, %s38, 1
        %s798 = smul.addr %s797, 2
        %s799 = scalar_lea.vmem %s16, %s798
        %p800 = scmp.lt.s32.totalorder %s38, 1
        %s801 = scalar_select %p800, %s38, 1
        %s802 = smul.addr %s801, 8
        %s803 = smul.addr %s802, 4
        %s804 = scalar_lea.vmem %s17, %s803
        %p805 = scmp.lt.s32.totalorder %s38, 1
        %s806 = scalar_select %p805, %s38, 1
        %s807 = scalar_lea.vmem %s18, %s806
        %p809 = scmp.eq.s32.totalorder %s38, 0
        // Predicated region
        $region97: #{residual_stack_forward.1} parent=95 // pred_check
          %p810 = pneg %p809
        $region98: #{residual_stack_forward.1} parent=95 // pred_check_branch
          %812 = sbr.rel (%p810) target = $region100
        $region99: #{residual_stack_forward.1} parent=95 // pred_region
          %v813 = vld [vmem:[%s762] sm:$0xff]
          %v814 = vld [vmem:[%s762 + $0x8] sm:$0xff]
          %v815 = vld [vmem:[%s762 + $0x10] sm:$0xff]
          %v816 = vld [vmem:[%s762 + $0x18] sm:$0xff]
          %v817 = vld [vmem:[%s762 + $0x20] sm:$0xff]
          %v818 = vld [vmem:[%s762 + $0x28] sm:$0xff]
          %v819 = vld [vmem:[%s762 + $0x30] sm:$0xff]
          %v820 = vld [vmem:[%s762 + $0x38] sm:$0xff]
          %vm821 = vcmask 523264
          %822 = vst.msk [vmem:[%s757] sm:$0xff] %vm821, %v813
          %823 = vst.msk [vmem:[%s757 + $0x8] sm:$0xff] %vm821, %v814
          %824 = vst.msk [vmem:[%s757 + $0x10] sm:$0xff] %vm821, %v815
          %825 = vst.msk [vmem:[%s757 + $0x18] sm:$0xff] %vm821, %v816
          %826 = vst.msk [vmem:[%s757 + $0x20] sm:$0xff] %vm821, %v817
          %827 = vst.msk [vmem:[%s757 + $0x28] sm:$0xff] %vm821, %v818
          %828 = vst.msk [vmem:[%s757 + $0x30] sm:$0xff] %vm821, %v819
          %829 = vst.msk [vmem:[%s757 + $0x38] sm:$0xff] %vm821, %v820
        $region100: #{residual_stack_forward.1} parent=95 // pred_fallthru
          _
        %v830 = vld [vmem:[%s757] sm:$0xff]
        %v831 = vld [vmem:[%s757 + $0x8] sm:$0xff]
        %v832 = vld [vmem:[%s757 + $0x10] sm:$0xff]
        %v833 = vld [vmem:[%s757 + $0x18] sm:$0xff]
        %v834 = vld [vmem:[%s757 + $0x20] sm:$0xff]
        %v835 = vld [vmem:[%s757 + $0x28] sm:$0xff]
        %v836 = vld [vmem:[%s757 + $0x30] sm:$0xff]
        %v837 = vld [vmem:[%s757 + $0x38] sm:$0xff]
        %v838 = vld [vmem:[%s1] sm:$0xff]
        %v839 = vld [vmem:[%s1 + $0x8] sm:$0xff]
        %v840 = vld [vmem:[%s1 + $0x10] sm:$0xff]
        %v841 = vld [vmem:[%s1 + $0x18] sm:$0xff]
        %v842 = vld [vmem:[%s1 + $0x20] sm:$0xff]
        %v843 = vld [vmem:[%s1 + $0x28] sm:$0xff]
        %v844 = vld [vmem:[%s1 + $0x30] sm:$0xff]
        %v845 = vld [vmem:[%s1 + $0x38] sm:$0xff]
        %v846 = vld [vmem:[%s2] sm:$0xff]
        %v847 = vld [vmem:[%s2 + $0x8] sm:$0xff]
        %v848 = vld [vmem:[%s2 + $0x10] sm:$0xff]
        %v849 = vld [vmem:[%s2 + $0x18] sm:$0xff]
        %v850 = vld [vmem:[%s3] sm:$0xff]
        %v851 = vld [vmem:[%s3 + $0x8] sm:$0xff]
        %v852 = vld [vmem:[%s3 + $0x10] sm:$0xff]
        %v853 = vld [vmem:[%s3 + $0x18] sm:$0xff]
        %v854 = vld [vmem:[%s4] sm:$0xff]
        %v855 = vld [vmem:[%s4 + $0x8] sm:$0xff]
        %v856 = vld [vmem:[%s4 + $0x10] sm:$0xff]
        %v857 = vld [vmem:[%s4 + $0x18] sm:$0xff]
        %v858 = vld [vmem:[%s5] sm:$0xff]
        %v859 = vld [vmem:[%s5 + $0x8] sm:$0xff]
        %v860 = vld [vmem:[%s5 + $0x10] sm:$0xff]
        %v861 = vld [vmem:[%s5 + $0x18] sm:$0xff]
        %v862 = vld [vmem:[%s5 + $0x20] sm:$0xff]
        %v863 = vld [vmem:[%s5 + $0x28] sm:$0xff]
        %v864 = vld [vmem:[%s5 + $0x30] sm:$0xff]
        %v865 = vld [vmem:[%s5 + $0x38] sm:$0xff]
        %v866 = vld [vmem:[%s765] sm:$0x1]
        %v867 = vld [vmem:[%s768] sm:$0x1]
        %vm868 = vcmask 523264
        %v869 = vsel %vm868, %v830, 0.0
        %v870 = vsel %vm868, %v831, 0.0
        %v871 = vadd.f32 %v869, %v870
        %v872 = vsel %vm868, %v832, 0.0
        %v873 = vadd.f32 %v871, %v872
        %v874 = vsel %vm868, %v833, 0.0
        %v875 = vadd.f32 %v873, %v874
        %v876 = vsel %vm868, %v834, 0.0
        %v877 = vadd.f32 %v875, %v876
        %v878 = vsel %vm868, %v835, 0.0
        %v879 = vadd.f32 %v877, %v878
        %v880 = vsel %vm868, %v836, 0.0
        %v881 = vadd.f32 %v879, %v880
        %v882 = vsel %vm868, %v837, 0.0
        %v883 = vadd.f32 %v881, %v882
        %v884 = vrot.slane %v883, 4
        %v885 = vadd.f32 %v883, %v884
        %v886 = vrot.slane %v885, 2
        %v887 = vadd.f32 %v885, %v886
        %v888 = vrot.slane %v887, 1
        %v889 = vadd.f32 %v887, %v888
        %v891 = vsel %vm868, %v889, 0
        %893 = vmatpush.msra.mxu0 0.0
        %894 = vmatpush.msra.mxu0 0.0
        %895 = vmatpush.msra.mxu0 0.0
        %896 = vmatpush.msra.mxu0 0.0
        %897 = vmatpush.msra.mxu0 0.0
        %898 = vmatpush.msra.mxu0 0.0
        %899 = vmatpush.msra.mxu0 0.0
        %900 = vmatpush.msra.mxu0 0.0
        %901 = vmatpush.msra.mxu0 %v845
        %902 = vmatpush.msra.mxu0 %v844
        %903 = vmatpush.msra.mxu0 %v843
        %904 = vmatpush.msra.mxu0 %v842
        %905 = vmatpush.msra.mxu0 %v841
        %906 = vmatpush.msra.mxu0 %v840
        %907 = vmatpush.msra.mxu0 %v839
        %908 = vmatpush.msra.mxu0 %v838
        %909 = vmatmul.f32.gmra.mxu0 %v891
        %v910 = vpop.f32.mrf.mxu0
        %v911 = vadd.f32 0.0, %v910
        %912 = vdwg.mxu0
        %v913 = vmul.f32 %v911, 0.0078125
        %vm914 = vcmask 261120
        %v916 = vsel %vm914, %v913, 0
        %918 = vmatpush.msra.mxu0 0.0
        %919 = vmatpush.msra.mxu0 0.0
        %920 = vmatpush.msra.mxu0 0.0
        %921 = vmatpush.msra.mxu0 0.0
        %922 = vmatpush.msra.mxu0 0.0
        %923 = vmatpush.msra.mxu0 0.0
        %924 = vmatpush.msra.mxu0 0.0
        %925 = vmatpush.msra.mxu0 0.0
        %926 = vmatpush.msra.mxu0 0.0
        %927 = vmatpush.msra.mxu0 0.0
        %928 = vmatpush.msra.mxu0 0.0
        %929 = vmatpush.msra.mxu0 0.0
        %930 = vmatpush.msra.mxu0 %v849
        %931 = vmatpush.msra.mxu0 %v848
        %932 = vmatpush.msra.mxu0 %v847
        %933 = vmatpush.msra.mxu0 %v846
        %934 = vmatmul.f32.gmra.mxu0 %v916
        %v935 = vpop.f32.mrf.mxu0
        %v936 = vadd.f32 0.0, %v935
        %937 = vdwg.mxu0
        %v938 = vperm.slane %v936, 0
        %v939 = vsub.f32 %v830, %v938
        %v940 = vsub.f32 %v831, %v938
        %v941 = vsub.f32 %v832, %v938
        %v942 = vsub.f32 %v833, %v938
        %v943 = vsub.f32 %v834, %v938
        %v944 = vsub.f32 %v835, %v938
        %v945 = vsub.f32 %v836, %v938
        %v946 = vsub.f32 %v837, %v938
        %v947 = vmul.f32 %v939, %v939
        %v948 = vmul.f32 %v940, %v940
        %v949 = vmul.f32 %v941, %v941
        %v950 = vmul.f32 %v942, %v942
        %v951 = vmul.f32 %v943, %v943
        %v952 = vmul.f32 %v944, %v944
        %v953 = vmul.f32 %v945, %v945
        %v954 = vmul.f32 %v946, %v946
        %v955 = vsel %vm868, %v947, 0.0
        %v956 = vsel %vm868, %v948, 0.0
        %v957 = vadd.f32 %v955, %v956
        %v958 = vsel %vm868, %v949, 0.0
        %v959 = vadd.f32 %v957, %v958
        %v960 = vsel %vm868, %v950, 0.0
        %v961 = vadd.f32 %v959, %v960
        %v962 = vsel %vm868, %v951, 0.0
        %v963 = vadd.f32 %v961, %v962
        %v964 = vsel %vm868, %v952, 0.0
        %v965 = vadd.f32 %v963, %v964
        %v966 = vsel %vm868, %v953, 0.0
        %v967 = vadd.f32 %v965, %v966
        %v968 = vsel %vm868, %v954, 0.0
        %v969 = vadd.f32 %v967, %v968
        %v970 = vrot.slane %v969, 4
        %v971 = vadd.f32 %v969, %v970
        %v972 = vrot.slane %v971, 2
        %v973 = vadd.f32 %v971, %v972
        %v974 = vrot.slane %v973, 1
        %v975 = vadd.f32 %v973, %v974
        %v977 = vsel %vm868, %v975, 0
        %979 = vmatpush.msra.mxu0 0.0
        %980 = vmatpush.msra.mxu0 0.0
        %981 = vmatpush.msra.mxu0 0.0
        %982 = vmatpush.msra.mxu0 0.0
        %983 = vmatpush.msra.mxu0 0.0
        %984 = vmatpush.msra.mxu0 0.0
        %985 = vmatpush.msra.mxu0 0.0
        %986 = vmatpush.msra.mxu0 0.0
        %987 = vmatpush.msra.mxu0 %v845
        %988 = vmatpush.msra.mxu0 %v844
        %989 = vmatpush.msra.mxu0 %v843
        %990 = vmatpush.msra.mxu0 %v842
        %991 = vmatpush.msra.mxu0 %v841
        %992 = vmatpush.msra.mxu0 %v840
        %993 = vmatpush.msra.mxu0 %v839
        %994 = vmatpush.msra.mxu0 %v838
        %995 = vmatmul.f32.gmra.mxu0 %v977
        %v996 = vpop.f32.mrf.mxu0
        %v997 = vadd.f32 0.0, %v996
        %998 = vdwg.mxu0
        %v999 = vmul.f32 %v997, 0.0078125
        %v1000 = vadd.f32 %v999, 1e-05
        %v1001 = vrsqrt.pop %v1000
        %v1002 = vmul.f32 %v1001, %v1000
        %v1003 = vmul.f32 %v1002, %v1001
        %v1004 = vmul.f32 0.5, %v1003
        %v1005 = vsub.f32 1.5, %v1004
        %v1006 = vmul.f32 %v1001, %v1005
        %vm1007 = vweird.f32 %v1000
        %vm1008 = vweird.f32 %v1001
        %vm1009 = vmor %vm1007, %vm1008
        %v1010 = vsel %vm1009, %v1001, %v1006
        %v1012 = vsel %vm914, %v1010, 0
        %1014 = vmatpush.msra.mxu0 0.0
        %1015 = vmatpush.msra.mxu0 0.0
        %1016 = vmatpush.msra.mxu0 0.0
        %1017 = vmatpush.msra.mxu0 0.0
        %1018 = vmatpush.msra.mxu0 0.0
        %1019 = vmatpush.msra.mxu0 0.0
        %1020 = vmatpush.msra.mxu0 0.0
        %1021 = vmatpush.msra.mxu0 0.0
        %1022 = vmatpush.msra.mxu0 0.0
        %1023 = vmatpush.msra.mxu0 0.0
        %1024 = vmatpush.msra.mxu0 0.0
        %1025 = vmatpush.msra.mxu0 0.0
        %1026 = vmatpush.msra.mxu0 %v849
        %1027 = vmatpush.msra.mxu0 %v848
        %1028 = vmatpush.msra.mxu0 %v847
        %1029 = vmatpush.msra.mxu0 %v846
        %1030 = vmatmul.f32.gmra.mxu0 %v1012
        %v1031 = vpop.f32.mrf.mxu0
        %v1032 = vadd.f32 0.0, %v1031
        %1033 = vdwg.mxu0
        %v1034 = vperm.slane %v1032, 0
        %v1035 = vmul.f32 %v939, %v1034
        %v1036 = vmul.f32 %v940, %v1034
        %v1037 = vmul.f32 %v941, %v1034
        %v1038 = vmul.f32 %v942, %v1034
        %v1039 = vmul.f32 %v943, %v1034
        %v1040 = vmul.f32 %v944, %v1034
        %v1041 = vmul.f32 %v945, %v1034
        %v1042 = vmul.f32 %v946, %v1034
        %v1044 = vperm.slane %v866, 0
        %v1046 = vmul.f32 %v1035, %v1044
        %v1047 = vmul.f32 %v1036, %v1044
        %v1048 = vmul.f32 %v1037, %v1044
        %v1049 = vmul.f32 %v1038, %v1044
        %v1050 = vmul.f32 %v1039, %v1044
        %v1051 = vmul.f32 %v1040, %v1044
        %v1052 = vmul.f32 %v1041, %v1044
        %v1053 = vmul.f32 %v1042, %v1044
        %v1055 = vperm.slane %v867, 0
        %v1057 = vadd.f32 %v1046, %v1055
        %v1058 = vadd.f32 %v1047, %v1055
        %v1059 = vadd.f32 %v1048, %v1055
        %v1060 = vadd.f32 %v1049, %v1055
        %v1061 = vadd.f32 %v1050, %v1055
        %v1062 = vadd.f32 %v1051, %v1055
        %v1063 = vadd.f32 %v1052, %v1055
        %v1064 = vadd.f32 %v1053, %v1055
        %v1065 = vadd.f32 %v1057, 3.0
        %v1066 = vadd.f32 %v1058, 3.0
        %v1067 = vadd.f32 %v1059, 3.0
        %v1068 = vadd.f32 %v1060, 3.0
        %v1069 = vadd.f32 %v1061, 3.0
        %v1070 = vadd.f32 %v1062, 3.0
        %v1071 = vadd.f32 %v1063, 3.0
        %v1072 = vadd.f32 %v1064, 3.0
        %v1073 = vmax.f32 %v1065, 0.0
        %v1074 = vmax.f32 %v1066, 0.0
        %v1075 = vmax.f32 %v1067, 0.0
        %v1076 = vmax.f32 %v1068, 0.0
        %v1077 = vmax.f32 %v1069, 0.0
        %v1078 = vmax.f32 %v1070, 0.0
        %v1079 = vmax.f32 %v1071, 0.0
        %v1080 = vmax.f32 %v1072, 0.0
        %v1081 = vmin.f32 %v1073, 6.0
        %v1082 = vmin.f32 %v1074, 6.0
        %v1083 = vmin.f32 %v1075, 6.0
        %v1084 = vmin.f32 %v1076, 6.0
        %v1085 = vmin.f32 %v1077, 6.0
        %v1086 = vmin.f32 %v1078, 6.0
        %v1087 = vmin.f32 %v1079, 6.0
        %v1088 = vmin.f32 %v1080, 6.0
        %v1089 = vmul.f32 %v1057, %v1081
        %v1090 = vmul.f32 %v1058, %v1082
        %v1091 = vmul.f32 %v1059, %v1083
        %v1092 = vmul.f32 %v1060, %v1084
        %v1093 = vmul.f32 %v1061, %v1085
        %v1094 = vmul.f32 %v1062, %v1086
        %v1095 = vmul.f32 %v1063, %v1087
        %v1096 = vmul.f32 %v1064, %v1088
        %v1097 = vmul.f32 %v1089, 0.16666667
        %v1098 = vmul.f32 %v1090, 0.16666667
        %v1099 = vmul.f32 %v1091, 0.16666667
        %v1100 = vmul.f32 %v1092, 0.16666667
        %v1101 = vmul.f32 %v1093, 0.16666667
        %v1102 = vmul.f32 %v1094, 0.16666667
        %v1103 = vmul.f32 %v1095, 0.16666667
        %v1104 = vmul.f32 %v1096, 0.16666667
        %v1105 = vrot.slane %v1097, 7
        %v1106 = vrot.slane %v1098, 7
        %v1107 = vrot.slane %v1099, 7
        %v1108 = vrot.slane %v1100, 7
        %v1109 = vrot.slane %v1101, 7
        %v1110 = vrot.slane %v1102, 7
        %v1111 = vrot.slane %v1103, 7
        %v1112 = vrot.slane %v1104, 7
        %v1113 = vlaneseq
        %v1114 = vshrl.u32 %v1113, 7
        %vm1115 = vcmp.lt.s32.totalorder %v1114, 1
        %v1116 = vsel %vm1115, %v1111, %v1112
        %v1117 = vsel %vm1115, %v1110, %v1111
        %v1118 = vsel %vm1115, %v1109, %v1110
        %v1119 = vsel %vm1115, %v1108, %v1109
        %v1120 = vsel %vm1115, %v1107, %v1108
        %v1121 = vsel %vm1115, %v1106, %v1107
        %v1122 = vsel %vm1115, %v1105, %v1106
        %v1123 = vsel %vm1115, %v1112, %v1105
        %v1124 = vld [vmem:[%s6] sm:$0xff]
        %v1125 = vld [vmem:[%s6 + $0x8] sm:$0xff]
        %v1126 = vld [vmem:[%s6 + $0x10] sm:$0xff]
        %v1127 = vld [vmem:[%s6 + $0x18] sm:$0xff]
        %v1128 = vld [vmem:[%s6 + $0x20] sm:$0xff]
        %v1129 = vld [vmem:[%s6 + $0x28] sm:$0xff]
        %v1130 = vld [vmem:[%s6 + $0x30] sm:$0xff]
        %v1131 = vld [vmem:[%s6 + $0x38] sm:$0xff]
        %1133 = vset.pattern.permute.xlu0 0
        %1134 = vperm.xlu0 %1133, %v1124
        %v1135 = vpop.permute.xlu0 %1134
        %1138 = vset.pattern.permute.xlu0 0
        %1139 = vperm.xlu0 %1138, %v1125
        %v1140 = vpop.permute.xlu0 %1139
        %1143 = vset.pattern.permute.xlu0 0
        %1144 = vperm.xlu0 %1143, %v1126
        %v1145 = vpop.permute.xlu0 %1144
        %1148 = vset.pattern.permute.xlu0 0
        %1149 = vperm.xlu0 %1148, %v1127
        %v1150 = vpop.permute.xlu0 %1149
        %1153 = vset.pattern.permute.xlu0 0
        %1154 = vperm.xlu0 %1153, %v1128
        %v1155 = vpop.permute.xlu0 %1154
        %1158 = vset.pattern.permute.xlu0 0
        %1159 = vperm.xlu0 %1158, %v1129
        %v1160 = vpop.permute.xlu0 %1159
        %1163 = vset.pattern.permute.xlu0 0
        %1164 = vperm.xlu0 %1163, %v1130
        %v1165 = vpop.permute.xlu0 %1164
        %1168 = vset.pattern.permute.xlu0 0
        %1169 = vperm.xlu0 %1168, %v1131
        %v1170 = vpop.permute.xlu0 %1169
        %v1172 = vmul.f32 %v1116, %v1135
        %v1173 = vmul.f32 %v1123, %v1140
        %v1174 = vmul.f32 %v1122, %v1145
        %v1175 = vmul.f32 %v1121, %v1150
        %v1176 = vmul.f32 %v1120, %v1155
        %v1177 = vmul.f32 %v1119, %v1160
        %v1178 = vmul.f32 %v1118, %v1165
        %v1179 = vmul.f32 %v1117, %v1170
        %v1180 = vld [vmem:[%s773] sm:$0xf]
        %v1181 = vld [vmem:[%s773 + $0x4] sm:$0xf]
        %v1182 = vld [vmem:[%s773 + $0x8] sm:$0xf]
        %v1183 = vld [vmem:[%s773 + $0xc] sm:$0xf]
        %v1184 = vld [vmem:[%s773 + $0x10] sm:$0xf]
        %v1185 = vld [vmem:[%s773 + $0x14] sm:$0xf]
        %v1186 = vld [vmem:[%s773 + $0x18] sm:$0xf]
        %v1187 = vld [vmem:[%s773 + $0x1c] sm:$0xf]
        %v1188 = vpack.c.bf16 %v1173, %v1172
        %v1189 = vpack.c.bf16 %v1175, %v1174
        %v1190 = vpack.c.bf16 %v1177, %v1176
        %v1191 = vpack.c.bf16 %v1179, %v1178
        %s1192 = scalar_lea.vmem %s6, 64
        %v1193 = vld [vmem:[%s1192] sm:$0xff]
        %v1194 = vld [vmem:[%s1192 + $0x8] sm:$0xff]
        %v1195 = vld [vmem:[%s1192 + $0x10] sm:$0xff]
        %v1196 = vld [vmem:[%s1192 + $0x18] sm:$0xff]
        %v1197 = vld [vmem:[%s1192 + $0x20] sm:$0xff]
        %v1198 = vld [vmem:[%s1192 + $0x28] sm:$0xff]
        %v1199 = vld [vmem:[%s1192 + $0x30] sm:$0xff]
        %v1200 = vld [vmem:[%s1192 + $0x38] sm:$0xff]
        %1202 = vset.pattern.permute.xlu0 0
        %1203 = vperm.xlu0 %1202, %v1193
        %v1204 = vpop.permute.xlu0 %1203
        %1207 = vset.pattern.permute.xlu0 0
        %1208 = vperm.xlu0 %1207, %v1194
        %v1209 = vpop.permute.xlu0 %1208
        %1212 = vset.pattern.permute.xlu0 0
        %1213 = vperm.xlu0 %1212, %v1195
        %v1214 = vpop.permute.xlu0 %1213
        %1217 = vset.pattern.permute.xlu0 0
        %1218 = vperm.xlu0 %1217, %v1196
        %v1219 = vpop.permute.xlu0 %1218
        %1222 = vset.pattern.permute.xlu0 0
        %1223 = vperm.xlu0 %1222, %v1197
        %v1224 = vpop.permute.xlu0 %1223
        %1227 = vset.pattern.permute.xlu0 0
        %1228 = vperm.xlu0 %1227, %v1198
        %v1229 = vpop.permute.xlu0 %1228
        %1232 = vset.pattern.permute.xlu0 0
        %1233 = vperm.xlu0 %1232, %v1199
        %v1234 = vpop.permute.xlu0 %1233
        %1237 = vset.pattern.permute.xlu0 0
        %1238 = vperm.xlu0 %1237, %v1200
        %v1239 = vpop.permute.xlu0 %1238
        %v1241 = vmul.f32 %v1104, %v1204
        %v1242 = vmul.f32 %v1097, %v1209
        %v1243 = vmul.f32 %v1098, %v1214
        %v1244 = vmul.f32 %v1099, %v1219
        %v1245 = vmul.f32 %v1100, %v1224
        %v1246 = vmul.f32 %v1101, %v1229
        %v1247 = vmul.f32 %v1102, %v1234
        %v1248 = vmul.f32 %v1103, %v1239
        %s1249 = scalar_lea.vmem %s773, 32
        %v1250 = vld [vmem:[%s1249] sm:$0xf]
        %v1251 = vld [vmem:[%s1249 + $0x4] sm:$0xf]
        %v1252 = vld [vmem:[%s1249 + $0x8] sm:$0xf]
        %v1253 = vld [vmem:[%s1249 + $0xc] sm:$0xf]
        %v1254 = vld [vmem:[%s1249 + $0x10] sm:$0xf]
        %v1255 = vld [vmem:[%s1249 + $0x14] sm:$0xf]
        %v1256 = vld [vmem:[%s1249 + $0x18] sm:$0xf]
        %v1257 = vld [vmem:[%s1249 + $0x1c] sm:$0xf]
        %v1258 = vpack.c.bf16 %v1242, %v1241
        %v1259 = vpack.c.bf16 %v1244, %v1243
        %v1260 = vpack.c.bf16 %v1246, %v1245
        %v1261 = vpack.c.bf16 %v1248, %v1247
        %v1270 = vunpack.c.l.b16 %v1250
        %v1271 = vunpack.c.l.b16 %v1251
        %v1272 = vunpack.c.l.b16 %v1252
        %v1273 = vunpack.c.l.b16 %v1253
        %v1274 = vunpack.c.l.b16 %v1254
        %v1275 = vunpack.c.l.b16 %v1255
        %v1276 = vunpack.c.l.b16 %v1256
        %v1277 = vunpack.c.l.b16 %v1257
        %v1278 = vpack.c.b16 %v1271, %v1270
        %v1279 = vpack.c.b16 %v1273, %v1272
        %v1280 = vpack.c.b16 %v1275, %v1274
        %v1281 = vpack.c.b16 %v1277, %v1276
        %v1287 = vsel %vm868, %v1258, 0
        %v1290 = vsel %vm868, %v1259, 0
        %v1293 = vsel %vm868, %v1260, 0
        %v1296 = vsel %vm868, %v1261, 0
        %1298 = vmatpush.bf16.msra.mxu0 0
        %1299 = vmatpush.bf16.msra.mxu0 0
        %1300 = vmatpush.bf16.msra.mxu0 0
        %1301 = vmatpush.bf16.msra.mxu0 0
        %1302 = vmatpush.bf16.msra.mxu0 %v1281
        %1303 = vmatpush.bf16.msra.mxu0 %v1280
        %1304 = vmatpush.bf16.msra.mxu0 %v1279
        %1305 = vmatpush.bf16.msra.mxu0 %v1278
        %1306 = vmatmul.bf16.gmra.mxu0 %v1287
        %v1307 = vpop.f32.mrf.mxu0
        %v1308 = vadd.f32 0.0, %v1307
        %v1309 = vpop.f32.mrf.mxu0
        %v1310 = vadd.f32 0.0, %v1309
        %1311 = vmatmul.bf16.gmra.mxu0 %v1290
        %v1312 = vpop.f32.mrf.mxu0
        %v1313 = vadd.f32 0.0, %v1312
        %v1314 = vpop.f32.mrf.mxu0
        %v1315 = vadd.f32 0.0, %v1314
        %1316 = vmatmul.bf16.gmra.mxu0 %v1293
        %v1317 = vpop.f32.mrf.mxu0
        %v1318 = vadd.f32 0.0, %v1317
        %v1319 = vpop.f32.mrf.mxu0
        %v1320 = vadd.f32 0.0, %v1319
        %1321 = vmatmul.bf16.gmra.mxu0 %v1296
        %v1322 = vpop.f32.mrf.mxu0
        %v1323 = vadd.f32 0.0, %v1322
        %v1324 = vpop.f32.mrf.mxu0
        %v1325 = vadd.f32 0.0, %v1324
        %1326 = vdwg.mxu0
        %v1335 = vunpack.c.l.b16 %v1180
        %v1336 = vunpack.c.l.b16 %v1181
        %v1337 = vunpack.c.l.b16 %v1182
        %v1338 = vunpack.c.l.b16 %v1183
        %v1339 = vunpack.c.l.b16 %v1184
        %v1340 = vunpack.c.l.b16 %v1185
        %v1341 = vunpack.c.l.b16 %v1186
        %v1342 = vunpack.c.l.b16 %v1187
        %v1343 = vpack.c.b16 %v1336, %v1335
        %v1344 = vpack.c.b16 %v1338, %v1337
        %v1345 = vpack.c.b16 %v1340, %v1339
        %v1346 = vpack.c.b16 %v1342, %v1341
        %v1352 = vsel %vm868, %v1188, 0
        %v1355 = vsel %vm868, %v1189, 0
        %v1358 = vsel %vm868, %v1190, 0
        %v1361 = vsel %vm868, %v1191, 0
        %1363 = vmatpush.bf16.msra.mxu0 0
        %1364 = vmatpush.bf16.msra.mxu0 0
        %1365 = vmatpush.bf16.msra.mxu0 0
        %1366 = vmatpush.bf16.msra.mxu0 0
        %1367 = vmatpush.bf16.msra.mxu0 %v1346
        %1368 = vmatpush.bf16.msra.mxu0 %v1345
        %1369 = vmatpush.bf16.msra.mxu0 %v1344
        %1370 = vmatpush.bf16.msra.mxu0 %v1343
        %1371 = vmatmul.bf16.gmra.mxu0 %v1352
        %v1372 = vpop.f32.mrf.mxu0
        %v1373 = vadd.f32 %v1308, %v1372
        %v1374 = vpop.f32.mrf.mxu0
        %v1375 = vadd.f32 %v1310, %v1374
        %1376 = vmatmul.bf16.gmra.mxu0 %v1355
        %v1377 = vpop.f32.mrf.mxu0
        %v1378 = vadd.f32 %v1313, %v1377
        %v1379 = vpop.f32.mrf.mxu0
        %v1380 = vadd.f32 %v1315, %v1379
        %1381 = vmatmul.bf16.gmra.mxu0 %v1358
        %v1382 = vpop.f32.mrf.mxu0
        %v1383 = vadd.f32 %v1318, %v1382
        %v1384 = vpop.f32.mrf.mxu0
        %v1385 = vadd.f32 %v1320, %v1384
        %1386 = vmatmul.bf16.gmra.mxu0 %v1361
        %v1387 = vpop.f32.mrf.mxu0
        %v1388 = vadd.f32 %v1323, %v1387
        %v1389 = vpop.f32.mrf.mxu0
        %v1390 = vadd.f32 %v1325, %v1389
        %1391 = vdwg.mxu0
        %v1392 = vrot.slane %v1097, 1
        %v1393 = vrot.slane %v1098, 1
        %v1394 = vrot.slane %v1099, 1
        %v1395 = vrot.slane %v1100, 1
        %v1396 = vrot.slane %v1101, 1
        %v1397 = vrot.slane %v1102, 1
        %v1398 = vrot.slane %v1103, 1
        %v1399 = vrot.slane %v1104, 1
        %vm1400 = vcmp.lt.s32.totalorder %v1114, 7
        %v1401 = vsel %vm1400, %v1398, %v1399
        %v1402 = vsel %vm1400, %v1397, %v1398
        %v1403 = vsel %vm1400, %v1396, %v1397
        %v1404 = vsel %vm1400, %v1395, %v1396
        %v1405 = vsel %vm1400, %v1394, %v1395
        %v1406 = vsel %vm1400, %v1393, %v1394
        %v1407 = vsel %vm1400, %v1392, %v1393
        %v1408 = vsel %vm1400, %v1399, %v1392
        %s1409 = scalar_lea.vmem %s6, 128
        %v1410 = vld [vmem:[%s1409] sm:$0xff]
        %v1411 = vld [vmem:[%s1409 + $0x8] sm:$0xff]
        %v1412 = vld [vmem:[%s1409 + $0x10] sm:$0xff]
        %v1413 = vld [vmem:[%s1409 + $0x18] sm:$0xff]
        %v1414 = vld [vmem:[%s1409 + $0x20] sm:$0xff]
        %v1415 = vld [vmem:[%s1409 + $0x28] sm:$0xff]
        %v1416 = vld [vmem:[%s1409 + $0x30] sm:$0xff]
        %v1417 = vld [vmem:[%s1409 + $0x38] sm:$0xff]
        %1419 = vset.pattern.permute.xlu0 0
        %1420 = vperm.xlu0 %1419, %v1410
        %v1421 = vpop.permute.xlu0 %1420
        %1424 = vset.pattern.permute.xlu0 0
        %1425 = vperm.xlu0 %1424, %v1411
        %v1426 = vpop.permute.xlu0 %1425
        %1429 = vset.pattern.permute.xlu0 0
        %1430 = vperm.xlu0 %1429, %v1412
        %v1431 = vpop.permute.xlu0 %1430
        %1434 = vset.pattern.permute.xlu0 0
        %1435 = vperm.xlu0 %1434, %v1413
        %v1436 = vpop.permute.xlu0 %1435
        %1439 = vset.pattern.permute.xlu0 0
        %1440 = vperm.xlu0 %1439, %v1414
        %v1441 = vpop.permute.xlu0 %1440
        %1444 = vset.pattern.permute.xlu0 0
        %1445 = vperm.xlu0 %1444, %v1415
        %v1446 = vpop.permute.xlu0 %1445
        %1449 = vset.pattern.permute.xlu0 0
        %1450 = vperm.xlu0 %1449, %v1416
        %v1451 = vpop.permute.xlu0 %1450
        %1454 = vset.pattern.permute.xlu0 0
        %1455 = vperm.xlu0 %1454, %v1417
        %v1456 = vpop.permute.xlu0 %1455
        %v1458 = vmul.f32 %v1408, %v1421
        %v1459 = vmul.f32 %v1407, %v1426
        %v1460 = vmul.f32 %v1406, %v1431
        %v1461 = vmul.f32 %v1405, %v1436
        %v1462 = vmul.f32 %v1404, %v1441
        %v1463 = vmul.f32 %v1403, %v1446
        %v1464 = vmul.f32 %v1402, %v1451
        %v1465 = vmul.f32 %v1401, %v1456
        %s1466 = scalar_lea.vmem %s773, 64
        %v1467 = vld [vmem:[%s1466] sm:$0xf]
        %v1468 = vld [vmem:[%s1466 + $0x4] sm:$0xf]
        %v1469 = vld [vmem:[%s1466 + $0x8] sm:$0xf]
        %v1470 = vld [vmem:[%s1466 + $0xc] sm:$0xf]
        %v1471 = vld [vmem:[%s1466 + $0x10] sm:$0xf]
        %v1472 = vld [vmem:[%s1466 + $0x14] sm:$0xf]
        %v1473 = vld [vmem:[%s1466 + $0x18] sm:$0xf]
        %v1474 = vld [vmem:[%s1466 + $0x1c] sm:$0xf]
        %v1475 = vpack.c.bf16 %v1459, %v1458
        %v1476 = vpack.c.bf16 %v1461, %v1460
        %v1477 = vpack.c.bf16 %v1463, %v1462
        %v1478 = vpack.c.bf16 %v1465, %v1464
        %v1487 = vunpack.c.l.b16 %v1467
        %v1488 = vunpack.c.l.b16 %v1468
        %v1489 = vunpack.c.l.b16 %v1469
        %v1490 = vunpack.c.l.b16 %v1470
        %v1491 = vunpack.c.l.b16 %v1471
        %v1492 = vunpack.c.l.b16 %v1472
        %v1493 = vunpack.c.l.b16 %v1473
        %v1494 = vunpack.c.l.b16 %v1474
        %v1495 = vpack.c.b16 %v1488, %v1487
        %v1496 = vpack.c.b16 %v1490, %v1489
        %v1497 = vpack.c.b16 %v1492, %v1491
        %v1498 = vpack.c.b16 %v1494, %v1493
        %v1504 = vsel %vm868, %v1475, 0
        %v1507 = vsel %vm868, %v1476, 0
        %v1510 = vsel %vm868, %v1477, 0
        %v1513 = vsel %vm868, %v1478, 0
        %1515 = vmatpush.bf16.msra.mxu0 0
        %1516 = vmatpush.bf16.msra.mxu0 0
        %1517 = vmatpush.bf16.msra.mxu0 0
        %1518 = vmatpush.bf16.msra.mxu0 0
        %1519 = vmatpush.bf16.msra.mxu0 %v1498
        %1520 = vmatpush.bf16.msra.mxu0 %v1497
        %1521 = vmatpush.bf16.msra.mxu0 %v1496
        %1522 = vmatpush.bf16.msra.mxu0 %v1495
        %1523 = vmatmul.bf16.gmra.mxu0 %v1504
        %v1524 = vpop.f32.mrf.mxu0
        %v1525 = vadd.f32 0.0, %v1524
        %v1526 = vpop.f32.mrf.mxu0
        %v1527 = vadd.f32 0.0, %v1526
        %1528 = vmatmul.bf16.gmra.mxu0 %v1507
        %v1529 = vpop.f32.mrf.mxu0
        %v1530 = vadd.f32 0.0, %v1529
        %v1531 = vpop.f32.mrf.mxu0
        %v1532 = vadd.f32 0.0, %v1531
        %1533 = vmatmul.bf16.gmra.mxu0 %v1510
        %v1534 = vpop.f32.mrf.mxu0
        %v1535 = vadd.f32 0.0, %v1534
        %v1536 = vpop.f32.mrf.mxu0
        %v1537 = vadd.f32 0.0, %v1536
        %1538 = vmatmul.bf16.gmra.mxu0 %v1513
        %v1539 = vpop.f32.mrf.mxu0
        %v1540 = vadd.f32 0.0, %v1539
        %v1541 = vpop.f32.mrf.mxu0
        %v1542 = vadd.f32 0.0, %v1541
        %1543 = vdwg.mxu0
        %v1544 = vadd.f32 %v1373, %v1525
        %v1545 = vadd.f32 %v1375, %v1527
        %v1546 = vadd.f32 %v1378, %v1530
        %v1547 = vadd.f32 %v1380, %v1532
        %v1548 = vadd.f32 %v1383, %v1535
        %v1549 = vadd.f32 %v1385, %v1537
        %v1550 = vadd.f32 %v1388, %v1540
        %v1551 = vadd.f32 %v1390, %v1542
        %s1552 = scalar_lea.vmem %s6, 192
        %v1553 = vld [vmem:[%s1552] sm:$0xff]
        %v1554 = vld [vmem:[%s1552 + $0x8] sm:$0xff]
        %v1555 = vld [vmem:[%s1552 + $0x10] sm:$0xff]
        %v1556 = vld [vmem:[%s1552 + $0x18] sm:$0xff]
        %v1557 = vld [vmem:[%s1552 + $0x20] sm:$0xff]
        %v1558 = vld [vmem:[%s1552 + $0x28] sm:$0xff]
        %v1559 = vld [vmem:[%s1552 + $0x30] sm:$0xff]
        %v1560 = vld [vmem:[%s1552 + $0x38] sm:$0xff]
        %1562 = vset.pattern.permute.xlu0 0
        %1563 = vperm.xlu0 %1562, %v1553
        %v1564 = vpop.permute.xlu0 %1563
        %1567 = vset.pattern.permute.xlu0 0
        %1568 = vperm.xlu0 %1567, %v1554
        %v1569 = vpop.permute.xlu0 %1568
        %1572 = vset.pattern.permute.xlu0 0
        %1573 = vperm.xlu0 %1572, %v1555
        %v1574 = vpop.permute.xlu0 %1573
        %1577 = vset.pattern.permute.xlu0 0
        %1578 = vperm.xlu0 %1577, %v1556
        %v1579 = vpop.permute.xlu0 %1578
        %1582 = vset.pattern.permute.xlu0 0
        %1583 = vperm.xlu0 %1582, %v1557
        %v1584 = vpop.permute.xlu0 %1583
        %1587 = vset.pattern.permute.xlu0 0
        %1588 = vperm.xlu0 %1587, %v1558
        %v1589 = vpop.permute.xlu0 %1588
        %1592 = vset.pattern.permute.xlu0 0
        %1593 = vperm.xlu0 %1592, %v1559
        %v1594 = vpop.permute.xlu0 %1593
        %1597 = vset.pattern.permute.xlu0 0
        %1598 = vperm.xlu0 %1597, %v1560
        %v1599 = vpop.permute.xlu0 %1598
        %v1601 = vmul.f32 %v1123, %v1564
        %v1602 = vmul.f32 %v1122, %v1569
        %v1603 = vmul.f32 %v1121, %v1574
        %v1604 = vmul.f32 %v1120, %v1579
        %v1605 = vmul.f32 %v1119, %v1584
        %v1606 = vmul.f32 %v1118, %v1589
        %v1607 = vmul.f32 %v1117, %v1594
        %v1608 = vmul.f32 %v1116, %v1599
        %s1609 = scalar_lea.vmem %s773, 96
        %v1610 = vld [vmem:[%s1609] sm:$0xf]
        %v1611 = vld [vmem:[%s1609 + $0x4] sm:$0xf]
        %v1612 = vld [vmem:[%s1609 + $0x8] sm:$0xf]
        %v1613 = vld [vmem:[%s1609 + $0xc] sm:$0xf]
        %v1614 = vld [vmem:[%s1609 + $0x10] sm:$0xf]
        %v1615 = vld [vmem:[%s1609 + $0x14] sm:$0xf]
        %v1616 = vld [vmem:[%s1609 + $0x18] sm:$0xf]
        %v1617 = vld [vmem:[%s1609 + $0x1c] sm:$0xf]
        %v1618 = vpack.c.bf16 %v1602, %v1601
        %v1619 = vpack.c.bf16 %v1604, %v1603
        %v1620 = vpack.c.bf16 %v1606, %v1605
        %v1621 = vpack.c.bf16 %v1608, %v1607
        %v1630 = vunpack.c.l.b16 %v1610
        %v1631 = vunpack.c.l.b16 %v1611
        %v1632 = vunpack.c.l.b16 %v1612
        %v1633 = vunpack.c.l.b16 %v1613
        %v1634 = vunpack.c.l.b16 %v1614
        %v1635 = vunpack.c.l.b16 %v1615
        %v1636 = vunpack.c.l.b16 %v1616
        %v1637 = vunpack.c.l.b16 %v1617
        %v1638 = vpack.c.b16 %v1631, %v1630
        %v1639 = vpack.c.b16 %v1633, %v1632
        %v1640 = vpack.c.b16 %v1635, %v1634
        %v1641 = vpack.c.b16 %v1637, %v1636
        %v1647 = vsel %vm868, %v1618, 0
        %v1650 = vsel %vm868, %v1619, 0
        %v1653 = vsel %vm868, %v1620, 0
        %v1656 = vsel %vm868, %v1621, 0
        %1658 = vmatpush.bf16.msra.mxu0 0
        %1659 = vmatpush.bf16.msra.mxu0 0
        %1660 = vmatpush.bf16.msra.mxu0 0
        %1661 = vmatpush.bf16.msra.mxu0 0
        %1662 = vmatpush.bf16.msra.mxu0 %v1641
        %1663 = vmatpush.bf16.msra.mxu0 %v1640
        %1664 = vmatpush.bf16.msra.mxu0 %v1639
        %1665 = vmatpush.bf16.msra.mxu0 %v1638
        %1666 = vmatmul.bf16.gmra.mxu0 %v1647
        %v1667 = vpop.f32.mrf.mxu0
        %v1668 = vadd.f32 0.0, %v1667
        %v1669 = vpop.f32.mrf.mxu0
        %v1670 = vadd.f32 0.0, %v1669
        %1671 = vmatmul.bf16.gmra.mxu0 %v1650
        %v1672 = vpop.f32.mrf.mxu0
        %v1673 = vadd.f32 0.0, %v1672
        %v1674 = vpop.f32.mrf.mxu0
        %v1675 = vadd.f32 0.0, %v1674
        %1676 = vmatmul.bf16.gmra.mxu0 %v1653
        %v1677 = vpop.f32.mrf.mxu0
        %v1678 = vadd.f32 0.0, %v1677
        %v1679 = vpop.f32.mrf.mxu0
        %v1680 = vadd.f32 0.0, %v1679
        %1681 = vmatmul.bf16.gmra.mxu0 %v1656
        %v1682 = vpop.f32.mrf.mxu0
        %v1683 = vadd.f32 0.0, %v1682
        %v1684 = vpop.f32.mrf.mxu0
        %v1685 = vadd.f32 0.0, %v1684
        %1686 = vdwg.mxu0
        %v1687 = vadd.f32 %v1544, %v1668
        %v1688 = vadd.f32 %v1545, %v1670
        %v1689 = vadd.f32 %v1546, %v1673
        %v1690 = vadd.f32 %v1547, %v1675
        %v1691 = vadd.f32 %v1548, %v1678
        %v1692 = vadd.f32 %v1549, %v1680
        %v1693 = vadd.f32 %v1550, %v1683
        %v1694 = vadd.f32 %v1551, %v1685
        %s1695 = scalar_lea.vmem %s6, 256
        %v1696 = vld [vmem:[%s1695] sm:$0xff]
        %v1697 = vld [vmem:[%s1695 + $0x8] sm:$0xff]
        %v1698 = vld [vmem:[%s1695 + $0x10] sm:$0xff]
        %v1699 = vld [vmem:[%s1695 + $0x18] sm:$0xff]
        %v1700 = vld [vmem:[%s1695 + $0x20] sm:$0xff]
        %v1701 = vld [vmem:[%s1695 + $0x28] sm:$0xff]
        %v1702 = vld [vmem:[%s1695 + $0x30] sm:$0xff]
        %v1703 = vld [vmem:[%s1695 + $0x38] sm:$0xff]
        %1705 = vset.pattern.permute.xlu0 0
        %1706 = vperm.xlu0 %1705, %v1696
        %v1707 = vpop.permute.xlu0 %1706
        %1710 = vset.pattern.permute.xlu0 0
        %1711 = vperm.xlu0 %1710, %v1697
        %v1712 = vpop.permute.xlu0 %1711
        %1715 = vset.pattern.permute.xlu0 0
        %1716 = vperm.xlu0 %1715, %v1698
        %v1717 = vpop.permute.xlu0 %1716
        %1720 = vset.pattern.permute.xlu0 0
        %1721 = vperm.xlu0 %1720, %v1699
        %v1722 = vpop.permute.xlu0 %1721
        %1725 = vset.pattern.permute.xlu0 0
        %1726 = vperm.xlu0 %1725, %v1700
        %v1727 = vpop.permute.xlu0 %1726
        %1730 = vset.pattern.permute.xlu0 0
        %1731 = vperm.xlu0 %1730, %v1701
        %v1732 = vpop.permute.xlu0 %1731
        %1735 = vset.pattern.permute.xlu0 0
        %1736 = vperm.xlu0 %1735, %v1702
        %v1737 = vpop.permute.xlu0 %1736
        %1740 = vset.pattern.permute.xlu0 0
        %1741 = vperm.xlu0 %1740, %v1703
        %v1742 = vpop.permute.xlu0 %1741
        %v1744 = vmul.f32 %v1097, %v1707
        %v1745 = vmul.f32 %v1098, %v1712
        %v1746 = vmul.f32 %v1099, %v1717
        %v1747 = vmul.f32 %v1100, %v1722
        %v1748 = vmul.f32 %v1101, %v1727
        %v1749 = vmul.f32 %v1102, %v1732
        %v1750 = vmul.f32 %v1103, %v1737
        %v1751 = vmul.f32 %v1104, %v1742
        %s1752 = scalar_lea.vmem %s773, 128
        %v1753 = vld [vmem:[%s1752] sm:$0xf]
        %v1754 = vld [vmem:[%s1752 + $0x4] sm:$0xf]
        %v1755 = vld [vmem:[%s1752 + $0x8] sm:$0xf]
        %v1756 = vld [vmem:[%s1752 + $0xc] sm:$0xf]
        %v1757 = vld [vmem:[%s1752 + $0x10] sm:$0xf]
        %v1758 = vld [vmem:[%s1752 + $0x14] sm:$0xf]
        %v1759 = vld [vmem:[%s1752 + $0x18] sm:$0xf]
        %v1760 = vld [vmem:[%s1752 + $0x1c] sm:$0xf]
        %v1761 = vpack.c.bf16 %v1745, %v1744
        %v1762 = vpack.c.bf16 %v1747, %v1746
        %v1763 = vpack.c.bf16 %v1749, %v1748
        %v1764 = vpack.c.bf16 %v1751, %v1750
        %v1773 = vunpack.c.l.b16 %v1753
        %v1774 = vunpack.c.l.b16 %v1754
        %v1775 = vunpack.c.l.b16 %v1755
        %v1776 = vunpack.c.l.b16 %v1756
        %v1777 = vunpack.c.l.b16 %v1757
        %v1778 = vunpack.c.l.b16 %v1758
        %v1779 = vunpack.c.l.b16 %v1759
        %v1780 = vunpack.c.l.b16 %v1760
        %v1781 = vpack.c.b16 %v1774, %v1773
        %v1782 = vpack.c.b16 %v1776, %v1775
        %v1783 = vpack.c.b16 %v1778, %v1777
        %v1784 = vpack.c.b16 %v1780, %v1779
        %v1790 = vsel %vm868, %v1761, 0
        %v1793 = vsel %vm868, %v1762, 0
        %v1796 = vsel %vm868, %v1763, 0
        %v1799 = vsel %vm868, %v1764, 0
        %1801 = vmatpush.bf16.msra.mxu0 0
        %1802 = vmatpush.bf16.msra.mxu0 0
        %1803 = vmatpush.bf16.msra.mxu0 0
        %1804 = vmatpush.bf16.msra.mxu0 0
        %1805 = vmatpush.bf16.msra.mxu0 %v1784
        %1806 = vmatpush.bf16.msra.mxu0 %v1783
        %1807 = vmatpush.bf16.msra.mxu0 %v1782
        %1808 = vmatpush.bf16.msra.mxu0 %v1781
        %1809 = vmatmul.bf16.gmra.mxu0 %v1790
        %v1810 = vpop.f32.mrf.mxu0
        %v1811 = vadd.f32 0.0, %v1810
        %v1812 = vpop.f32.mrf.mxu0
        %v1813 = vadd.f32 0.0, %v1812
        %1814 = vmatmul.bf16.gmra.mxu0 %v1793
        %v1815 = vpop.f32.mrf.mxu0
        %v1816 = vadd.f32 0.0, %v1815
        %v1817 = vpop.f32.mrf.mxu0
        %v1818 = vadd.f32 0.0, %v1817
        %1819 = vmatmul.bf16.gmra.mxu0 %v1796
        %v1820 = vpop.f32.mrf.mxu0
        %v1821 = vadd.f32 0.0, %v1820
        %v1822 = vpop.f32.mrf.mxu0
        %v1823 = vadd.f32 0.0, %v1822
        %1824 = vmatmul.bf16.gmra.mxu0 %v1799
        %v1825 = vpop.f32.mrf.mxu0
        %v1826 = vadd.f32 0.0, %v1825
        %v1827 = vpop.f32.mrf.mxu0
        %v1828 = vadd.f32 0.0, %v1827
        %1829 = vdwg.mxu0
        %v1830 = vadd.f32 %v1687, %v1811
        %v1831 = vadd.f32 %v1688, %v1813
        %v1832 = vadd.f32 %v1689, %v1816
        %v1833 = vadd.f32 %v1690, %v1818
        %v1834 = vadd.f32 %v1691, %v1821
        %v1835 = vadd.f32 %v1692, %v1823
        %v1836 = vadd.f32 %v1693, %v1826
        %v1837 = vadd.f32 %v1694, %v1828
        %s1838 = scalar_lea.vmem %s6, 320
        %v1839 = vld [vmem:[%s1838] sm:$0xff]
        %v1840 = vld [vmem:[%s1838 + $0x8] sm:$0xff]
        %v1841 = vld [vmem:[%s1838 + $0x10] sm:$0xff]
        %v1842 = vld [vmem:[%s1838 + $0x18] sm:$0xff]
        %v1843 = vld [vmem:[%s1838 + $0x20] sm:$0xff]
        %v1844 = vld [vmem:[%s1838 + $0x28] sm:$0xff]
        %v1845 = vld [vmem:[%s1838 + $0x30] sm:$0xff]
        %v1846 = vld [vmem:[%s1838 + $0x38] sm:$0xff]
        %1848 = vset.pattern.permute.xlu0 0
        %1849 = vperm.xlu0 %1848, %v1839
        %v1850 = vpop.permute.xlu0 %1849
        %1853 = vset.pattern.permute.xlu0 0
        %1854 = vperm.xlu0 %1853, %v1840
        %v1855 = vpop.permute.xlu0 %1854
        %1858 = vset.pattern.permute.xlu0 0
        %1859 = vperm.xlu0 %1858, %v1841
        %v1860 = vpop.permute.xlu0 %1859
        %1863 = vset.pattern.permute.xlu0 0
        %1864 = vperm.xlu0 %1863, %v1842
        %v1865 = vpop.permute.xlu0 %1864
        %1868 = vset.pattern.permute.xlu0 0
        %1869 = vperm.xlu0 %1868, %v1843
        %v1870 = vpop.permute.xlu0 %1869
        %1873 = vset.pattern.permute.xlu0 0
        %1874 = vperm.xlu0 %1873, %v1844
        %v1875 = vpop.permute.xlu0 %1874
        %1878 = vset.pattern.permute.xlu0 0
        %1879 = vperm.xlu0 %1878, %v1845
        %v1880 = vpop.permute.xlu0 %1879
        %1883 = vset.pattern.permute.xlu0 0
        %1884 = vperm.xlu0 %1883, %v1846
        %v1885 = vpop.permute.xlu0 %1884
        %v1887 = vmul.f32 %v1407, %v1850
        %v1888 = vmul.f32 %v1406, %v1855
        %v1889 = vmul.f32 %v1405, %v1860
        %v1890 = vmul.f32 %v1404, %v1865
        %v1891 = vmul.f32 %v1403, %v1870
        %v1892 = vmul.f32 %v1402, %v1875
        %v1893 = vmul.f32 %v1401, %v1880
        %v1894 = vmul.f32 %v1408, %v1885
        %s1895 = scalar_lea.vmem %s773, 160
        %v1896 = vld [vmem:[%s1895] sm:$0xf]
        %v1897 = vld [vmem:[%s1895 + $0x4] sm:$0xf]
        %v1898 = vld [vmem:[%s1895 + $0x8] sm:$0xf]
        %v1899 = vld [vmem:[%s1895 + $0xc] sm:$0xf]
        %v1900 = vld [vmem:[%s1895 + $0x10] sm:$0xf]
        %v1901 = vld [vmem:[%s1895 + $0x14] sm:$0xf]
        %v1902 = vld [vmem:[%s1895 + $0x18] sm:$0xf]
        %v1903 = vld [vmem:[%s1895 + $0x1c] sm:$0xf]
        %v1904 = vpack.c.bf16 %v1888, %v1887
        %v1905 = vpack.c.bf16 %v1890, %v1889
        %v1906 = vpack.c.bf16 %v1892, %v1891
        %v1907 = vpack.c.bf16 %v1894, %v1893
        %v1916 = vunpack.c.l.b16 %v1896
        %v1917 = vunpack.c.l.b16 %v1897
        %v1918 = vunpack.c.l.b16 %v1898
        %v1919 = vunpack.c.l.b16 %v1899
        %v1920 = vunpack.c.l.b16 %v1900
        %v1921 = vunpack.c.l.b16 %v1901
        %v1922 = vunpack.c.l.b16 %v1902
        %v1923 = vunpack.c.l.b16 %v1903
        %v1924 = vpack.c.b16 %v1917, %v1916
        %v1925 = vpack.c.b16 %v1919, %v1918
        %v1926 = vpack.c.b16 %v1921, %v1920
        %v1927 = vpack.c.b16 %v1923, %v1922
        %v1933 = vsel %vm868, %v1904, 0
        %v1936 = vsel %vm868, %v1905, 0
        %v1939 = vsel %vm868, %v1906, 0
        %v1942 = vsel %vm868, %v1907, 0
        %1944 = vmatpush.bf16.msra.mxu0 0
        %1945 = vmatpush.bf16.msra.mxu0 0
        %1946 = vmatpush.bf16.msra.mxu0 0
        %1947 = vmatpush.bf16.msra.mxu0 0
        %1948 = vmatpush.bf16.msra.mxu0 %v1927
        %1949 = vmatpush.bf16.msra.mxu0 %v1926
        %1950 = vmatpush.bf16.msra.mxu0 %v1925
        %1951 = vmatpush.bf16.msra.mxu0 %v1924
        %1952 = vmatmul.bf16.gmra.mxu0 %v1933
        %v1953 = vpop.f32.mrf.mxu0
        %v1954 = vadd.f32 0.0, %v1953
        %v1955 = vpop.f32.mrf.mxu0
        %v1956 = vadd.f32 0.0, %v1955
        %1957 = vmatmul.bf16.gmra.mxu0 %v1936
        %v1958 = vpop.f32.mrf.mxu0
        %v1959 = vadd.f32 0.0, %v1958
        %v1960 = vpop.f32.mrf.mxu0
        %v1961 = vadd.f32 0.0, %v1960
        %1962 = vmatmul.bf16.gmra.mxu0 %v1939
        %v1963 = vpop.f32.mrf.mxu0
        %v1964 = vadd.f32 0.0, %v1963
        %v1965 = vpop.f32.mrf.mxu0
        %v1966 = vadd.f32 0.0, %v1965
        %1967 = vmatmul.bf16.gmra.mxu0 %v1942
        %v1968 = vpop.f32.mrf.mxu0
        %v1969 = vadd.f32 0.0, %v1968
        %v1970 = vpop.f32.mrf.mxu0
        %v1971 = vadd.f32 0.0, %v1970
        %1972 = vdwg.mxu0
        %v1973 = vadd.f32 %v1830, %v1954
        %v1974 = vadd.f32 %v1831, %v1956
        %v1975 = vadd.f32 %v1832, %v1959
        %v1976 = vadd.f32 %v1833, %v1961
        %v1977 = vadd.f32 %v1834, %v1964
        %v1978 = vadd.f32 %v1835, %v1966
        %v1979 = vadd.f32 %v1836, %v1969
        %v1980 = vadd.f32 %v1837, %v1971
        %s1981 = scalar_lea.vmem %s6, 384
        %v1982 = vld [vmem:[%s1981] sm:$0xff]
        %v1983 = vld [vmem:[%s1981 + $0x8] sm:$0xff]
        %v1984 = vld [vmem:[%s1981 + $0x10] sm:$0xff]
        %v1985 = vld [vmem:[%s1981 + $0x18] sm:$0xff]
        %v1986 = vld [vmem:[%s1981 + $0x20] sm:$0xff]
        %v1987 = vld [vmem:[%s1981 + $0x28] sm:$0xff]
        %v1988 = vld [vmem:[%s1981 + $0x30] sm:$0xff]
        %v1989 = vld [vmem:[%s1981 + $0x38] sm:$0xff]
        %1991 = vset.pattern.permute.xlu0 0
        %1992 = vperm.xlu0 %1991, %v1982
        %v1993 = vpop.permute.xlu0 %1992
        %1996 = vset.pattern.permute.xlu0 0
        %1997 = vperm.xlu0 %1996, %v1983
        %v1998 = vpop.permute.xlu0 %1997
        %2001 = vset.pattern.permute.xlu0 0
        %2002 = vperm.xlu0 %2001, %v1984
        %v2003 = vpop.permute.xlu0 %2002
        %2006 = vset.pattern.permute.xlu0 0
        %2007 = vperm.xlu0 %2006, %v1985
        %v2008 = vpop.permute.xlu0 %2007
        %2011 = vset.pattern.permute.xlu0 0
        %2012 = vperm.xlu0 %2011, %v1986
        %v2013 = vpop.permute.xlu0 %2012
        %2016 = vset.pattern.permute.xlu0 0
        %2017 = vperm.xlu0 %2016, %v1987
        %v2018 = vpop.permute.xlu0 %2017
        %2021 = vset.pattern.permute.xlu0 0
        %2022 = vperm.xlu0 %2021, %v1988
        %v2023 = vpop.permute.xlu0 %2022
        %2026 = vset.pattern.permute.xlu0 0
        %2027 = vperm.xlu0 %2026, %v1989
        %v2028 = vpop.permute.xlu0 %2027
        %v2030 = vmul.f32 %v1122, %v1993
        %v2031 = vmul.f32 %v1121, %v1998
        %v2032 = vmul.f32 %v1120, %v2003
        %v2033 = vmul.f32 %v1119, %v2008
        %v2034 = vmul.f32 %v1118, %v2013
        %v2035 = vmul.f32 %v1117, %v2018
        %v2036 = vmul.f32 %v1116, %v2023
        %v2037 = vmul.f32 %v1123, %v2028
        %s2038 = scalar_lea.vmem %s773, 192
        %v2039 = vld [vmem:[%s2038] sm:$0xf]
        %v2040 = vld [vmem:[%s2038 + $0x4] sm:$0xf]
        %v2041 = vld [vmem:[%s2038 + $0x8] sm:$0xf]
        %v2042 = vld [vmem:[%s2038 + $0xc] sm:$0xf]
        %v2043 = vld [vmem:[%s2038 + $0x10] sm:$0xf]
        %v2044 = vld [vmem:[%s2038 + $0x14] sm:$0xf]
        %v2045 = vld [vmem:[%s2038 + $0x18] sm:$0xf]
        %v2046 = vld [vmem:[%s2038 + $0x1c] sm:$0xf]
        %v2047 = vpack.c.bf16 %v2031, %v2030
        %v2048 = vpack.c.bf16 %v2033, %v2032
        %v2049 = vpack.c.bf16 %v2035, %v2034
        %v2050 = vpack.c.bf16 %v2037, %v2036
        %v2059 = vunpack.c.l.b16 %v2039
        %v2060 = vunpack.c.l.b16 %v2040
        %v2061 = vunpack.c.l.b16 %v2041
        %v2062 = vunpack.c.l.b16 %v2042
        %v2063 = vunpack.c.l.b16 %v2043
        %v2064 = vunpack.c.l.b16 %v2044
        %v2065 = vunpack.c.l.b16 %v2045
        %v2066 = vunpack.c.l.b16 %v2046
        %v2067 = vpack.c.b16 %v2060, %v2059
        %v2068 = vpack.c.b16 %v2062, %v2061
        %v2069 = vpack.c.b16 %v2064, %v2063
        %v2070 = vpack.c.b16 %v2066, %v2065
        %v2076 = vsel %vm868, %v2047, 0
        %v2079 = vsel %vm868, %v2048, 0
        %v2082 = vsel %vm868, %v2049, 0
        %v2085 = vsel %vm868, %v2050, 0
        %2087 = vmatpush.bf16.msra.mxu0 0
        %2088 = vmatpush.bf16.msra.mxu0 0
        %2089 = vmatpush.bf16.msra.mxu0 0
        %2090 = vmatpush.bf16.msra.mxu0 0
        %2091 = vmatpush.bf16.msra.mxu0 %v2070
        %2092 = vmatpush.bf16.msra.mxu0 %v2069
        %2093 = vmatpush.bf16.msra.mxu0 %v2068
        %2094 = vmatpush.bf16.msra.mxu0 %v2067
        %2095 = vmatmul.bf16.gmra.mxu0 %v2076
        %v2096 = vpop.f32.mrf.mxu0
        %v2097 = vadd.f32 0.0, %v2096
        %v2098 = vpop.f32.mrf.mxu0
        %v2099 = vadd.f32 0.0, %v2098
        %2100 = vmatmul.bf16.gmra.mxu0 %v2079
        %v2101 = vpop.f32.mrf.mxu0
        %v2102 = vadd.f32 0.0, %v2101
        %v2103 = vpop.f32.mrf.mxu0
        %v2104 = vadd.f32 0.0, %v2103
        %2105 = vmatmul.bf16.gmra.mxu0 %v2082
        %v2106 = vpop.f32.mrf.mxu0
        %v2107 = vadd.f32 0.0, %v2106
        %v2108 = vpop.f32.mrf.mxu0
        %v2109 = vadd.f32 0.0, %v2108
        %2110 = vmatmul.bf16.gmra.mxu0 %v2085
        %v2111 = vpop.f32.mrf.mxu0
        %v2112 = vadd.f32 0.0, %v2111
        %v2113 = vpop.f32.mrf.mxu0
        %v2114 = vadd.f32 0.0, %v2113
        %2115 = vdwg.mxu0
        %v2116 = vadd.f32 %v1973, %v2097
        %v2117 = vadd.f32 %v1974, %v2099
        %v2118 = vadd.f32 %v1975, %v2102
        %v2119 = vadd.f32 %v1976, %v2104
        %v2120 = vadd.f32 %v1977, %v2107
        %v2121 = vadd.f32 %v1978, %v2109
        %v2122 = vadd.f32 %v1979, %v2112
        %v2123 = vadd.f32 %v1980, %v2114
        %s2124 = scalar_lea.vmem %s6, 448
        %v2125 = vld [vmem:[%s2124] sm:$0xff]
        %v2126 = vld [vmem:[%s2124 + $0x8] sm:$0xff]
        %v2127 = vld [vmem:[%s2124 + $0x10] sm:$0xff]
        %v2128 = vld [vmem:[%s2124 + $0x18] sm:$0xff]
        %v2129 = vld [vmem:[%s2124 + $0x20] sm:$0xff]
        %v2130 = vld [vmem:[%s2124 + $0x28] sm:$0xff]
        %v2131 = vld [vmem:[%s2124 + $0x30] sm:$0xff]
        %v2132 = vld [vmem:[%s2124 + $0x38] sm:$0xff]
        %2134 = vset.pattern.permute.xlu0 0
        %2135 = vperm.xlu0 %2134, %v2125
        %v2136 = vpop.permute.xlu0 %2135
        %2139 = vset.pattern.permute.xlu0 0
        %2140 = vperm.xlu0 %2139, %v2126
        %v2141 = vpop.permute.xlu0 %2140
        %2144 = vset.pattern.permute.xlu0 0
        %2145 = vperm.xlu0 %2144, %v2127
        %v2146 = vpop.permute.xlu0 %2145
        %2149 = vset.pattern.permute.xlu0 0
        %2150 = vperm.xlu0 %2149, %v2128
        %v2151 = vpop.permute.xlu0 %2150
        %2154 = vset.pattern.permute.xlu0 0
        %2155 = vperm.xlu0 %2154, %v2129
        %v2156 = vpop.permute.xlu0 %2155
        %2159 = vset.pattern.permute.xlu0 0
        %2160 = vperm.xlu0 %2159, %v2130
        %v2161 = vpop.permute.xlu0 %2160
        %2164 = vset.pattern.permute.xlu0 0
        %2165 = vperm.xlu0 %2164, %v2131
        %v2166 = vpop.permute.xlu0 %2165
        %2169 = vset.pattern.permute.xlu0 0
        %2170 = vperm.xlu0 %2169, %v2132
        %v2171 = vpop.permute.xlu0 %2170
        %v2173 = vmul.f32 %v1098, %v2136
        %v2174 = vmul.f32 %v1099, %v2141
        %v2175 = vmul.f32 %v1100, %v2146
        %v2176 = vmul.f32 %v1101, %v2151
        %v2177 = vmul.f32 %v1102, %v2156
        %v2178 = vmul.f32 %v1103, %v2161
        %v2179 = vmul.f32 %v1104, %v2166
        %v2180 = vmul.f32 %v1097, %v2171
        %s2181 = scalar_lea.vmem %s773, 224
        %v2182 = vld [vmem:[%s2181] sm:$0xf]
        %v2183 = vld [vmem:[%s2181 + $0x4] sm:$0xf]
        %v2184 = vld [vmem:[%s2181 + $0x8] sm:$0xf]
        %v2185 = vld [vmem:[%s2181 + $0xc] sm:$0xf]
        %v2186 = vld [vmem:[%s2181 + $0x10] sm:$0xf]
        %v2187 = vld [vmem:[%s2181 + $0x14] sm:$0xf]
        %v2188 = vld [vmem:[%s2181 + $0x18] sm:$0xf]
        %v2189 = vld [vmem:[%s2181 + $0x1c] sm:$0xf]
        %v2190 = vpack.c.bf16 %v2174, %v2173
        %v2191 = vpack.c.bf16 %v2176, %v2175
        %v2192 = vpack.c.bf16 %v2178, %v2177
        %v2193 = vpack.c.bf16 %v2180, %v2179
        %v2202 = vunpack.c.l.b16 %v2182
        %v2203 = vunpack.c.l.b16 %v2183
        %v2204 = vunpack.c.l.b16 %v2184
        %v2205 = vunpack.c.l.b16 %v2185
        %v2206 = vunpack.c.l.b16 %v2186
        %v2207 = vunpack.c.l.b16 %v2187
        %v2208 = vunpack.c.l.b16 %v2188
        %v2209 = vunpack.c.l.b16 %v2189
        %v2210 = vpack.c.b16 %v2203, %v2202
        %v2211 = vpack.c.b16 %v2205, %v2204
        %v2212 = vpack.c.b16 %v2207, %v2206
        %v2213 = vpack.c.b16 %v2209, %v2208
        %v2219 = vsel %vm868, %v2190, 0
        %v2222 = vsel %vm868, %v2191, 0
        %v2225 = vsel %vm868, %v2192, 0
        %v2228 = vsel %vm868, %v2193, 0
        %2230 = vmatpush.bf16.msra.mxu0 0
        %2231 = vmatpush.bf16.msra.mxu0 0
        %2232 = vmatpush.bf16.msra.mxu0 0
        %2233 = vmatpush.bf16.msra.mxu0 0
        %2234 = vmatpush.bf16.msra.mxu0 %v2213
        %2235 = vmatpush.bf16.msra.mxu0 %v2212
        %2236 = vmatpush.bf16.msra.mxu0 %v2211
        %2237 = vmatpush.bf16.msra.mxu0 %v2210
        %2238 = vmatmul.bf16.gmra.mxu0 %v2219
        %v2239 = vpop.f32.mrf.mxu0
        %v2240 = vadd.f32 0.0, %v2239
        %v2241 = vpop.f32.mrf.mxu0
        %v2242 = vadd.f32 0.0, %v2241
        %2243 = vmatmul.bf16.gmra.mxu0 %v2222
        %v2244 = vpop.f32.mrf.mxu0
        %v2245 = vadd.f32 0.0, %v2244
        %v2246 = vpop.f32.mrf.mxu0
        %v2247 = vadd.f32 0.0, %v2246
        %2248 = vmatmul.bf16.gmra.mxu0 %v2225
        %v2249 = vpop.f32.mrf.mxu0
        %v2250 = vadd.f32 0.0, %v2249
        %v2251 = vpop.f32.mrf.mxu0
        %v2252 = vadd.f32 0.0, %v2251
        %2253 = vmatmul.bf16.gmra.mxu0 %v2228
        %v2254 = vpop.f32.mrf.mxu0
        %v2255 = vadd.f32 0.0, %v2254
        %v2256 = vpop.f32.mrf.mxu0
        %v2257 = vadd.f32 0.0, %v2256
        %2258 = vdwg.mxu0
        %v2259 = vadd.f32 %v2116, %v2240
        %v2260 = vadd.f32 %v2117, %v2242
        %v2261 = vadd.f32 %v2118, %v2245
        %v2262 = vadd.f32 %v2119, %v2247
        %v2263 = vadd.f32 %v2120, %v2250
        %v2264 = vadd.f32 %v2121, %v2252
        %v2265 = vadd.f32 %v2122, %v2255
        %v2266 = vadd.f32 %v2123, %v2257
        %s2267 = scalar_lea.vmem %s6, 512
        %v2268 = vld [vmem:[%s2267] sm:$0xff]
        %v2269 = vld [vmem:[%s2267 + $0x8] sm:$0xff]
        %v2270 = vld [vmem:[%s2267 + $0x10] sm:$0xff]
        %v2271 = vld [vmem:[%s2267 + $0x18] sm:$0xff]
        %v2272 = vld [vmem:[%s2267 + $0x20] sm:$0xff]
        %v2273 = vld [vmem:[%s2267 + $0x28] sm:$0xff]
        %v2274 = vld [vmem:[%s2267 + $0x30] sm:$0xff]
        %v2275 = vld [vmem:[%s2267 + $0x38] sm:$0xff]
        %2277 = vset.pattern.permute.xlu0 0
        %2278 = vperm.xlu0 %2277, %v2268
        %v2279 = vpop.permute.xlu0 %2278
        %2282 = vset.pattern.permute.xlu0 0
        %2283 = vperm.xlu0 %2282, %v2269
        %v2284 = vpop.permute.xlu0 %2283
        %2287 = vset.pattern.permute.xlu0 0
        %2288 = vperm.xlu0 %2287, %v2270
        %v2289 = vpop.permute.xlu0 %2288
        %2292 = vset.pattern.permute.xlu0 0
        %2293 = vperm.xlu0 %2292, %v2271
        %v2294 = vpop.permute.xlu0 %2293
        %2297 = vset.pattern.permute.xlu0 0
        %2298 = vperm.xlu0 %2297, %v2272
        %v2299 = vpop.permute.xlu0 %2298
        %2302 = vset.pattern.permute.xlu0 0
        %2303 = vperm.xlu0 %2302, %v2273
        %v2304 = vpop.permute.xlu0 %2303
        %2307 = vset.pattern.permute.xlu0 0
        %2308 = vperm.xlu0 %2307, %v2274
        %v2309 = vpop.permute.xlu0 %2308
        %2312 = vset.pattern.permute.xlu0 0
        %2313 = vperm.xlu0 %2312, %v2275
        %v2314 = vpop.permute.xlu0 %2313
        %v2316 = vmul.f32 %v1406, %v2279
        %v2317 = vmul.f32 %v1405, %v2284
        %v2318 = vmul.f32 %v1404, %v2289
        %v2319 = vmul.f32 %v1403, %v2294
        %v2320 = vmul.f32 %v1402, %v2299
        %v2321 = vmul.f32 %v1401, %v2304
        %v2322 = vmul.f32 %v1408, %v2309
        %v2323 = vmul.f32 %v1407, %v2314
        %s2324 = scalar_lea.vmem %s773, 256
        %v2325 = vld [vmem:[%s2324] sm:$0xf]
        %v2326 = vld [vmem:[%s2324 + $0x4] sm:$0xf]
        %v2327 = vld [vmem:[%s2324 + $0x8] sm:$0xf]
        %v2328 = vld [vmem:[%s2324 + $0xc] sm:$0xf]
        %v2329 = vld [vmem:[%s2324 + $0x10] sm:$0xf]
        %v2330 = vld [vmem:[%s2324 + $0x14] sm:$0xf]
        %v2331 = vld [vmem:[%s2324 + $0x18] sm:$0xf]
        %v2332 = vld [vmem:[%s2324 + $0x1c] sm:$0xf]
        %v2333 = vpack.c.bf16 %v2317, %v2316
        %v2334 = vpack.c.bf16 %v2319, %v2318
        %v2335 = vpack.c.bf16 %v2321, %v2320
        %v2336 = vpack.c.bf16 %v2323, %v2322
        %v2345 = vunpack.c.l.b16 %v2325
        %v2346 = vunpack.c.l.b16 %v2326
        %v2347 = vunpack.c.l.b16 %v2327
        %v2348 = vunpack.c.l.b16 %v2328
        %v2349 = vunpack.c.l.b16 %v2329
        %v2350 = vunpack.c.l.b16 %v2330
        %v2351 = vunpack.c.l.b16 %v2331
        %v2352 = vunpack.c.l.b16 %v2332
        %v2353 = vpack.c.b16 %v2346, %v2345
        %v2354 = vpack.c.b16 %v2348, %v2347
        %v2355 = vpack.c.b16 %v2350, %v2349
        %v2356 = vpack.c.b16 %v2352, %v2351
        %v2362 = vsel %vm868, %v2333, 0
        %v2365 = vsel %vm868, %v2334, 0
        %v2368 = vsel %vm868, %v2335, 0
        %v2371 = vsel %vm868, %v2336, 0
        %2373 = vmatpush.bf16.msra.mxu0 0
        %2374 = vmatpush.bf16.msra.mxu0 0
        %2375 = vmatpush.bf16.msra.mxu0 0
        %2376 = vmatpush.bf16.msra.mxu0 0
        %2377 = vmatpush.bf16.msra.mxu0 %v2356
        %2378 = vmatpush.bf16.msra.mxu0 %v2355
        %2379 = vmatpush.bf16.msra.mxu0 %v2354
        %2380 = vmatpush.bf16.msra.mxu0 %v2353
        %2381 = vmatmul.bf16.gmra.mxu0 %v2362
        %v2382 = vpop.f32.mrf.mxu0
        %v2383 = vadd.f32 0.0, %v2382
        %v2384 = vpop.f32.mrf.mxu0
        %v2385 = vadd.f32 0.0, %v2384
        %2386 = vmatmul.bf16.gmra.mxu0 %v2365
        %v2387 = vpop.f32.mrf.mxu0
        %v2388 = vadd.f32 0.0, %v2387
        %v2389 = vpop.f32.mrf.mxu0
        %v2390 = vadd.f32 0.0, %v2389
        %2391 = vmatmul.bf16.gmra.mxu0 %v2368
        %v2392 = vpop.f32.mrf.mxu0
        %v2393 = vadd.f32 0.0, %v2392
        %v2394 = vpop.f32.mrf.mxu0
        %v2395 = vadd.f32 0.0, %v2394
        %2396 = vmatmul.bf16.gmra.mxu0 %v2371
        %v2397 = vpop.f32.mrf.mxu0
        %v2398 = vadd.f32 0.0, %v2397
        %v2399 = vpop.f32.mrf.mxu0
        %v2400 = vadd.f32 0.0, %v2399
        %2401 = vdwg.mxu0
        %v2402 = vadd.f32 %v2259, %v2383
        %v2403 = vadd.f32 %v2260, %v2385
        %v2404 = vadd.f32 %v2261, %v2388
        %v2405 = vadd.f32 %v2262, %v2390
        %v2406 = vadd.f32 %v2263, %v2393
        %v2407 = vadd.f32 %v2264, %v2395
        %v2408 = vadd.f32 %v2265, %v2398
        %v2409 = vadd.f32 %v2266, %v2400
        %v2410 = vld [vmem:[%s776] sm:$0x1]
        %v2411 = vld [vmem:[%s779] sm:$0x1]
        %v2412 = vsel %vm914, %v2402, 0.0
        %v2413 = vsel %vm914, %v2403, 0.0
        %v2414 = vadd.f32 %v2412, %v2413
        %v2415 = vsel %vm914, %v2404, 0.0
        %v2416 = vadd.f32 %v2414, %v2415
        %v2417 = vsel %vm914, %v2405, 0.0
        %v2418 = vadd.f32 %v2416, %v2417
        %v2419 = vsel %vm914, %v2406, 0.0
        %v2420 = vadd.f32 %v2418, %v2419
        %v2421 = vsel %vm914, %v2407, 0.0
        %v2422 = vadd.f32 %v2420, %v2421
        %v2423 = vsel %vm914, %v2408, 0.0
        %v2424 = vadd.f32 %v2422, %v2423
        %v2425 = vsel %vm914, %v2409, 0.0
        %v2426 = vadd.f32 %v2424, %v2425
        %v2427 = vrot.slane %v2426, 4
        %v2428 = vadd.f32 %v2426, %v2427
        %v2429 = vrot.slane %v2428, 2
        %v2430 = vadd.f32 %v2428, %v2429
        %v2431 = vrot.slane %v2430, 1
        %v2432 = vadd.f32 %v2430, %v2431
        %v2434 = vsel %vm914, %v2432, 0
        %2436 = vmatpush.msra.mxu0 0.0
        %2437 = vmatpush.msra.mxu0 0.0
        %2438 = vmatpush.msra.mxu0 0.0
        %2439 = vmatpush.msra.mxu0 0.0
        %2440 = vmatpush.msra.mxu0 0.0
        %2441 = vmatpush.msra.mxu0 0.0
        %2442 = vmatpush.msra.mxu0 0.0
        %2443 = vmatpush.msra.mxu0 0.0
        %2444 = vmatpush.msra.mxu0 0.0
        %2445 = vmatpush.msra.mxu0 0.0
        %2446 = vmatpush.msra.mxu0 0.0
        %2447 = vmatpush.msra.mxu0 0.0
        %2448 = vmatpush.msra.mxu0 %v853
        %2449 = vmatpush.msra.mxu0 %v852
        %2450 = vmatpush.msra.mxu0 %v851
        %2451 = vmatpush.msra.mxu0 %v850
        %2452 = vmatmul.f32.gmra.mxu0 %v2434
        %v2453 = vpop.f32.mrf.mxu0
        %v2454 = vadd.f32 0.0, %v2453
        %2455 = vdwg.mxu0
        %v2456 = vmul.f32 %v2454, 0.015625
        %v2458 = vsel %vm914, %v2456, 0
        %2460 = vmatpush.msra.mxu0 0.0
        %2461 = vmatpush.msra.mxu0 0.0
        %2462 = vmatpush.msra.mxu0 0.0
        %2463 = vmatpush.msra.mxu0 0.0
        %2464 = vmatpush.msra.mxu0 0.0
        %2465 = vmatpush.msra.mxu0 0.0
        %2466 = vmatpush.msra.mxu0 0.0
        %2467 = vmatpush.msra.mxu0 0.0
        %2468 = vmatpush.msra.mxu0 0.0
        %2469 = vmatpush.msra.mxu0 0.0
        %2470 = vmatpush.msra.mxu0 0.0
        %2471 = vmatpush.msra.mxu0 0.0
        %2472 = vmatpush.msra.mxu0 %v857
        %2473 = vmatpush.msra.mxu0 %v856
        %2474 = vmatpush.msra.mxu0 %v855
        %2475 = vmatpush.msra.mxu0 %v854
        %2476 = vmatmul.f32.gmra.mxu0 %v2458
        %v2477 = vpop.f32.mrf.mxu0
        %v2478 = vadd.f32 0.0, %v2477
        %2479 = vdwg.mxu0
        %v2480 = vperm.slane %v2478, 0
        %v2481 = vsub.f32 %v2402, %v2480
        %v2482 = vsub.f32 %v2403, %v2480
        %v2483 = vsub.f32 %v2404, %v2480
        %v2484 = vsub.f32 %v2405, %v2480
        %v2485 = vsub.f32 %v2406, %v2480
        %v2486 = vsub.f32 %v2407, %v2480
        %v2487 = vsub.f32 %v2408, %v2480
        %v2488 = vsub.f32 %v2409, %v2480
        %v2489 = vmul.f32 %v2481, %v2481
        %v2490 = vmul.f32 %v2482, %v2482
        %v2491 = vmul.f32 %v2483, %v2483
        %v2492 = vmul.f32 %v2484, %v2484
        %v2493 = vmul.f32 %v2485, %v2485
        %v2494 = vmul.f32 %v2486, %v2486
        %v2495 = vmul.f32 %v2487, %v2487
        %v2496 = vmul.f32 %v2488, %v2488
        %v2497 = vsel %vm914, %v2489, 0.0
        %v2498 = vsel %vm914, %v2490, 0.0
        %v2499 = vadd.f32 %v2497, %v2498
        %v2500 = vsel %vm914, %v2491, 0.0
        %v2501 = vadd.f32 %v2499, %v2500
        %v2502 = vsel %vm914, %v2492, 0.0
        %v2503 = vadd.f32 %v2501, %v2502
        %v2504 = vsel %vm914, %v2493, 0.0
        %v2505 = vadd.f32 %v2503, %v2504
        %v2506 = vsel %vm914, %v2494, 0.0
        %v2507 = vadd.f32 %v2505, %v2506
        %v2508 = vsel %vm914, %v2495, 0.0
        %v2509 = vadd.f32 %v2507, %v2508
        %v2510 = vsel %vm914, %v2496, 0.0
        %v2511 = vadd.f32 %v2509, %v2510
        %v2512 = vrot.slane %v2511, 4
        %v2513 = vadd.f32 %v2511, %v2512
        %v2514 = vrot.slane %v2513, 2
        %v2515 = vadd.f32 %v2513, %v2514
        %v2516 = vrot.slane %v2515, 1
        %v2517 = vadd.f32 %v2515, %v2516
        %v2519 = vsel %vm914, %v2517, 0
        %2521 = vmatpush.msra.mxu0 0.0
        %2522 = vmatpush.msra.mxu0 0.0
        %2523 = vmatpush.msra.mxu0 0.0
        %2524 = vmatpush.msra.mxu0 0.0
        %2525 = vmatpush.msra.mxu0 0.0
        %2526 = vmatpush.msra.mxu0 0.0
        %2527 = vmatpush.msra.mxu0 0.0
        %2528 = vmatpush.msra.mxu0 0.0
        %2529 = vmatpush.msra.mxu0 0.0
        %2530 = vmatpush.msra.mxu0 0.0
        %2531 = vmatpush.msra.mxu0 0.0
        %2532 = vmatpush.msra.mxu0 0.0
        %2533 = vmatpush.msra.mxu0 %v853
        %2534 = vmatpush.msra.mxu0 %v852
        %2535 = vmatpush.msra.mxu0 %v851
        %2536 = vmatpush.msra.mxu0 %v850
        %2537 = vmatmul.f32.gmra.mxu0 %v2519
        %v2538 = vpop.f32.mrf.mxu0
        %v2539 = vadd.f32 0.0, %v2538
        %2540 = vdwg.mxu0
        %v2541 = vmul.f32 %v2539, 0.015625
        %v2542 = vadd.f32 %v2541, 1e-05
        %v2543 = vrsqrt.pop %v2542
        %v2544 = vmul.f32 %v2543, %v2542
        %v2545 = vmul.f32 %v2544, %v2543
        %v2546 = vmul.f32 0.5, %v2545
        %v2547 = vsub.f32 1.5, %v2546
        %v2548 = vmul.f32 %v2543, %v2547
        %vm2549 = vweird.f32 %v2542
        %vm2550 = vweird.f32 %v2543
        %vm2551 = vmor %vm2549, %vm2550
        %v2552 = vsel %vm2551, %v2543, %v2548
        %v2554 = vsel %vm914, %v2552, 0
        %2556 = vmatpush.msra.mxu0 0.0
        %2557 = vmatpush.msra.mxu0 0.0
        %2558 = vmatpush.msra.mxu0 0.0
        %2559 = vmatpush.msra.mxu0 0.0
        %2560 = vmatpush.msra.mxu0 0.0
        %2561 = vmatpush.msra.mxu0 0.0
        %2562 = vmatpush.msra.mxu0 0.0
        %2563 = vmatpush.msra.mxu0 0.0
        %2564 = vmatpush.msra.mxu0 0.0
        %2565 = vmatpush.msra.mxu0 0.0
        %2566 = vmatpush.msra.mxu0 0.0
        %2567 = vmatpush.msra.mxu0 0.0
        %2568 = vmatpush.msra.mxu0 %v857
        %2569 = vmatpush.msra.mxu0 %v856
        %2570 = vmatpush.msra.mxu0 %v855
        %2571 = vmatpush.msra.mxu0 %v854
        %2572 = vmatmul.f32.gmra.mxu0 %v2554
        %v2573 = vpop.f32.mrf.mxu0
        %v2574 = vadd.f32 0.0, %v2573
        %2575 = vdwg.mxu0
        %v2576 = vperm.slane %v2574, 0
        %v2577 = vmul.f32 %v2481, %v2576
        %v2578 = vmul.f32 %v2482, %v2576
        %v2579 = vmul.f32 %v2483, %v2576
        %v2580 = vmul.f32 %v2484, %v2576
        %v2581 = vmul.f32 %v2485, %v2576
        %v2582 = vmul.f32 %v2486, %v2576
        %v2583 = vmul.f32 %v2487, %v2576
        %v2584 = vmul.f32 %v2488, %v2576
        %v2586 = vperm.slane %v2410, 0
        %v2588 = vmul.f32 %v2577, %v2586
        %v2589 = vmul.f32 %v2578, %v2586
        %v2590 = vmul.f32 %v2579, %v2586
        %v2591 = vmul.f32 %v2580, %v2586
        %v2592 = vmul.f32 %v2581, %v2586
        %v2593 = vmul.f32 %v2582, %v2586
        %v2594 = vmul.f32 %v2583, %v2586
        %v2595 = vmul.f32 %v2584, %v2586
        %v2597 = vperm.slane %v2411, 0
        %v2599 = vadd.f32 %v2588, %v2597
        %v2600 = vadd.f32 %v2589, %v2597
        %v2601 = vadd.f32 %v2590, %v2597
        %v2602 = vadd.f32 %v2591, %v2597
        %v2603 = vadd.f32 %v2592, %v2597
        %v2604 = vadd.f32 %v2593, %v2597
        %v2605 = vadd.f32 %v2594, %v2597
        %v2606 = vadd.f32 %v2595, %v2597
        %v2607 = vadd.f32 %v2599, 3.0
        %v2608 = vadd.f32 %v2600, 3.0
        %v2609 = vadd.f32 %v2601, 3.0
        %v2610 = vadd.f32 %v2602, 3.0
        %v2611 = vadd.f32 %v2603, 3.0
        %v2612 = vadd.f32 %v2604, 3.0
        %v2613 = vadd.f32 %v2605, 3.0
        %v2614 = vadd.f32 %v2606, 3.0
        %v2615 = vmax.f32 %v2607, 0.0
        %v2616 = vmax.f32 %v2608, 0.0
        %v2617 = vmax.f32 %v2609, 0.0
        %v2618 = vmax.f32 %v2610, 0.0
        %v2619 = vmax.f32 %v2611, 0.0
        %v2620 = vmax.f32 %v2612, 0.0
        %v2621 = vmax.f32 %v2613, 0.0
        %v2622 = vmax.f32 %v2614, 0.0
        %v2623 = vmin.f32 %v2615, 6.0
        %v2624 = vmin.f32 %v2616, 6.0
        %v2625 = vmin.f32 %v2617, 6.0
        %v2626 = vmin.f32 %v2618, 6.0
        %v2627 = vmin.f32 %v2619, 6.0
        %v2628 = vmin.f32 %v2620, 6.0
        %v2629 = vmin.f32 %v2621, 6.0
        %v2630 = vmin.f32 %v2622, 6.0
        %v2631 = vmul.f32 %v2599, %v2623
        %v2632 = vmul.f32 %v2600, %v2624
        %v2633 = vmul.f32 %v2601, %v2625
        %v2634 = vmul.f32 %v2602, %v2626
        %v2635 = vmul.f32 %v2603, %v2627
        %v2636 = vmul.f32 %v2604, %v2628
        %v2637 = vmul.f32 %v2605, %v2629
        %v2638 = vmul.f32 %v2606, %v2630
        %v2639 = vmul.f32 %v2631, 0.16666667
        %v2640 = vmul.f32 %v2632, 0.16666667
        %v2641 = vmul.f32 %v2633, 0.16666667
        %v2642 = vmul.f32 %v2634, 0.16666667
        %v2643 = vmul.f32 %v2635, 0.16666667
        %v2644 = vmul.f32 %v2636, 0.16666667
        %v2645 = vmul.f32 %v2637, 0.16666667
        %v2646 = vmul.f32 %v2638, 0.16666667
        %v2647 = vld [vmem:[%s784] sm:$0xf]
        %v2648 = vld [vmem:[%s784 + $0x4] sm:$0xf]
        %v2649 = vld [vmem:[%s784 + $0x8] sm:$0xf]
        %v2650 = vld [vmem:[%s784 + $0xc] sm:$0xf]
        %v2651 = vpack.c.bf16 %v2640, %v2639
        %v2652 = vpack.c.bf16 %v2642, %v2641
        %v2653 = vpack.c.bf16 %v2644, %v2643
        %v2654 = vpack.c.bf16 %v2646, %v2645
        %v2659 = vunpack.c.l.b16 %v2647
        %v2660 = vunpack.c.l.b16 %v2648
        %v2661 = vunpack.c.l.b16 %v2649
        %v2662 = vunpack.c.l.b16 %v2650
        %v2663 = vpack.c.b16 %v2660, %v2659
        %v2664 = vpack.c.b16 %v2662, %v2661
        %v2668 = vsel %vm914, %v2651, 0
        %v2671 = vsel %vm914, %v2652, 0
        %v2674 = vsel %vm914, %v2653, 0
        %v2677 = vsel %vm914, %v2654, 0
        %2679 = vmatpush.bf16.msra.mxu0 0
        %2680 = vmatpush.bf16.msra.mxu0 0
        %2681 = vmatpush.bf16.msra.mxu0 0
        %2682 = vmatpush.bf16.msra.mxu0 0
        %2683 = vmatpush.bf16.msra.mxu0 0
        %2684 = vmatpush.bf16.msra.mxu0 0
        %2685 = vmatpush.bf16.msra.mxu0 %v2664
        %2686 = vmatpush.bf16.msra.mxu0 %v2663
        %2687 = vmatmul.bf16.gmra.mxu0 %v2668
        %v2688 = vpop.f32.mrf.mxu0
        %v2689 = vadd.f32 0.0, %v2688
        %v2690 = vpop.f32.mrf.mxu0
        %v2691 = vadd.f32 0.0, %v2690
        %2692 = vmatmul.bf16.gmra.mxu0 %v2671
        %v2693 = vpop.f32.mrf.mxu0
        %v2694 = vadd.f32 0.0, %v2693
        %v2695 = vpop.f32.mrf.mxu0
        %v2696 = vadd.f32 0.0, %v2695
        %2697 = vmatmul.bf16.gmra.mxu0 %v2674
        %v2698 = vpop.f32.mrf.mxu0
        %v2699 = vadd.f32 0.0, %v2698
        %v2700 = vpop.f32.mrf.mxu0
        %v2701 = vadd.f32 0.0, %v2700
        %2702 = vmatmul.bf16.gmra.mxu0 %v2677
        %v2703 = vpop.f32.mrf.mxu0
        %v2704 = vadd.f32 0.0, %v2703
        %v2705 = vpop.f32.mrf.mxu0
        %v2706 = vadd.f32 0.0, %v2705
        %2707 = vdwg.mxu0
        %v2708 = vadd.f32 %v830, %v2689
        %v2709 = vadd.f32 %v831, %v2691
        %v2710 = vadd.f32 %v832, %v2694
        %v2711 = vadd.f32 %v833, %v2696
        %v2712 = vadd.f32 %v834, %v2699
        %v2713 = vadd.f32 %v835, %v2701
        %v2714 = vadd.f32 %v836, %v2704
        %v2715 = vadd.f32 %v837, %v2706
        %v2716 = vld [vmem:[%s787] sm:$0x1]
        %v2717 = vld [vmem:[%s790] sm:$0x1]
        %v2718 = vsel %vm868, %v2708, 0.0
        %v2719 = vsel %vm868, %v2709, 0.0
        %v2720 = vadd.f32 %v2718, %v2719
        %v2721 = vsel %vm868, %v2710, 0.0
        %v2722 = vadd.f32 %v2720, %v2721
        %v2723 = vsel %vm868, %v2711, 0.0
        %v2724 = vadd.f32 %v2722, %v2723
        %v2725 = vsel %vm868, %v2712, 0.0
        %v2726 = vadd.f32 %v2724, %v2725
        %v2727 = vsel %vm868, %v2713, 0.0
        %v2728 = vadd.f32 %v2726, %v2727
        %v2729 = vsel %vm868, %v2714, 0.0
        %v2730 = vadd.f32 %v2728, %v2729
        %v2731 = vsel %vm868, %v2715, 0.0
        %v2732 = vadd.f32 %v2730, %v2731
        %v2733 = vrot.slane %v2732, 4
        %v2734 = vadd.f32 %v2732, %v2733
        %v2735 = vrot.slane %v2734, 2
        %v2736 = vadd.f32 %v2734, %v2735
        %v2737 = vrot.slane %v2736, 1
        %v2738 = vadd.f32 %v2736, %v2737
        %v2740 = vsel %vm868, %v2738, 0
        %2742 = vmatpush.msra.mxu0 0.0
        %2743 = vmatpush.msra.mxu0 0.0
        %2744 = vmatpush.msra.mxu0 0.0
        %2745 = vmatpush.msra.mxu0 0.0
        %2746 = vmatpush.msra.mxu0 0.0
        %2747 = vmatpush.msra.mxu0 0.0
        %2748 = vmatpush.msra.mxu0 0.0
        %2749 = vmatpush.msra.mxu0 0.0
        %2750 = vmatpush.msra.mxu0 %v845
        %2751 = vmatpush.msra.mxu0 %v844
        %2752 = vmatpush.msra.mxu0 %v843
        %2753 = vmatpush.msra.mxu0 %v842
        %2754 = vmatpush.msra.mxu0 %v841
        %2755 = vmatpush.msra.mxu0 %v840
        %2756 = vmatpush.msra.mxu0 %v839
        %2757 = vmatpush.msra.mxu0 %v838
        %2758 = vmatmul.f32.gmra.mxu0 %v2740
        %v2759 = vpop.f32.mrf.mxu0
        %v2760 = vadd.f32 0.0, %v2759
        %2761 = vdwg.mxu0
        %v2762 = vmul.f32 %v2760, 0.0078125
        %v2764 = vsel %vm914, %v2762, 0
        %2766 = vmatpush.msra.mxu0 0.0
        %2767 = vmatpush.msra.mxu0 0.0
        %2768 = vmatpush.msra.mxu0 0.0
        %2769 = vmatpush.msra.mxu0 0.0
        %2770 = vmatpush.msra.mxu0 0.0
        %2771 = vmatpush.msra.mxu0 0.0
        %2772 = vmatpush.msra.mxu0 0.0
        %2773 = vmatpush.msra.mxu0 0.0
        %2774 = vmatpush.msra.mxu0 0.0
        %2775 = vmatpush.msra.mxu0 0.0
        %2776 = vmatpush.msra.mxu0 0.0
        %2777 = vmatpush.msra.mxu0 0.0
        %2778 = vmatpush.msra.mxu0 %v849
        %2779 = vmatpush.msra.mxu0 %v848
        %2780 = vmatpush.msra.mxu0 %v847
        %2781 = vmatpush.msra.mxu0 %v846
        %2782 = vmatmul.f32.gmra.mxu0 %v2764
        %v2783 = vpop.f32.mrf.mxu0
        %v2784 = vadd.f32 0.0, %v2783
        %2785 = vdwg.mxu0
        %v2786 = vperm.slane %v2784, 0
        %v2787 = vsub.f32 %v2708, %v2786
        %v2788 = vsub.f32 %v2709, %v2786
        %v2789 = vsub.f32 %v2710, %v2786
        %v2790 = vsub.f32 %v2711, %v2786
        %v2791 = vsub.f32 %v2712, %v2786
        %v2792 = vsub.f32 %v2713, %v2786
        %v2793 = vsub.f32 %v2714, %v2786
        %v2794 = vsub.f32 %v2715, %v2786
        %v2795 = vmul.f32 %v2787, %v2787
        %v2796 = vmul.f32 %v2788, %v2788
        %v2797 = vmul.f32 %v2789, %v2789
        %v2798 = vmul.f32 %v2790, %v2790
        %v2799 = vmul.f32 %v2791, %v2791
        %v2800 = vmul.f32 %v2792, %v2792
        %v2801 = vmul.f32 %v2793, %v2793
        %v2802 = vmul.f32 %v2794, %v2794
        %v2803 = vsel %vm868, %v2795, 0.0
        %v2804 = vsel %vm868, %v2796, 0.0
        %v2805 = vadd.f32 %v2803, %v2804
        %v2806 = vsel %vm868, %v2797, 0.0
        %v2807 = vadd.f32 %v2805, %v2806
        %v2808 = vsel %vm868, %v2798, 0.0
        %v2809 = vadd.f32 %v2807, %v2808
        %v2810 = vsel %vm868, %v2799, 0.0
        %v2811 = vadd.f32 %v2809, %v2810
        %v2812 = vsel %vm868, %v2800, 0.0
        %v2813 = vadd.f32 %v2811, %v2812
        %v2814 = vsel %vm868, %v2801, 0.0
        %v2815 = vadd.f32 %v2813, %v2814
        %v2816 = vsel %vm868, %v2802, 0.0
        %v2817 = vadd.f32 %v2815, %v2816
        %v2818 = vrot.slane %v2817, 4
        %v2819 = vadd.f32 %v2817, %v2818
        %v2820 = vrot.slane %v2819, 2
        %v2821 = vadd.f32 %v2819, %v2820
        %v2822 = vrot.slane %v2821, 1
        %v2823 = vadd.f32 %v2821, %v2822
        %v2825 = vsel %vm868, %v2823, 0
        %2827 = vmatpush.msra.mxu0 0.0
        %2828 = vmatpush.msra.mxu0 0.0
        %2829 = vmatpush.msra.mxu0 0.0
        %2830 = vmatpush.msra.mxu0 0.0
        %2831 = vmatpush.msra.mxu0 0.0
        %2832 = vmatpush.msra.mxu0 0.0
        %2833 = vmatpush.msra.mxu0 0.0
        %2834 = vmatpush.msra.mxu0 0.0
        %2835 = vmatpush.msra.mxu0 %v845
        %2836 = vmatpush.msra.mxu0 %v844
        %2837 = vmatpush.msra.mxu0 %v843
        %2838 = vmatpush.msra.mxu0 %v842
        %2839 = vmatpush.msra.mxu0 %v841
        %2840 = vmatpush.msra.mxu0 %v840
        %2841 = vmatpush.msra.mxu0 %v839
        %2842 = vmatpush.msra.mxu0 %v838
        %2843 = vmatmul.f32.gmra.mxu0 %v2825
        %v2844 = vpop.f32.mrf.mxu0
        %v2845 = vadd.f32 0.0, %v2844
        %2846 = vdwg.mxu0
        %v2847 = vmul.f32 %v2845, 0.0078125
        %v2848 = vadd.f32 %v2847, 1e-05
        %v2849 = vrsqrt.pop %v2848
        %v2850 = vmul.f32 %v2849, %v2848
        %v2851 = vmul.f32 %v2850, %v2849
        %v2852 = vmul.f32 0.5, %v2851
        %v2853 = vsub.f32 1.5, %v2852
        %v2854 = vmul.f32 %v2849, %v2853
        %vm2855 = vweird.f32 %v2848
        %vm2856 = vweird.f32 %v2849
        %vm2857 = vmor %vm2855, %vm2856
        %v2858 = vsel %vm2857, %v2849, %v2854
        %v2860 = vsel %vm914, %v2858, 0
        %2862 = vmatpush.msra.mxu0 0.0
        %2863 = vmatpush.msra.mxu0 0.0
        %2864 = vmatpush.msra.mxu0 0.0
        %2865 = vmatpush.msra.mxu0 0.0
        %2866 = vmatpush.msra.mxu0 0.0
        %2867 = vmatpush.msra.mxu0 0.0
        %2868 = vmatpush.msra.mxu0 0.0
        %2869 = vmatpush.msra.mxu0 0.0
        %2870 = vmatpush.msra.mxu0 0.0
        %2871 = vmatpush.msra.mxu0 0.0
        %2872 = vmatpush.msra.mxu0 0.0
        %2873 = vmatpush.msra.mxu0 0.0
        %2874 = vmatpush.msra.mxu0 %v849
        %2875 = vmatpush.msra.mxu0 %v848
        %2876 = vmatpush.msra.mxu0 %v847
        %2877 = vmatpush.msra.mxu0 %v846
        %2878 = vmatmul.f32.gmra.mxu0 %v2860
        %v2879 = vpop.f32.mrf.mxu0
        %v2880 = vadd.f32 0.0, %v2879
        %2881 = vdwg.mxu0
        %v2882 = vperm.slane %v2880, 0
        %v2883 = vmul.f32 %v2787, %v2882
        %v2884 = vmul.f32 %v2788, %v2882
        %v2885 = vmul.f32 %v2789, %v2882
        %v2886 = vmul.f32 %v2790, %v2882
        %v2887 = vmul.f32 %v2791, %v2882
        %v2888 = vmul.f32 %v2792, %v2882
        %v2889 = vmul.f32 %v2793, %v2882
        %v2890 = vmul.f32 %v2794, %v2882
        %v2892 = vperm.slane %v2716, 0
        %v2894 = vmul.f32 %v2883, %v2892
        %v2895 = vmul.f32 %v2884, %v2892
        %v2896 = vmul.f32 %v2885, %v2892
        %v2897 = vmul.f32 %v2886, %v2892
        %v2898 = vmul.f32 %v2887, %v2892
        %v2899 = vmul.f32 %v2888, %v2892
        %v2900 = vmul.f32 %v2889, %v2892
        %v2901 = vmul.f32 %v2890, %v2892
        %v2903 = vperm.slane %v2717, 0
        %v2905 = vadd.f32 %v2894, %v2903
        %v2906 = vadd.f32 %v2895, %v2903
        %v2907 = vadd.f32 %v2896, %v2903
        %v2908 = vadd.f32 %v2897, %v2903
        %v2909 = vadd.f32 %v2898, %v2903
        %v2910 = vadd.f32 %v2899, %v2903
        %v2911 = vadd.f32 %v2900, %v2903
        %v2912 = vadd.f32 %v2901, %v2903
        %v2913 = vld [vmem:[%s795] sm:$0xff]
        %v2914 = vld [vmem:[%s795 + $0x8] sm:$0xff]
        %v2915 = vld [vmem:[%s795 + $0x10] sm:$0xff]
        %v2916 = vld [vmem:[%s795 + $0x18] sm:$0xff]
        %v2917 = vld [vmem:[%s795 + $0x20] sm:$0xff]
        %v2918 = vld [vmem:[%s795 + $0x28] sm:$0xff]
        %v2919 = vld [vmem:[%s795 + $0x30] sm:$0xff]
        %v2920 = vld [vmem:[%s795 + $0x38] sm:$0xff]
        %v2921 = vpack.c.bf16 %v2906, %v2905
        %v2922 = vpack.c.bf16 %v2908, %v2907
        %v2923 = vpack.c.bf16 %v2910, %v2909
        %v2924 = vpack.c.bf16 %v2912, %v2911
        %v2925 = vld [vmem:[%s799] sm:$0x3]
        %v2927 = vperm.slane %v2925, 0
        %v2928 = vperm.slane %v2925, 1
        %v2939 = vunpack.c.l.b16 %v2913
        %v2940 = vunpack.c.h.b16 %v2913
        %v2941 = vunpack.c.l.b16 %v2914
        %v2942 = vunpack.c.h.b16 %v2914
        %v2943 = vunpack.c.l.b16 %v2915
        %v2944 = vunpack.c.h.b16 %v2915
        %v2945 = vunpack.c.l.b16 %v2916
        %v2946 = vunpack.c.h.b16 %v2916
        %v2947 = vunpack.c.l.b16 %v2917
        %v2948 = vunpack.c.h.b16 %v2917
        %v2949 = vunpack.c.l.b16 %v2918
        %v2950 = vunpack.c.h.b16 %v2918
        %v2951 = vunpack.c.l.b16 %v2919
        %v2952 = vunpack.c.h.b16 %v2919
        %v2953 = vunpack.c.l.b16 %v2920
        %v2954 = vunpack.c.h.b16 %v2920
        %v2955 = vpack.c.b16 %v2941, %v2939
        %v2956 = vpack.c.b16 %v2942, %v2940
        %v2957 = vpack.c.b16 %v2945, %v2943
        %v2958 = vpack.c.b16 %v2946, %v2944
        %v2959 = vpack.c.b16 %v2949, %v2947
        %v2960 = vpack.c.b16 %v2950, %v2948
        %v2961 = vpack.c.b16 %v2953, %v2951
        %v2962 = vpack.c.b16 %v2954, %v2952
        %v2972 = vsel %vm868, %v2921, 0
        %v2975 = vsel %vm868, %v2922, 0
        %v2978 = vsel %vm868, %v2923, 0
        %v2981 = vsel %vm868, %v2924, 0
        %2983 = vmatpush.bf16.msra.mxu0 0
        %2984 = vmatpush.bf16.msra.mxu0 0
        %2985 = vmatpush.bf16.msra.mxu0 0
        %2986 = vmatpush.bf16.msra.mxu0 0
        %2987 = vmatpush.bf16.msra.mxu0 %v2961
        %2988 = vmatpush.bf16.msra.mxu0 %v2959
        %2989 = vmatpush.bf16.msra.mxu0 %v2957
        %2990 = vmatpush.bf16.msra.mxu0 %v2955
        %2991 = vmatmul.bf16.gmra.mxu0 %v2972
        %v2992 = vpop.f32.mrf.mxu0
        %v2993 = vadd.f32 %v2927, %v2992
        %v2994 = vpop.f32.mrf.mxu0
        %v2995 = vadd.f32 %v2927, %v2994
        %2996 = vmatmul.bf16.gmra.mxu0 %v2975
        %v2997 = vpop.f32.mrf.mxu0
        %v2998 = vadd.f32 %v2927, %v2997
        %v2999 = vpop.f32.mrf.mxu0
        %v3000 = vadd.f32 %v2927, %v2999
        %3001 = vmatmul.bf16.gmra.mxu0 %v2978
        %v3002 = vpop.f32.mrf.mxu0
        %v3003 = vadd.f32 %v2927, %v3002
        %v3004 = vpop.f32.mrf.mxu0
        %v3005 = vadd.f32 %v2927, %v3004
        %3006 = vmatmul.bf16.gmra.mxu0 %v2981
        %v3007 = vpop.f32.mrf.mxu0
        %v3008 = vadd.f32 %v2927, %v3007
        %v3009 = vpop.f32.mrf.mxu0
        %v3010 = vadd.f32 %v2927, %v3009
        %3011 = vdwg.mxu0
        %3012 = vmatpush.bf16.msra.mxu0 0
        %3013 = vmatpush.bf16.msra.mxu0 0
        %3014 = vmatpush.bf16.msra.mxu0 0
        %3015 = vmatpush.bf16.msra.mxu0 0
        %3016 = vmatpush.bf16.msra.mxu0 %v2962
        %3017 = vmatpush.bf16.msra.mxu0 %v2960
        %3018 = vmatpush.bf16.msra.mxu0 %v2958
        %3019 = vmatpush.bf16.msra.mxu0 %v2956
        %3020 = vmatmul.bf16.gmra.mxu0 %v2972
        %v3021 = vpop.f32.mrf.mxu0
        %v3022 = vadd.f32 %v2928, %v3021
        %v3023 = vpop.f32.mrf.mxu0
        %v3024 = vadd.f32 %v2928, %v3023
        %3025 = vmatmul.bf16.gmra.mxu0 %v2975
        %v3026 = vpop.f32.mrf.mxu0
        %v3027 = vadd.f32 %v2928, %v3026
        %v3028 = vpop.f32.mrf.mxu0
        %v3029 = vadd.f32 %v2928, %v3028
        %3030 = vmatmul.bf16.gmra.mxu0 %v2978
        %v3031 = vpop.f32.mrf.mxu0
        %v3032 = vadd.f32 %v2928, %v3031
        %v3033 = vpop.f32.mrf.mxu0
        %v3034 = vadd.f32 %v2928, %v3033
        %3035 = vmatmul.bf16.gmra.mxu0 %v2981
        %v3036 = vpop.f32.mrf.mxu0
        %v3037 = vadd.f32 %v2928, %v3036
        %v3038 = vpop.f32.mrf.mxu0
        %v3039 = vadd.f32 %v2928, %v3038
        %3040 = vdwg.mxu0
        %vm3041 = vcmp.gt.f32.partialorder %v2993, 0.0
        %vm3042 = vcmp.gt.f32.partialorder %v2995, 0.0
        %vm3043 = vcmp.gt.f32.partialorder %v2998, 0.0
        %vm3044 = vcmp.gt.f32.partialorder %v3000, 0.0
        %vm3045 = vcmp.gt.f32.partialorder %v3003, 0.0
        %vm3046 = vcmp.gt.f32.partialorder %v3005, 0.0
        %vm3047 = vcmp.gt.f32.partialorder %v3008, 0.0
        %vm3048 = vcmp.gt.f32.partialorder %v3010, 0.0
        %v3049 = vadd.f32 %v2993, 1.0
        %v3050 = vadd.f32 %v2995, 1.0
        %v3051 = vadd.f32 %v2998, 1.0
        %v3052 = vadd.f32 %v3000, 1.0
        %v3053 = vadd.f32 %v3003, 1.0
        %v3054 = vadd.f32 %v3005, 1.0
        %v3055 = vadd.f32 %v3008, 1.0
        %v3056 = vadd.f32 %v3010, 1.0
        %v3057 = vmin.f32 %v2993, 0.0
        %v3058 = vmin.f32 %v2995, 0.0
        %v3059 = vmin.f32 %v2998, 0.0
        %v3060 = vmin.f32 %v3000, 0.0
        %v3061 = vmin.f32 %v3003, 0.0
        %v3062 = vmin.f32 %v3005, 0.0
        %v3063 = vmin.f32 %v3008, 0.0
        %v3064 = vmin.f32 %v3010, 0.0
        %v3065 = vmul.f32 %v3057, 1.442695
        %v3066 = vpow.pop %v3065
        %v3067 = vmul.f32 %v3058, 1.442695
        %v3068 = vpow.pop %v3067
        %v3069 = vmul.f32 %v3059, 1.442695
        %v3070 = vpow.pop %v3069
        %v3071 = vmul.f32 %v3060, 1.442695
        %v3072 = vpow.pop %v3071
        %v3073 = vmul.f32 %v3061, 1.442695
        %v3074 = vpow.pop %v3073
        %v3075 = vmul.f32 %v3062, 1.442695
        %v3076 = vpow.pop %v3075
        %v3077 = vmul.f32 %v3063, 1.442695
        %v3078 = vpow.pop %v3077
        %v3079 = vmul.f32 %v3064, 1.442695
        %v3080 = vpow.pop %v3079
        %v3081 = vsel %vm3041, %v3049, %v3066
        %v3082 = vsel %vm3042, %v3050, %v3068
        %v3083 = vsel %vm3043, %v3051, %v3070
        %v3084 = vsel %vm3044, %v3052, %v3072
        %v3085 = vsel %vm3045, %v3053, %v3074
        %v3086 = vsel %vm3046, %v3054, %v3076
        %v3087 = vsel %vm3047, %v3055, %v3078
        %v3088 = vsel %vm3048, %v3056, %v3080
        %v3089 = vpack.c.bf16 %v3081, %v3081
        %v3090 = vpack.c.bf16 %v3082, %v3082
        %v3091 = vpack.c.bf16 %v3083, %v3083
        %v3092 = vpack.c.bf16 %v3084, %v3084
        %v3093 = vpack.c.bf16 %v3085, %v3085
        %v3094 = vpack.c.bf16 %v3086, %v3086
        %v3095 = vpack.c.bf16 %v3087, %v3087
        %v3096 = vpack.c.bf16 %v3088, %v3088
        %v3097 = vpack.c.bf16 %v3022, %v3022
        %v3098 = vpack.c.bf16 %v3024, %v3024
        %v3099 = vpack.c.bf16 %v3027, %v3027
        %v3100 = vpack.c.bf16 %v3029, %v3029
        %v3101 = vpack.c.bf16 %v3032, %v3032
        %v3102 = vpack.c.bf16 %v3034, %v3034
        %v3103 = vpack.c.bf16 %v3037, %v3037
        %v3104 = vpack.c.bf16 %v3039, %v3039
        %v3113 = vunpack.c.l.b16 %v3089
        %v3114 = vunpack.c.l.b16 %v3090
        %v3115 = vunpack.c.l.b16 %v3091
        %v3116 = vunpack.c.l.b16 %v3092
        %v3117 = vunpack.c.l.b16 %v3093
        %v3118 = vunpack.c.l.b16 %v3094
        %v3119 = vunpack.c.l.b16 %v3095
        %v3120 = vunpack.c.l.b16 %v3096
        %v3121 = vpack.c.b16 %v3114, %v3113
        %v3122 = vpack.c.b16 %v3116, %v3115
        %v3123 = vpack.c.b16 %v3118, %v3117
        %v3124 = vpack.c.b16 %v3120, %v3119
        %3125 = vrot.lane.b32.xlu0 %v3121, 64
        %v3126 = vpop.permute.xlu0 %3125
        %3127 = vrot.lane.b32.xlu0 %v3122, 64
        %v3128 = vpop.permute.xlu0 %3127
        %3129 = vrot.lane.b32.xlu0 %v3123, 64
        %v3130 = vpop.permute.xlu0 %3129
        %3131 = vrot.lane.b32.xlu0 %v3124, 64
        %v3132 = vpop.permute.xlu0 %3131
        %3137 = vxpose.xlu0.c.b16.start [1/8] %v3126, 128
        %3138 = vxpose.xlu0.c.b16.cont [2/8] %v3128, 128
        %3139 = vxpose.xlu0.c.b16.cont [3/8] %v3130, 128
        %3140 = vxpose.xlu0.c.b16.cont [4/8] %v3132, 128
        %3141 = vxpose.xlu0.c.b16.cont [5/8] 0, 128
        %3142 = vxpose.xlu0.c.b16.cont [6/8] 0, 128
        %3143 = vxpose.xlu0.c.b16.cont [7/8] 0, 128
        %3144 = vxpose.xlu0.c.b16.end [8/8] 0, 128
        %v3145 = vpop.trf.xlu0
        %v3146 = vpop.trf.xlu0
        %v3147 = vpop.trf.xlu0
        %v3148 = vpop.trf.xlu0
        %v3149 = vpop.trf.xlu0
        %v3150 = vpop.trf.xlu0
        %v3151 = vpop.trf.xlu0
        %v3152 = vpop.trf.xlu0
        %v3161 = vunpack.c.l.b16 %v3097
        %v3162 = vunpack.c.l.b16 %v3098
        %v3163 = vunpack.c.l.b16 %v3099
        %v3164 = vunpack.c.l.b16 %v3100
        %v3165 = vunpack.c.l.b16 %v3101
        %v3166 = vunpack.c.l.b16 %v3102
        %v3167 = vunpack.c.l.b16 %v3103
        %v3168 = vunpack.c.l.b16 %v3104
        %v3169 = vpack.c.b16 %v3162, %v3161
        %v3170 = vpack.c.b16 %v3164, %v3163
        %v3171 = vpack.c.b16 %v3166, %v3165
        %v3172 = vpack.c.b16 %v3168, %v3167
        %v3178 = vsel %vm868, %v3145, 0
        %v3181 = vsel %vm868, %v3146, 0
        %v3184 = vsel %vm868, %v3147, 0
        %v3187 = vsel %vm868, %v3148, 0
        %3189 = vmatpush.bf16.msra.mxu0 0
        %3190 = vmatpush.bf16.msra.mxu0 0
        %3191 = vmatpush.bf16.msra.mxu0 0
        %3192 = vmatpush.bf16.msra.mxu0 0
        %3193 = vmatpush.bf16.msra.mxu0 %v3172
        %3194 = vmatpush.bf16.msra.mxu0 %v3171
        %3195 = vmatpush.bf16.msra.mxu0 %v3170
        %3196 = vmatpush.bf16.msra.mxu0 %v3169
        %3197 = vmatmul.bf16.gmra.mxu0 %v3178
        %v3198 = vpop.f32.mrf.mxu0
        %v3199 = vadd.f32 0.0, %v3198
        %v3200 = vpop.f32.mrf.mxu0
        %v3201 = vadd.f32 0.0, %v3200
        %3202 = vmatmul.bf16.gmra.mxu0 %v3181
        %v3203 = vpop.f32.mrf.mxu0
        %v3204 = vadd.f32 0.0, %v3203
        %v3205 = vpop.f32.mrf.mxu0
        %v3206 = vadd.f32 0.0, %v3205
        %3207 = vmatmul.bf16.gmra.mxu0 %v3184
        %v3208 = vpop.f32.mrf.mxu0
        %v3209 = vadd.f32 0.0, %v3208
        %v3210 = vpop.f32.mrf.mxu0
        %v3211 = vadd.f32 0.0, %v3210
        %3212 = vmatmul.bf16.gmra.mxu0 %v3187
        %v3213 = vpop.f32.mrf.mxu0
        %v3214 = vadd.f32 0.0, %v3213
        %v3215 = vpop.f32.mrf.mxu0
        %v3216 = vadd.f32 0.0, %v3215
        %3217 = vdwg.mxu0
        %v3218 = vmul.f32 %v3199, %v858
        %v3219 = vmul.f32 %v3201, %v859
        %v3220 = vmul.f32 %v3204, %v860
        %v3221 = vmul.f32 %v3206, %v861
        %v3222 = vmul.f32 %v3209, %v862
        %v3223 = vmul.f32 %v3211, %v863
        %v3224 = vmul.f32 %v3214, %v864
        %v3225 = vmul.f32 %v3216, %v865
        %v3226 = vpack.c.bf16 %v3218, %v3218
        %v3227 = vpack.c.bf16 %v3219, %v3219
        %v3228 = vpack.c.bf16 %v3220, %v3220
        %v3229 = vpack.c.bf16 %v3221, %v3221
        %v3230 = vpack.c.bf16 %v3222, %v3222
        %v3231 = vpack.c.bf16 %v3223, %v3223
        %v3232 = vpack.c.bf16 %v3224, %v3224
        %v3233 = vpack.c.bf16 %v3225, %v3225
        %v3242 = vunpack.c.l.b16 %v3226
        %v3243 = vunpack.c.l.b16 %v3227
        %v3244 = vunpack.c.l.b16 %v3228
        %v3245 = vunpack.c.l.b16 %v3229
        %v3246 = vunpack.c.l.b16 %v3230
        %v3247 = vunpack.c.l.b16 %v3231
        %v3248 = vunpack.c.l.b16 %v3232
        %v3249 = vunpack.c.l.b16 %v3233
        %v3250 = vpack.c.b16 %v3243, %v3242
        %v3251 = vpack.c.b16 %v3245, %v3244
        %v3252 = vpack.c.b16 %v3247, %v3246
        %v3253 = vpack.c.b16 %v3249, %v3248
        %v3259 = vsel %vm868, %v3121, 0
        %v3262 = vsel %vm868, %v3122, 0
        %v3265 = vsel %vm868, %v3123, 0
        %v3268 = vsel %vm868, %v3124, 0
        %3270 = vmatpush.bf16.msra.mxu0 0
        %3271 = vmatpush.bf16.msra.mxu0 0
        %3272 = vmatpush.bf16.msra.mxu0 0
        %3273 = vmatpush.bf16.msra.mxu0 0
        %3274 = vmatpush.bf16.msra.mxu0 %v3253
        %3275 = vmatpush.bf16.msra.mxu0 %v3252
        %3276 = vmatpush.bf16.msra.mxu0 %v3251
        %3277 = vmatpush.bf16.msra.mxu0 %v3250
        %3278 = vmatmul.bf16.gmra.mxu0 %v3259
        %v3279 = vpop.f32.mrf.mxu0
        %v3280 = vadd.f32 0.0, %v3279
        %v3281 = vpop.f32.mrf.mxu0
        %v3282 = vadd.f32 0.0, %v3281
        %3283 = vmatmul.bf16.gmra.mxu0 %v3262
        %v3284 = vpop.f32.mrf.mxu0
        %v3285 = vadd.f32 0.0, %v3284
        %v3286 = vpop.f32.mrf.mxu0
        %v3287 = vadd.f32 0.0, %v3286
        %3288 = vmatmul.bf16.gmra.mxu0 %v3265
        %v3289 = vpop.f32.mrf.mxu0
        %v3290 = vadd.f32 0.0, %v3289
        %v3291 = vpop.f32.mrf.mxu0
        %v3292 = vadd.f32 0.0, %v3291
        %3293 = vmatmul.bf16.gmra.mxu0 %v3268
        %v3294 = vpop.f32.mrf.mxu0
        %v3295 = vadd.f32 0.0, %v3294
        %v3296 = vpop.f32.mrf.mxu0
        %v3297 = vadd.f32 0.0, %v3296
        %3298 = vdwg.mxu0
        %vm3299 = vcmask 1048064
        %v3300 = vsel %vm3299, %v3081, 0.0
        %v3301 = vsel %vm3299, %v3082, 0.0
        %v3302 = vadd.f32 %v3300, %v3301
        %v3303 = vsel %vm3299, %v3083, 0.0
        %v3304 = vadd.f32 %v3302, %v3303
        %v3305 = vsel %vm3299, %v3084, 0.0
        %v3306 = vadd.f32 %v3304, %v3305
        %v3307 = vsel %vm3299, %v3085, 0.0
        %v3308 = vadd.f32 %v3306, %v3307
        %v3309 = vsel %vm3299, %v3086, 0.0
        %v3310 = vadd.f32 %v3308, %v3309
        %v3311 = vsel %vm3299, %v3087, 0.0
        %v3312 = vadd.f32 %v3310, %v3311
        %v3313 = vsel %vm3299, %v3088, 0.0
        %v3314 = vadd.f32 %v3312, %v3313
        %v3315 = vrot.slane %v3314, 4
        %v3316 = vadd.f32 %v3314, %v3315
        %v3317 = vrot.slane %v3316, 2
        %v3318 = vadd.f32 %v3316, %v3317
        %v3319 = vrot.slane %v3318, 1
        %v3320 = vadd.f32 %v3318, %v3319
        %3322 = vrot.lane.b32.xlu0 %v3320, 64
        %v3323 = vpop.permute.xlu0 %3322
        %v3325 = vmul.f32 %v3081, %v3323
        %v3326 = vmul.f32 %v3082, %v3323
        %v3327 = vmul.f32 %v3083, %v3323
        %v3328 = vmul.f32 %v3084, %v3323
        %v3329 = vmul.f32 %v3085, %v3323
        %v3330 = vmul.f32 %v3086, %v3323
        %v3331 = vmul.f32 %v3087, %v3323
        %v3332 = vmul.f32 %v3088, %v3323
        %v3333 = vpack.c.bf16 %v3326, %v3325
        %v3334 = vpack.c.bf16 %v3328, %v3327
        %v3335 = vpack.c.bf16 %v3330, %v3329
        %v3336 = vpack.c.bf16 %v3332, %v3331
        %v3337 = vpack.c.bf16 %v859, %v858
        %v3338 = vpack.c.bf16 %v861, %v860
        %v3339 = vpack.c.bf16 %v863, %v862
        %v3340 = vpack.c.bf16 %v865, %v864
        %v3342 = vsel %vm868, %v3333, 0
        %v3345 = vsel %vm868, %v3334, 0
        %v3348 = vsel %vm868, %v3335, 0
        %v3351 = vsel %vm868, %v3336, 0
        %3353 = vmatpush.bf16.msra.mxu0 0
        %3354 = vmatpush.bf16.msra.mxu0 0
        %3355 = vmatpush.bf16.msra.mxu0 0
        %3356 = vmatpush.bf16.msra.mxu0 0
        %3357 = vmatpush.bf16.msra.mxu0 %v3340
        %3358 = vmatpush.bf16.msra.mxu0 %v3339
        %3359 = vmatpush.bf16.msra.mxu0 %v3338
        %3360 = vmatpush.bf16.msra.mxu0 %v3337
        %3361 = vmatmul.bf16.gmra.mxu0 %v3342
        %v3362 = vpop.f32.mrf.mxu0
        %v3363 = vadd.f32 1e-06, %v3362
        %v3364 = vpop.f32.mrf.mxu0
        %v3365 = vadd.f32 1e-06, %v3364
        %3366 = vmatmul.bf16.gmra.mxu0 %v3345
        %v3367 = vpop.f32.mrf.mxu0
        %v3368 = vadd.f32 1e-06, %v3367
        %v3369 = vpop.f32.mrf.mxu0
        %v3370 = vadd.f32 1e-06, %v3369
        %3371 = vmatmul.bf16.gmra.mxu0 %v3348
        %v3372 = vpop.f32.mrf.mxu0
        %v3373 = vadd.f32 1e-06, %v3372
        %v3374 = vpop.f32.mrf.mxu0
        %v3375 = vadd.f32 1e-06, %v3374
        %3376 = vmatmul.bf16.gmra.mxu0 %v3351
        %v3377 = vpop.f32.mrf.mxu0
        %v3378 = vadd.f32 1e-06, %v3377
        %v3379 = vpop.f32.mrf.mxu0
        %v3380 = vadd.f32 1e-06, %v3379
        %3381 = vdwg.mxu0
        %v3382 = vrcp.pop %v3363
        %v3383 = vrcp.pop %v3365
        %v3384 = vrcp.pop %v3368
        %v3385 = vrcp.pop %v3370
        %v3386 = vrcp.pop %v3373
        %v3387 = vrcp.pop %v3375
        %v3388 = vrcp.pop %v3378
        %v3389 = vrcp.pop %v3380
        %v3390 = vmul.f32 %v3280, %v3382
        %v3391 = vmul.f32 %v3282, %v3383
        %v3392 = vmul.f32 %v3285, %v3384
        %v3393 = vmul.f32 %v3287, %v3385
        %v3394 = vmul.f32 %v3290, %v3386
        %v3395 = vmul.f32 %v3292, %v3387
        %v3396 = vmul.f32 %v3295, %v3388
        %v3397 = vmul.f32 %v3297, %v3389
        %v3398 = vld [vmem:[%s804] sm:$0xf]
        %v3399 = vld [vmem:[%s804 + $0x4] sm:$0xf]
        %v3400 = vld [vmem:[%s804 + $0x8] sm:$0xf]
        %v3401 = vld [vmem:[%s804 + $0xc] sm:$0xf]
        %v3402 = vld [vmem:[%s804 + $0x10] sm:$0xf]
        %v3403 = vld [vmem:[%s804 + $0x14] sm:$0xf]
        %v3404 = vld [vmem:[%s804 + $0x18] sm:$0xf]
        %v3405 = vld [vmem:[%s804 + $0x1c] sm:$0xf]
        %v3406 = vpack.c.bf16 %v3391, %v3390
        %v3407 = vpack.c.bf16 %v3393, %v3392
        %v3408 = vpack.c.bf16 %v3395, %v3394
        %v3409 = vpack.c.bf16 %v3397, %v3396
        %v3418 = vunpack.c.l.b16 %v3398
        %v3419 = vunpack.c.l.b16 %v3399
        %v3420 = vunpack.c.l.b16 %v3400
        %v3421 = vunpack.c.l.b16 %v3401
        %v3422 = vunpack.c.l.b16 %v3402
        %v3423 = vunpack.c.l.b16 %v3403
        %v3424 = vunpack.c.l.b16 %v3404
        %v3425 = vunpack.c.l.b16 %v3405
        %v3426 = vpack.c.b16 %v3419, %v3418
        %v3427 = vpack.c.b16 %v3421, %v3420
        %v3428 = vpack.c.b16 %v3423, %v3422
        %v3429 = vpack.c.b16 %v3425, %v3424
        %v3435 = vsel %vm868, %v3406, 0
        %v3438 = vsel %vm868, %v3407, 0
        %v3441 = vsel %vm868, %v3408, 0
        %v3444 = vsel %vm868, %v3409, 0
        %3446 = vmatpush.bf16.msra.mxu0 0
        %3447 = vmatpush.bf16.msra.mxu0 0
        %3448 = vmatpush.bf16.msra.mxu0 0
        %3449 = vmatpush.bf16.msra.mxu0 0
        %3450 = vmatpush.bf16.msra.mxu0 %v3429
        %3451 = vmatpush.bf16.msra.mxu0 %v3428
        %3452 = vmatpush.bf16.msra.mxu0 %v3427
        %3453 = vmatpush.bf16.msra.mxu0 %v3426
        %3454 = vmatmul.bf16.gmra.mxu0 %v3435
        %v3455 = vpop.f32.mrf.mxu0
        %v3456 = vadd.f32 0.0, %v3455
        %v3457 = vpop.f32.mrf.mxu0
        %v3458 = vadd.f32 0.0, %v3457
        %3459 = vmatmul.bf16.gmra.mxu0 %v3438
        %v3460 = vpop.f32.mrf.mxu0
        %v3461 = vadd.f32 0.0, %v3460
        %v3462 = vpop.f32.mrf.mxu0
        %v3463 = vadd.f32 0.0, %v3462
        %3464 = vmatmul.bf16.gmra.mxu0 %v3441
        %v3465 = vpop.f32.mrf.mxu0
        %v3466 = vadd.f32 0.0, %v3465
        %v3467 = vpop.f32.mrf.mxu0
        %v3468 = vadd.f32 0.0, %v3467
        %3469 = vmatmul.bf16.gmra.mxu0 %v3444
        %v3470 = vpop.f32.mrf.mxu0
        %v3471 = vadd.f32 0.0, %v3470
        %v3472 = vpop.f32.mrf.mxu0
        %v3473 = vadd.f32 0.0, %v3472
        %3474 = vdwg.mxu0
        %v3475 = vadd.f32 %v2708, %v3456
        %v3476 = vadd.f32 %v2709, %v3458
        %v3477 = vadd.f32 %v2710, %v3461
        %v3478 = vadd.f32 %v2711, %v3463
        %v3479 = vadd.f32 %v2712, %v3466
        %v3480 = vadd.f32 %v2713, %v3468
        %v3481 = vadd.f32 %v2714, %v3471
        %v3482 = vadd.f32 %v2715, %v3473
        %v3483 = vld [vmem:[%s807] sm:$0x1]
        %v3485 = vperm.slane %v3483, 0
        %v3487 = vadd.f32 %v3475, %v3485
        %v3488 = vadd.f32 %v3476, %v3485
        %v3489 = vadd.f32 %v3477, %v3485
        %v3490 = vadd.f32 %v3478, %v3485
        %v3491 = vadd.f32 %v3479, %v3485
        %v3492 = vadd.f32 %v3480, %v3485
        %v3493 = vadd.f32 %v3481, %v3485
        %v3494 = vadd.f32 %v3482, %v3485
        %3495 = vst.msk [vmem:[%s757] sm:$0xff] %vm868, %v3487
        %3496 = vst.msk [vmem:[%s757 + $0x8] sm:$0xff] %vm868, %v3488
        %3497 = vst.msk [vmem:[%s757 + $0x10] sm:$0xff] %vm868, %v3489
        %3498 = vst.msk [vmem:[%s757 + $0x18] sm:$0xff] %vm868, %v3490
        %3499 = vst.msk [vmem:[%s757 + $0x20] sm:$0xff] %vm868, %v3491
        %3500 = vst.msk [vmem:[%s757 + $0x28] sm:$0xff] %vm868, %v3492
        %3501 = vst.msk [vmem:[%s757 + $0x30] sm:$0xff] %vm868, %v3493
        %3502 = vst.msk [vmem:[%s757 + $0x38] sm:$0xff] %vm868, %v3494
        %p3503 = scmp.eq.s32.totalorder %s38, 1
        // Predicated region
        $region101: #{residual_stack_forward.1} parent=95 // pred_check
          %p3504 = pneg %p3503
        $region102: #{residual_stack_forward.1} parent=95 // pred_check_branch
          %3506 = sbr.rel (%p3504) target = $region104
        $region103: #{residual_stack_forward.1} parent=95 // pred_region
          %v3507 = vld [vmem:[%s757] sm:$0xff]
          %v3508 = vld [vmem:[%s757 + $0x8] sm:$0xff]
          %v3509 = vld [vmem:[%s757 + $0x10] sm:$0xff]
          %v3510 = vld [vmem:[%s757 + $0x18] sm:$0xff]
          %v3511 = vld [vmem:[%s757 + $0x20] sm:$0xff]
          %v3512 = vld [vmem:[%s757 + $0x28] sm:$0xff]
          %v3513 = vld [vmem:[%s757 + $0x30] sm:$0xff]
          %v3514 = vld [vmem:[%s757 + $0x38] sm:$0xff]
          %v3515 = vadd.f32 %v3507, 3.0
          %v3516 = vadd.f32 %v3508, 3.0
          %v3517 = vadd.f32 %v3509, 3.0
          %v3518 = vadd.f32 %v3510, 3.0
          %v3519 = vadd.f32 %v3511, 3.0
          %v3520 = vadd.f32 %v3512, 3.0
          %v3521 = vadd.f32 %v3513, 3.0
          %v3522 = vadd.f32 %v3514, 3.0
          %v3523 = vmax.f32 %v3515, 0.0
          %v3524 = vmax.f32 %v3516, 0.0
          %v3525 = vmax.f32 %v3517, 0.0
          %v3526 = vmax.f32 %v3518, 0.0
          %v3527 = vmax.f32 %v3519, 0.0
          %v3528 = vmax.f32 %v3520, 0.0
          %v3529 = vmax.f32 %v3521, 0.0
          %v3530 = vmax.f32 %v3522, 0.0
          %v3531 = vmin.f32 %v3523, 6.0
          %v3532 = vmin.f32 %v3524, 6.0
          %v3533 = vmin.f32 %v3525, 6.0
          %v3534 = vmin.f32 %v3526, 6.0
          %v3535 = vmin.f32 %v3527, 6.0
          %v3536 = vmin.f32 %v3528, 6.0
          %v3537 = vmin.f32 %v3529, 6.0
          %v3538 = vmin.f32 %v3530, 6.0
          %v3539 = vmul.f32 %v3507, %v3531
          %v3540 = vmul.f32 %v3508, %v3532
          %v3541 = vmul.f32 %v3509, %v3533
          %v3542 = vmul.f32 %v3510, %v3534
          %v3543 = vmul.f32 %v3511, %v3535
          %v3544 = vmul.f32 %v3512, %v3536
          %v3545 = vmul.f32 %v3513, %v3537
          %v3546 = vmul.f32 %v3514, %v3538
          %v3547 = vmul.f32 %v3539, 0.16666667
          %v3548 = vmul.f32 %v3540, 0.16666667
          %v3549 = vmul.f32 %v3541, 0.16666667
          %v3550 = vmul.f32 %v3542, 0.16666667
          %v3551 = vmul.f32 %v3543, 0.16666667
          %v3552 = vmul.f32 %v3544, 0.16666667
          %v3553 = vmul.f32 %v3545, 0.16666667
          %v3554 = vmul.f32 %v3546, 0.16666667
          %3555 = vst.msk [vmem:[%s757] sm:$0xff] %vm868, %v3547
          %3556 = vst.msk [vmem:[%s757 + $0x8] sm:$0xff] %vm868, %v3548
          %3557 = vst.msk [vmem:[%s757 + $0x10] sm:$0xff] %vm868, %v3549
          %3558 = vst.msk [vmem:[%s757 + $0x18] sm:$0xff] %vm868, %v3550
          %3559 = vst.msk [vmem:[%s757 + $0x20] sm:$0xff] %vm868, %v3551
          %3560 = vst.msk [vmem:[%s757 + $0x28] sm:$0xff] %vm868, %v3552
          %3561 = vst.msk [vmem:[%s757 + $0x30] sm:$0xff] %vm868, %v3553
          %3562 = vst.msk [vmem:[%s757 + $0x38] sm:$0xff] %vm868, %v3554
        $region104: #{residual_stack_forward.1} parent=95 // pred_fallthru
          _
        %s3563 = sand.u32 %s517, 1
        %s3564 = scalar_lea.sflag [#allocation3], %s3563
        %s3565 = sand.u32 %s517, 1
        %s3566 = smul.addr %s3565, 64
        %s3567 = scalar_lea.vmem [#allocation2], %s3566
        // Predicated region
        $region105: #{residual_stack_forward.1} parent=95 // pred_check
          %p3568 = pneg %p527
        $region106: #{residual_stack_forward.1} parent=95 // pred_check_branch
          %3570 = sbr.rel (%p3568) target = $region108
        $region107: #{residual_stack_forward.1} parent=95 // pred_region
          %3572 = vsyncadd %s3564, 0
          %s3573 = smul.addr %s37, 8
          %s3574 = smul.addr %s3573, 8
          %s3575 = scalar_lea.hbm %s19, %s3574
          %s3576 = sshll.u32 %s3567, 4
          %s3577 = int_to_ptr.vmem [resolvable:$true] %s3576
          %s3578 = sshll.u32 %s3575, 4
          %s3579 = int_to_ptr.hbm [resolvable:$true] %s3578
          %3584 = dma.vmem_to_hbm [thread:$0]  %s3577, 1024, %s3579, %s3564, 128, 128, 8
        $region108: #{residual_stack_forward.1} parent=95 // pred_fallthru
          _
      $region96: #{residual_stack_forward.1} parent=5 // pred_fallthru
        _
      %p3585 = scmp.le.s32.totalorder 2, %s28
      // Predicated region
      $region109: #{residual_stack_forward.1} parent=5 // pred_check
        %p3586 = pneg %p3585
      $region110: #{residual_stack_forward.1} parent=5 // pred_check_branch
        %3588 = sbr.rel (%p3586) target = $region112
      $region111: #{residual_stack_forward.1} parent=5 // pred_region
        %s3589 = ssub.s32 %s28, 2
        // Predicated region
        $region113: #{residual_stack_forward.1} parent=111 // pred_check
          %p3590 = pneg %p533
        $region114: #{residual_stack_forward.1} parent=111 // pred_check_branch
          %3592 = sbr.rel (%p3590) target = $region116
        $region115: #{residual_stack_forward.1} parent=111 // pred_region
          %s3593 = sand.u32 %s518, 1
          %s3594 = scalar_lea.sflag [#allocation3], %s3593
          %s3595 = sand.u32 %s518, 1
          %s3596 = smul.addr %s3595, 64
          %s3597 = scalar_lea.vmem [#allocation2], %s3596
          %3599 = dma.done %s3594, 1024
        $region116: #{residual_stack_forward.1} parent=111 // pred_fallthru
          _
      $region112: #{residual_stack_forward.1} parent=5 // pred_fallthru
        _
    $region6: #{residual_stack_forward.1} parent=1 // loop_footer
      %s32 = sadd.s32 1, %s28
    $region7: #{residual_stack_forward.1} parent=1 // loop_footer_branch
      %27 = sbr.rel target = $region3
    $region8: #{residual_stack_forward.1} parent=1 // loop_exit
      _
    %3600 = vsyncpa [#allocation3], 1
    %s3601 = scalar_lea.sflag [#allocation3], 1
    %3602 = vsyncpa %s3601, 1

</llo_original>
